<compile_context>
chip_gen: v6e
topology: v6e:2x2x1
jax: 0.10.0
libtpu: 0.0.40
codegen_flags: <defaults>
</compile_context>

<pallas_src>
import functools
import math

import jax
import jax.numpy as jnp
from jax.experimental import pallas as pl
from jax.experimental.pallas import tpu as pltpu

REPARAM_NOISE = 1e-6
N_HIDDEN_LAYERS = 10


def actor_kernel(n_actions, x_ref, wq_ref, scale_ref, bh_ref, whead_ref,
                 bhead_ref, out_ref):
    """Single grid step: all 10 hidden layers (unrolled) + fused mu|sigma head.

    x_ref     : (B, H)        f32   zero-padded input state
    wq_ref    : (L, H, H)     int8  quantized hidden weights (one DMA)
    scale_ref : (L, 1, H)     f32   per-layer, per-output-column dequant scales
    bh_ref    : (L, 1, H)     f32   hidden biases
    whead_ref : (H, 2*A)      bf16  [w_mu | w_sigma]
    bhead_ref : (1, 2*A)      f32   [b_mu | b_sigma]
    out_ref   : (B, 2*A)      f32   [mu | clamped sigma]
    """
    n_layers = wq_ref.shape[0]
    h = x_ref[...]  # f32 activation, lives in values/vregs (no scratch needed)

    for layer in range(n_layers):  # statically unrolled: 10 tiny MXU matmuls
        # int8 -> bf16 up-convert (exact; int8 fits in bf16 mantissa), MXU in bf16,
        # accumulate in f32, then dequant-scale + bias + ReLU in f32 on the VPU.
        w_bf16 = wq_ref[layer].astype(jnp.float32).astype(jnp.bfloat16)
        z = jnp.dot(h.astype(jnp.bfloat16), w_bf16,
                    preferred_element_type=jnp.float32)
        h = jnp.maximum(z * scale_ref[layer] + bh_ref[layer], 0.0)

    head = jnp.dot(h.astype(jnp.bfloat16), whead_ref[...],
                   preferred_element_type=jnp.float32) + bhead_ref[...]
    # Clamp only the sigma half (lanes [n_actions, 2*n_actions)).
    lane = jax.lax.broadcasted_iota(jnp.int32, head.shape, 1)
    clamped = jnp.clip(head, REPARAM_NOISE, 1.0)
    out_ref[...] = jnp.where(lane >= n_actions, clamped, head)


def pack_params(params):
    """Pack the flat PyTorch-style param list for the kernel.

    params: [w1, b1, ..., w10, b10, w_mu, b_mu, w_sigma, b_sigma]
            with weights already (in, out) and biases (1, out), all f32.

    Returns:
      wq      int8  (L, H, H)  per-output-column symmetric-quantized hidden weights
      scale   f32   (L, 1, H)  dequant scales
      b_stack f32   (L, 1, H)  hidden biases
      w_head  bf16  (H, 2A)    [w_mu | w_sigma]   (small; kept in bf16)
      b_head  f32   (1, 2A)    [b_mu | b_sigma]
    """
    hidden = params[0].shape[1]
    ws, bs = [], []
    w1 = params[0]
    assert w1.shape[0] <= hidden, "input_dim > hidden_dim not supported by packing"
    if w1.shape[0] < hidden:
        w1 = jnp.pad(w1, ((0, hidden - w1.shape[0]), (0, 0)))  # zero rows: exact no-op
    ws.append(w1)
    bs.append(params[1])
    for i in range(1, N_HIDDEN_LAYERS):
        ws.append(params[2 * i])
        bs.append(params[2 * i + 1])
    w_f32 = jnp.stack(ws)                                   # (L, H, H)
    b_stack = jnp.stack(bs)                                  # (L, 1, H)

    # Per-output-column symmetric int8 quantization (halves HBM weight traffic).
    amax = jnp.max(jnp.abs(w_f32), axis=1, keepdims=True)    # (L, 1, H)
    scale = jnp.maximum(amax, 1e-12) / 127.0
    wq = jnp.clip(jnp.round(w_f32 / scale), -127, 127).astype(jnp.int8)

    w_mu, b_mu = params[2 * N_HIDDEN_LAYERS], params[2 * N_HIDDEN_LAYERS + 1]
    w_sg, b_sg = params[2 * N_HIDDEN_LAYERS + 2], params[2 * N_HIDDEN_LAYERS + 3]
    w_head = jnp.concatenate([w_mu, w_sg], axis=1).astype(jnp.bfloat16)  # (H, 2A)
    b_head = jnp.concatenate([b_mu, b_sg], axis=1)                       # (1, 2A)
    return wq, scale, b_stack, w_head, b_head


def actor_forward(state, packed):
    """ActorNetwork forward in one single-step Pallas kernel.

    state : (batch, input_dim) f32
    packed: output of pack_params
    Returns (mu, sigma), each (batch, n_actions) f32, sigma in [1e-6, 1].
    """
    wq, scale, b_stack, w_head, b_head = packed
    n_layers, hidden, _ = wq.shape
    batch, in_dim = state.shape
    n_actions = w_head.shape[1] // 2

    # Pad feature dim to hidden (matches the zero-padded layer-1 weight rows) and
    # batch to the 8-row f32 sublane tile (unmasked sublane loads/stores).
    x = state
    if in_dim < hidden:
        x = jnp.pad(x, ((0, 0), (0, hidden - in_dim)))
    b_pad = max(8, ((batch + 7) // 8) * 8)
    if b_pad > batch:
        x = jnp.pad(x, ((0, b_pad - batch), (0, 0)))

    kernel = functools.partial(actor_kernel, n_actions)
    out = pl.pallas_call(
        kernel,
        out_shape=jax.ShapeDtypeStruct((b_pad, 2 * n_actions), jnp.float32),
        grid=(1,),
        in_specs=[
            pl.BlockSpec((b_pad, hidden), lambda i: (0, 0)),              # state
            pl.BlockSpec((n_layers, hidden, hidden), lambda i: (0, 0, 0)),  # int8 W stack
            pl.BlockSpec((n_layers, 1, hidden), lambda i: (0, 0, 0)),       # scales
            pl.BlockSpec((n_layers, 1, hidden), lambda i: (0, 0, 0)),       # biases
            pl.BlockSpec((hidden, 2 * n_actions), lambda i: (0, 0)),        # head W
            pl.BlockSpec((1, 2 * n_actions), lambda i: (0, 0)),             # head b
        ],
        out_specs=pl.BlockSpec((b_pad, 2 * n_actions), lambda i: (0, 0)),
        compiler_params=pltpu.CompilerParams(
            dimension_semantics=("arbitrary",)),  # strictly sequential single step
    )(x, wq, scale, b_stack, w_head, b_head)

    out = out[:batch]
    return out[:, :n_actions], out[:, n_actions:]


def init_params(key, input_dim, hidden_dims, n_actions):
    """Deterministic PyTorch-style Linear init: U(-1/sqrt(fan_in), 1/sqrt(fan_in)).

    Weights are returned pre-transposed to (in, out); biases as (1, out).
    """
    dims = [input_dim] + list(hidden_dims)
    params = []
    for i in range(len(hidden_dims)):
        fan_in, fan_out = dims[i], dims[i + 1]
        key, kw, kb = jax.random.split(key, 3)
        bound = 1.0 / math.sqrt(fan_in)
        w = jax.random.uniform(kw, (fan_in, fan_out), jnp.float32, -bound, bound)
        b = jax.random.uniform(kb, (1, fan_out), jnp.float32, -bound, bound)
        params += [w, b]
    fan_in = hidden_dims[-1]
    bound = 1.0 / math.sqrt(fan_in)
    for _ in range(2):  # mu and sigma heads
        key, kw, kb = jax.random.split(key, 3)
        w = jax.random.uniform(kw, (fan_in, n_actions), jnp.float32, -bound, bound)
        b = jax.random.uniform(kb, (1, n_actions), jnp.float32, -bound, bound)
        params += [w, b]
    return params


def reference_forward(state, packed, n_actions):
    """Plain-JAX reference using the SAME packed (quantized) weights as the kernel."""
    wq, scale, b_stack, w_head, b_head = packed
    n_layers, hidden, _ = wq.shape
    batch, in_dim = state.shape
    h = state
    if in_dim < hidden:
        h = jnp.pad(h, ((0, 0), (0, hidden - in_dim)))
    for layer in range(n_layers):
        w_bf16 = wq[layer].astype(jnp.float32).astype(jnp.bfloat16)
        z = jnp.dot(h.astype(jnp.bfloat16), w_bf16,
                    preferred_element_type=jnp.float32)
        h = jnp.maximum(z * scale[layer] + b_stack[layer], 0.0)
    head = jnp.dot(h.astype(jnp.bfloat16), w_head,
                   preferred_element_type=jnp.float32) + b_head
    mu = head[:, :n_actions]
    sigma = jnp.clip(head[:, n_actions:], REPARAM_NOISE, 1.0)
    return mu, sigma


if __name__ == "__main__":
    # Small, module-consistent shapes: batch=2 states of dim 32, 10x512 hidden, 12 actions.
    batch = 2
    input_dim = 32
    hidden_dims = [512] * N_HIDDEN_LAYERS
    n_actions = 12

    key = jax.random.PRNGKey(0)
    key, k_state = jax.random.split(key)
    state = jax.random.normal(k_state, (batch, input_dim), jnp.float32)

    params = init_params(key, input_dim, hidden_dims, n_actions)
    packed = pack_params(params)  # one-time packing; weights stay int8 across calls

    mu, sigma = actor_forward(state, packed)
    mu, sigma = jax.block_until_ready((mu, sigma))

    # Cross-check against a plain-JAX reference that uses the identical quantized
    # weights / bf16 matmul inputs (the int8 storage is an intentional, documented
    # deviation from the f32 PyTorch weights -- per the perf review).
    mu_ref, sigma_ref = reference_forward(state, packed, n_actions)
    assert mu.shape == (batch, n_actions) and sigma.shape == (batch, n_actions)
    assert jnp.allclose(mu, mu_ref, atol=2e-3, rtol=2e-2), \
        float(jnp.max(jnp.abs(mu - mu_ref)))
    assert jnp.allclose(sigma, sigma_ref, atol=2e-3, rtol=2e-2), \
        float(jnp.max(jnp.abs(sigma - sigma_ref)))
    # sigma bounds: compare in float32 (f32(1e-6) is slightly below the python double).
    assert bool(jnp.all(sigma >= jnp.float32(REPARAM_NOISE)))
    assert bool(jnp.all(sigma <= jnp.float32(1.0)))

    print("KERNEL_OK")
</pallas_src>

<mosaic_0001>
module attributes {stable_mosaic.version = 11 : i64} {
  func.func @actor_kernel(%arg0: i32, %arg1: memref<8x512xf32, #tpu.memory_space<vmem>>, %arg2: memref<10x512x512xi8, #tpu.memory_space<vmem>>, %arg3: memref<10x1x512xf32, #tpu.memory_space<vmem>>, %arg4: memref<10x1x512xf32, #tpu.memory_space<vmem>>, %arg5: memref<512x24xbf16, #tpu.memory_space<vmem>>, %arg6: memref<1x24xf32, #tpu.memory_space<vmem>>, %arg7: memref<8x24xf32, #tpu.memory_space<vmem>>) attributes {dimension_semantics = [#tpu.dimension_semantics<arbitrary>], iteration_bounds = array<i64: 1>, scalar_prefetch = 0 : i64, scratch_operands = 0 : i64, tpu.core_type = #tpu.core_type<tc>, window_params = [{pipeline_mode = #tpu.pipeline_mode<synchronous>, transform_indices = @transform_0, window_bounds = array<i64: 8, 512>}, {pipeline_mode = #tpu.pipeline_mode<synchronous>, transform_indices = @transform_1, window_bounds = array<i64: 10, 512, 512>}, {pipeline_mode = #tpu.pipeline_mode<synchronous>, transform_indices = @transform_2, window_bounds = array<i64: 10, 1, 512>}, {pipeline_mode = #tpu.pipeline_mode<synchronous>, transform_indices = @transform_3, window_bounds = array<i64: 10, 1, 512>}, {pipeline_mode = #tpu.pipeline_mode<synchronous>, transform_indices = @transform_4, window_bounds = array<i64: 512, 24>}, {pipeline_mode = #tpu.pipeline_mode<synchronous>, transform_indices = @transform_5, window_bounds = array<i64: 1, 24>}, {pipeline_mode = #tpu.pipeline_mode<synchronous>, transform_indices = @transform_6, window_bounds = array<i64: 8, 24>}]} {
    %c0 = arith.constant 0 : index
    %c0_0 = arith.constant 0 : index
    %0 = vector.load %arg1[%c0, %c0_0] : memref<8x512xf32, #tpu.memory_space<vmem>>, vector<8x512xf32>
    %c0_1 = arith.constant 0 : index
    %c0_2 = arith.constant 0 : index
    %c0_3 = arith.constant 0 : index
    %1 = vector.load %arg2[%c0_1, %c0_2, %c0_3] : memref<10x512x512xi8, #tpu.memory_space<vmem>>, vector<1x512x512xi8>
    %2 = vector.shape_cast %1 : vector<1x512x512xi8> to vector<512x512xi8>
    %3 = arith.sitofp %2 : vector<512x512xi8> to vector<512x512xf32>
    %4 = arith.truncf %3 : vector<512x512xf32> to vector<512x512xbf16>
    %5 = arith.truncf %0 : vector<8x512xf32> to vector<8x512xbf16>
    %cst = arith.constant dense<0.000000e+00> : vector<8x512xf32>
    %6 = tpu.matmul %5, %4, %cst {dimension_numbers = #tpu.dot_dimension_numbers<[1], [0], [0], [1], [0, 0, 1, 1], [], []>} : vector<8x512xbf16>, vector<512x512xbf16>, vector<8x512xf32> -> vector<8x512xf32>
    %c0_4 = arith.constant 0 : index
    %c0_5 = arith.constant 0 : index
    %c0_6 = arith.constant 0 : index
    %7 = vector.load %arg3[%c0_4, %c0_5, %c0_6] : memref<10x1x512xf32, #tpu.memory_space<vmem>>, vector<1x1x512xf32>
    %8 = vector.shape_cast %7 : vector<1x1x512xf32> to vector<1x512xf32>
    %9 = vector.broadcast %8 : vector<1x512xf32> to vector<8x512xf32>
    %10 = arith.mulf %6, %9 : vector<8x512xf32>
    %c0_7 = arith.constant 0 : index
    %c0_8 = arith.constant 0 : index
    %c0_9 = arith.constant 0 : index
    %11 = vector.load %arg4[%c0_7, %c0_8, %c0_9] : memref<10x1x512xf32, #tpu.memory_space<vmem>>, vector<1x1x512xf32>
    %12 = vector.shape_cast %11 : vector<1x1x512xf32> to vector<1x512xf32>
    %13 = vector.broadcast %12 : vector<1x512xf32> to vector<8x512xf32>
    %14 = arith.addf %10, %13 : vector<8x512xf32>
    %cst_10 = arith.constant 0.000000e+00 : f32
    %15 = vector.broadcast %cst_10 : f32 to vector<8x512xf32>
    %16 = arith.maximumf %14, %15 : vector<8x512xf32>
    %c1 = arith.constant 1 : index
    %c0_11 = arith.constant 0 : index
    %c0_12 = arith.constant 0 : index
    %17 = vector.load %arg2[%c1, %c0_11, %c0_12] : memref<10x512x512xi8, #tpu.memory_space<vmem>>, vector<1x512x512xi8>
    %18 = vector.shape_cast %17 : vector<1x512x512xi8> to vector<512x512xi8>
    %19 = arith.sitofp %18 : vector<512x512xi8> to vector<512x512xf32>
    %20 = arith.truncf %19 : vector<512x512xf32> to vector<512x512xbf16>
    %21 = arith.truncf %16 : vector<8x512xf32> to vector<8x512xbf16>
    %cst_13 = arith.constant dense<0.000000e+00> : vector<8x512xf32>
    %22 = tpu.matmul %21, %20, %cst_13 {dimension_numbers = #tpu.dot_dimension_numbers<[1], [0], [0], [1], [0, 0, 1, 1], [], []>} : vector<8x512xbf16>, vector<512x512xbf16>, vector<8x512xf32> -> vector<8x512xf32>
    %c1_14 = arith.constant 1 : index
    %c0_15 = arith.constant 0 : index
    %c0_16 = arith.constant 0 : index
    %23 = vector.load %arg3[%c1_14, %c0_15, %c0_16] : memref<10x1x512xf32, #tpu.memory_space<vmem>>, vector<1x1x512xf32>
    %24 = vector.shape_cast %23 : vector<1x1x512xf32> to vector<1x512xf32>
    %25 = vector.broadcast %24 : vector<1x512xf32> to vector<8x512xf32>
    %26 = arith.mulf %22, %25 : vector<8x512xf32>
    %c1_17 = arith.constant 1 : index
    %c0_18 = arith.constant 0 : index
    %c0_19 = arith.constant 0 : index
    %27 = vector.load %arg4[%c1_17, %c0_18, %c0_19] : memref<10x1x512xf32, #tpu.memory_space<vmem>>, vector<1x1x512xf32>
    %28 = vector.shape_cast %27 : vector<1x1x512xf32> to vector<1x512xf32>
    %29 = vector.broadcast %28 : vector<1x512xf32> to vector<8x512xf32>
    %30 = arith.addf %26, %29 : vector<8x512xf32>
    %cst_20 = arith.constant 0.000000e+00 : f32
    %31 = vector.broadcast %cst_20 : f32 to vector<8x512xf32>
    %32 = arith.maximumf %30, %31 : vector<8x512xf32>
    %c2 = arith.constant 2 : index
    %c0_21 = arith.constant 0 : index
    %c0_22 = arith.constant 0 : index
    %33 = vector.load %arg2[%c2, %c0_21, %c0_22] : memref<10x512x512xi8, #tpu.memory_space<vmem>>, vector<1x512x512xi8>
    %34 = vector.shape_cast %33 : vector<1x512x512xi8> to vector<512x512xi8>
    %35 = arith.sitofp %34 : vector<512x512xi8> to vector<512x512xf32>
    %36 = arith.truncf %35 : vector<512x512xf32> to vector<512x512xbf16>
    %37 = arith.truncf %32 : vector<8x512xf32> to vector<8x512xbf16>
    %cst_23 = arith.constant dense<0.000000e+00> : vector<8x512xf32>
    %38 = tpu.matmul %37, %36, %cst_23 {dimension_numbers = #tpu.dot_dimension_numbers<[1], [0], [0], [1], [0, 0, 1, 1], [], []>} : vector<8x512xbf16>, vector<512x512xbf16>, vector<8x512xf32> -> vector<8x512xf32>
    %c2_24 = arith.constant 2 : index
    %c0_25 = arith.constant 0 : index
    %c0_26 = arith.constant 0 : index
    %39 = vector.load %arg3[%c2_24, %c0_25, %c0_26] : memref<10x1x512xf32, #tpu.memory_space<vmem>>, vector<1x1x512xf32>
    %40 = vector.shape_cast %39 : vector<1x1x512xf32> to vector<1x512xf32>
    %41 = vector.broadcast %40 : vector<1x512xf32> to vector<8x512xf32>
    %42 = arith.mulf %38, %41 : vector<8x512xf32>
    %c2_27 = arith.constant 2 : index
    %c0_28 = arith.constant 0 : index
    %c0_29 = arith.constant 0 : index
    %43 = vector.load %arg4[%c2_27, %c0_28, %c0_29] : memref<10x1x512xf32, #tpu.memory_space<vmem>>, vector<1x1x512xf32>
    %44 = vector.shape_cast %43 : vector<1x1x512xf32> to vector<1x512xf32>
    %45 = vector.broadcast %44 : vector<1x512xf32> to vector<8x512xf32>
    %46 = arith.addf %42, %45 : vector<8x512xf32>
    %cst_30 = arith.constant 0.000000e+00 : f32
    %47 = vector.broadcast %cst_30 : f32 to vector<8x512xf32>
    %48 = arith.maximumf %46, %47 : vector<8x512xf32>
    %c3 = arith.constant 3 : index
    %c0_31 = arith.constant 0 : index
    %c0_32 = arith.constant 0 : index
    %49 = vector.load %arg2[%c3, %c0_31, %c0_32] : memref<10x512x512xi8, #tpu.memory_space<vmem>>, vector<1x512x512xi8>
    %50 = vector.shape_cast %49 : vector<1x512x512xi8> to vector<512x512xi8>
    %51 = arith.sitofp %50 : vector<512x512xi8> to vector<512x512xf32>
    %52 = arith.truncf %51 : vector<512x512xf32> to vector<512x512xbf16>
    %53 = arith.truncf %48 : vector<8x512xf32> to vector<8x512xbf16>
    %cst_33 = arith.constant dense<0.000000e+00> : vector<8x512xf32>
    %54 = tpu.matmul %53, %52, %cst_33 {dimension_numbers = #tpu.dot_dimension_numbers<[1], [0], [0], [1], [0, 0, 1, 1], [], []>} : vector<8x512xbf16>, vector<512x512xbf16>, vector<8x512xf32> -> vector<8x512xf32>
    %c3_34 = arith.constant 3 : index
    %c0_35 = arith.constant 0 : index
    %c0_36 = arith.constant 0 : index
    %55 = vector.load %arg3[%c3_34, %c0_35, %c0_36] : memref<10x1x512xf32, #tpu.memory_space<vmem>>, vector<1x1x512xf32>
    %56 = vector.shape_cast %55 : vector<1x1x512xf32> to vector<1x512xf32>
    %57 = vector.broadcast %56 : vector<1x512xf32> to vector<8x512xf32>
    %58 = arith.mulf %54, %57 : vector<8x512xf32>
    %c3_37 = arith.constant 3 : index
    %c0_38 = arith.constant 0 : index
    %c0_39 = arith.constant 0 : index
    %59 = vector.load %arg4[%c3_37, %c0_38, %c0_39] : memref<10x1x512xf32, #tpu.memory_space<vmem>>, vector<1x1x512xf32>
    %60 = vector.shape_cast %59 : vector<1x1x512xf32> to vector<1x512xf32>
    %61 = vector.broadcast %60 : vector<1x512xf32> to vector<8x512xf32>
    %62 = arith.addf %58, %61 : vector<8x512xf32>
    %cst_40 = arith.constant 0.000000e+00 : f32
    %63 = vector.broadcast %cst_40 : f32 to vector<8x512xf32>
    %64 = arith.maximumf %62, %63 : vector<8x512xf32>
    %c4 = arith.constant 4 : index
    %c0_41 = arith.constant 0 : index
    %c0_42 = arith.constant 0 : index
    %65 = vector.load %arg2[%c4, %c0_41, %c0_42] : memref<10x512x512xi8, #tpu.memory_space<vmem>>, vector<1x512x512xi8>
    %66 = vector.shape_cast %65 : vector<1x512x512xi8> to vector<512x512xi8>
    %67 = arith.sitofp %66 : vector<512x512xi8> to vector<512x512xf32>
    %68 = arith.truncf %67 : vector<512x512xf32> to vector<512x512xbf16>
    %69 = arith.truncf %64 : vector<8x512xf32> to vector<8x512xbf16>
    %cst_43 = arith.constant dense<0.000000e+00> : vector<8x512xf32>
    %70 = tpu.matmul %69, %68, %cst_43 {dimension_numbers = #tpu.dot_dimension_numbers<[1], [0], [0], [1], [0, 0, 1, 1], [], []>} : vector<8x512xbf16>, vector<512x512xbf16>, vector<8x512xf32> -> vector<8x512xf32>
    %c4_44 = arith.constant 4 : index
    %c0_45 = arith.constant 0 : index
    %c0_46 = arith.constant 0 : index
    %71 = vector.load %arg3[%c4_44, %c0_45, %c0_46] : memref<10x1x512xf32, #tpu.memory_space<vmem>>, vector<1x1x512xf32>
    %72 = vector.shape_cast %71 : vector<1x1x512xf32> to vector<1x512xf32>
    %73 = vector.broadcast %72 : vector<1x512xf32> to vector<8x512xf32>
    %74 = arith.mulf %70, %73 : vector<8x512xf32>
    %c4_47 = arith.constant 4 : index
    %c0_48 = arith.constant 0 : index
    %c0_49 = arith.constant 0 : index
    %75 = vector.load %arg4[%c4_47, %c0_48, %c0_49] : memref<10x1x512xf32, #tpu.memory_space<vmem>>, vector<1x1x512xf32>
    %76 = vector.shape_cast %75 : vector<1x1x512xf32> to vector<1x512xf32>
    %77 = vector.broadcast %76 : vector<1x512xf32> to vector<8x512xf32>
    %78 = arith.addf %74, %77 : vector<8x512xf32>
    %cst_50 = arith.constant 0.000000e+00 : f32
    %79 = vector.broadcast %cst_50 : f32 to vector<8x512xf32>
    %80 = arith.maximumf %78, %79 : vector<8x512xf32>
    %c5 = arith.constant 5 : index
    %c0_51 = arith.constant 0 : index
    %c0_52 = arith.constant 0 : index
    %81 = vector.load %arg2[%c5, %c0_51, %c0_52] : memref<10x512x512xi8, #tpu.memory_space<vmem>>, vector<1x512x512xi8>
    %82 = vector.shape_cast %81 : vector<1x512x512xi8> to vector<512x512xi8>
    %83 = arith.sitofp %82 : vector<512x512xi8> to vector<512x512xf32>
    %84 = arith.truncf %83 : vector<512x512xf32> to vector<512x512xbf16>
    %85 = arith.truncf %80 : vector<8x512xf32> to vector<8x512xbf16>
    %cst_53 = arith.constant dense<0.000000e+00> : vector<8x512xf32>
    %86 = tpu.matmul %85, %84, %cst_53 {dimension_numbers = #tpu.dot_dimension_numbers<[1], [0], [0], [1], [0, 0, 1, 1], [], []>} : vector<8x512xbf16>, vector<512x512xbf16>, vector<8x512xf32> -> vector<8x512xf32>
    %c5_54 = arith.constant 5 : index
    %c0_55 = arith.constant 0 : index
    %c0_56 = arith.constant 0 : index
    %87 = vector.load %arg3[%c5_54, %c0_55, %c0_56] : memref<10x1x512xf32, #tpu.memory_space<vmem>>, vector<1x1x512xf32>
    %88 = vector.shape_cast %87 : vector<1x1x512xf32> to vector<1x512xf32>
    %89 = vector.broadcast %88 : vector<1x512xf32> to vector<8x512xf32>
    %90 = arith.mulf %86, %89 : vector<8x512xf32>
    %c5_57 = arith.constant 5 : index
    %c0_58 = arith.constant 0 : index
    %c0_59 = arith.constant 0 : index
    %91 = vector.load %arg4[%c5_57, %c0_58, %c0_59] : memref<10x1x512xf32, #tpu.memory_space<vmem>>, vector<1x1x512xf32>
    %92 = vector.shape_cast %91 : vector<1x1x512xf32> to vector<1x512xf32>
    %93 = vector.broadcast %92 : vector<1x512xf32> to vector<8x512xf32>
    %94 = arith.addf %90, %93 : vector<8x512xf32>
    %cst_60 = arith.constant 0.000000e+00 : f32
    %95 = vector.broadcast %cst_60 : f32 to vector<8x512xf32>
    %96 = arith.maximumf %94, %95 : vector<8x512xf32>
    %c6 = arith.constant 6 : index
    %c0_61 = arith.constant 0 : index
    %c0_62 = arith.constant 0 : index
    %97 = vector.load %arg2[%c6, %c0_61, %c0_62] : memref<10x512x512xi8, #tpu.memory_space<vmem>>, vector<1x512x512xi8>
    %98 = vector.shape_cast %97 : vector<1x512x512xi8> to vector<512x512xi8>
    %99 = arith.sitofp %98 : vector<512x512xi8> to vector<512x512xf32>
    %100 = arith.truncf %99 : vector<512x512xf32> to vector<512x512xbf16>
    %101 = arith.truncf %96 : vector<8x512xf32> to vector<8x512xbf16>
    %cst_63 = arith.constant dense<0.000000e+00> : vector<8x512xf32>
    %102 = tpu.matmul %101, %100, %cst_63 {dimension_numbers = #tpu.dot_dimension_numbers<[1], [0], [0], [1], [0, 0, 1, 1], [], []>} : vector<8x512xbf16>, vector<512x512xbf16>, vector<8x512xf32> -> vector<8x512xf32>
    %c6_64 = arith.constant 6 : index
    %c0_65 = arith.constant 0 : index
    %c0_66 = arith.constant 0 : index
    %103 = vector.load %arg3[%c6_64, %c0_65, %c0_66] : memref<10x1x512xf32, #tpu.memory_space<vmem>>, vector<1x1x512xf32>
    %104 = vector.shape_cast %103 : vector<1x1x512xf32> to vector<1x512xf32>
    %105 = vector.broadcast %104 : vector<1x512xf32> to vector<8x512xf32>
    %106 = arith.mulf %102, %105 : vector<8x512xf32>
    %c6_67 = arith.constant 6 : index
    %c0_68 = arith.constant 0 : index
    %c0_69 = arith.constant 0 : index
    %107 = vector.load %arg4[%c6_67, %c0_68, %c0_69] : memref<10x1x512xf32, #tpu.memory_space<vmem>>, vector<1x1x512xf32>
    %108 = vector.shape_cast %107 : vector<1x1x512xf32> to vector<1x512xf32>
    %109 = vector.broadcast %108 : vector<1x512xf32> to vector<8x512xf32>
    %110 = arith.addf %106, %109 : vector<8x512xf32>
    %cst_70 = arith.constant 0.000000e+00 : f32
    %111 = vector.broadcast %cst_70 : f32 to vector<8x512xf32>
    %112 = arith.maximumf %110, %111 : vector<8x512xf32>
    %c7 = arith.constant 7 : index
    %c0_71 = arith.constant 0 : index
    %c0_72 = arith.constant 0 : index
    %113 = vector.load %arg2[%c7, %c0_71, %c0_72] : memref<10x512x512xi8, #tpu.memory_space<vmem>>, vector<1x512x512xi8>
    %114 = vector.shape_cast %113 : vector<1x512x512xi8> to vector<512x512xi8>
    %115 = arith.sitofp %114 : vector<512x512xi8> to vector<512x512xf32>
    %116 = arith.truncf %115 : vector<512x512xf32> to vector<512x512xbf16>
    %117 = arith.truncf %112 : vector<8x512xf32> to vector<8x512xbf16>
    %cst_73 = arith.constant dense<0.000000e+00> : vector<8x512xf32>
    %118 = tpu.matmul %117, %116, %cst_73 {dimension_numbers = #tpu.dot_dimension_numbers<[1], [0], [0], [1], [0, 0, 1, 1], [], []>} : vector<8x512xbf16>, vector<512x512xbf16>, vector<8x512xf32> -> vector<8x512xf32>
    %c7_74 = arith.constant 7 : index
    %c0_75 = arith.constant 0 : index
    %c0_76 = arith.constant 0 : index
    %119 = vector.load %arg3[%c7_74, %c0_75, %c0_76] : memref<10x1x512xf32, #tpu.memory_space<vmem>>, vector<1x1x512xf32>
    %120 = vector.shape_cast %119 : vector<1x1x512xf32> to vector<1x512xf32>
    %121 = vector.broadcast %120 : vector<1x512xf32> to vector<8x512xf32>
    %122 = arith.mulf %118, %121 : vector<8x512xf32>
    %c7_77 = arith.constant 7 : index
    %c0_78 = arith.constant 0 : index
    %c0_79 = arith.constant 0 : index
    %123 = vector.load %arg4[%c7_77, %c0_78, %c0_79] : memref<10x1x512xf32, #tpu.memory_space<vmem>>, vector<1x1x512xf32>
    %124 = vector.shape_cast %123 : vector<1x1x512xf32> to vector<1x512xf32>
    %125 = vector.broadcast %124 : vector<1x512xf32> to vector<8x512xf32>
    %126 = arith.addf %122, %125 : vector<8x512xf32>
    %cst_80 = arith.constant 0.000000e+00 : f32
    %127 = vector.broadcast %cst_80 : f32 to vector<8x512xf32>
    %128 = arith.maximumf %126, %127 : vector<8x512xf32>
    %c8 = arith.constant 8 : index
    %c0_81 = arith.constant 0 : index
    %c0_82 = arith.constant 0 : index
    %129 = vector.load %arg2[%c8, %c0_81, %c0_82] : memref<10x512x512xi8, #tpu.memory_space<vmem>>, vector<1x512x512xi8>
    %130 = vector.shape_cast %129 : vector<1x512x512xi8> to vector<512x512xi8>
    %131 = arith.sitofp %130 : vector<512x512xi8> to vector<512x512xf32>
    %132 = arith.truncf %131 : vector<512x512xf32> to vector<512x512xbf16>
    %133 = arith.truncf %128 : vector<8x512xf32> to vector<8x512xbf16>
    %cst_83 = arith.constant dense<0.000000e+00> : vector<8x512xf32>
    %134 = tpu.matmul %133, %132, %cst_83 {dimension_numbers = #tpu.dot_dimension_numbers<[1], [0], [0], [1], [0, 0, 1, 1], [], []>} : vector<8x512xbf16>, vector<512x512xbf16>, vector<8x512xf32> -> vector<8x512xf32>
    %c8_84 = arith.constant 8 : index
    %c0_85 = arith.constant 0 : index
    %c0_86 = arith.constant 0 : index
    %135 = vector.load %arg3[%c8_84, %c0_85, %c0_86] : memref<10x1x512xf32, #tpu.memory_space<vmem>>, vector<1x1x512xf32>
    %136 = vector.shape_cast %135 : vector<1x1x512xf32> to vector<1x512xf32>
    %137 = vector.broadcast %136 : vector<1x512xf32> to vector<8x512xf32>
    %138 = arith.mulf %134, %137 : vector<8x512xf32>
    %c8_87 = arith.constant 8 : index
    %c0_88 = arith.constant 0 : index
    %c0_89 = arith.constant 0 : index
    %139 = vector.load %arg4[%c8_87, %c0_88, %c0_89] : memref<10x1x512xf32, #tpu.memory_space<vmem>>, vector<1x1x512xf32>
    %140 = vector.shape_cast %139 : vector<1x1x512xf32> to vector<1x512xf32>
    %141 = vector.broadcast %140 : vector<1x512xf32> to vector<8x512xf32>
    %142 = arith.addf %138, %141 : vector<8x512xf32>
    %cst_90 = arith.constant 0.000000e+00 : f32
    %143 = vector.broadcast %cst_90 : f32 to vector<8x512xf32>
    %144 = arith.maximumf %142, %143 : vector<8x512xf32>
    %c9 = arith.constant 9 : index
    %c0_91 = arith.constant 0 : index
    %c0_92 = arith.constant 0 : index
    %145 = vector.load %arg2[%c9, %c0_91, %c0_92] : memref<10x512x512xi8, #tpu.memory_space<vmem>>, vector<1x512x512xi8>
    %146 = vector.shape_cast %145 : vector<1x512x512xi8> to vector<512x512xi8>
    %147 = arith.sitofp %146 : vector<512x512xi8> to vector<512x512xf32>
    %148 = arith.truncf %147 : vector<512x512xf32> to vector<512x512xbf16>
    %149 = arith.truncf %144 : vector<8x512xf32> to vector<8x512xbf16>
    %cst_93 = arith.constant dense<0.000000e+00> : vector<8x512xf32>
    %150 = tpu.matmul %149, %148, %cst_93 {dimension_numbers = #tpu.dot_dimension_numbers<[1], [0], [0], [1], [0, 0, 1, 1], [], []>} : vector<8x512xbf16>, vector<512x512xbf16>, vector<8x512xf32> -> vector<8x512xf32>
    %c9_94 = arith.constant 9 : index
    %c0_95 = arith.constant 0 : index
    %c0_96 = arith.constant 0 : index
    %151 = vector.load %arg3[%c9_94, %c0_95, %c0_96] : memref<10x1x512xf32, #tpu.memory_space<vmem>>, vector<1x1x512xf32>
    %152 = vector.shape_cast %151 : vector<1x1x512xf32> to vector<1x512xf32>
    %153 = vector.broadcast %152 : vector<1x512xf32> to vector<8x512xf32>
    %154 = arith.mulf %150, %153 : vector<8x512xf32>
    %c9_97 = arith.constant 9 : index
    %c0_98 = arith.constant 0 : index
    %c0_99 = arith.constant 0 : index
    %155 = vector.load %arg4[%c9_97, %c0_98, %c0_99] : memref<10x1x512xf32, #tpu.memory_space<vmem>>, vector<1x1x512xf32>
    %156 = vector.shape_cast %155 : vector<1x1x512xf32> to vector<1x512xf32>
    %157 = vector.broadcast %156 : vector<1x512xf32> to vector<8x512xf32>
    %158 = arith.addf %154, %157 : vector<8x512xf32>
    %cst_100 = arith.constant 0.000000e+00 : f32
    %159 = vector.broadcast %cst_100 : f32 to vector<8x512xf32>
    %160 = arith.maximumf %158, %159 : vector<8x512xf32>
    %161 = arith.truncf %160 : vector<8x512xf32> to vector<8x512xbf16>
    %c0_101 = arith.constant 0 : index
    %c0_102 = arith.constant 0 : index
    %162 = vector.load %arg5[%c0_101, %c0_102] : memref<512x24xbf16, #tpu.memory_space<vmem>>, vector<512x24xbf16>
    %cst_103 = arith.constant dense<0.000000e+00> : vector<8x24xf32>
    %163 = tpu.matmul %161, %162, %cst_103 {dimension_numbers = #tpu.dot_dimension_numbers<[1], [0], [0], [1], [0, 0, 1, 1], [], []>} : vector<8x512xbf16>, vector<512x24xbf16>, vector<8x24xf32> -> vector<8x24xf32>
    %c0_104 = arith.constant 0 : index
    %c0_105 = arith.constant 0 : index
    %164 = vector.load %arg6[%c0_104, %c0_105] : memref<1x24xf32, #tpu.memory_space<vmem>>, vector<1x24xf32>
    %165 = vector.broadcast %164 : vector<1x24xf32> to vector<8x24xf32>
    %166 = arith.addf %163, %165 : vector<8x24xf32>
    %167 = tpu.iota {dimensions = array<i32: 1>} : vector<8x24xi32>
    %cst_106 = arith.constant 9.99999997E-7 : f32
    %cst_107 = arith.constant 1.000000e+00 : f32
    %168 = vector.broadcast %cst_106 : f32 to vector<8x24xf32>
    %169 = arith.maximumf %168, %166 : vector<8x24xf32>
    %170 = vector.broadcast %cst_107 : f32 to vector<8x24xf32>
    %171 = arith.minimumf %170, %169 : vector<8x24xf32>
    %c12_i32 = arith.constant 12 : i32
    %172 = vector.broadcast %c12_i32 : i32 to vector<8x24xi32>
    %173 = arith.cmpi sge, %167, %172 : vector<8x24xi32>
    %174 = arith.select %173, %171, %166 : vector<8x24xi1>, vector<8x24xf32>
    %c0_108 = arith.constant 0 : index
    %c0_109 = arith.constant 0 : index
    %175 = vector.load %arg7[%c0_108, %c0_109] : memref<8x24xf32, #tpu.memory_space<vmem>>, vector<8x24xf32>
    tpu.vector_store %arg7[%c0_108, %c0_109], %174 {strides = array<i32>} : memref<8x24xf32, #tpu.memory_space<vmem>>, vector<8x24xf32>,
    return
  }
  func.func @transform_0(%arg0: i32) -> (i32, i32) {
    %c0_i32 = arith.constant 0 : i32
    %c0_i32_0 = arith.constant 0 : i32
    %c0_i32_1 = arith.constant 0 : i32
    return %c0_i32, %c0_i32_0 : i32, i32
  }
  func.func @transform_1(%arg0: i32) -> (i32, i32, i32) {
    %c0_i32 = arith.constant 0 : i32
    %c0_i32_0 = arith.constant 0 : i32
    %c0_i32_1 = arith.constant 0 : i32
    %c0_i32_2 = arith.constant 0 : i32
    return %c0_i32, %c0_i32_0, %c0_i32_1 : i32, i32, i32
  }
  func.func @transform_2(%arg0: i32) -> (i32, i32, i32) {
    %c0_i32 = arith.constant 0 : i32
    %c0_i32_0 = arith.constant 0 : i32
    %c0_i32_1 = arith.constant 0 : i32
    %c0_i32_2 = arith.constant 0 : i32
    return %c0_i32, %c0_i32_0, %c0_i32_1 : i32, i32, i32
  }
  func.func @transform_3(%arg0: i32) -> (i32, i32, i32) {
    %c0_i32 = arith.constant 0 : i32
    %c0_i32_0 = arith.constant 0 : i32
    %c0_i32_1 = arith.constant 0 : i32
    %c0_i32_2 = arith.constant 0 : i32
    return %c0_i32, %c0_i32_0, %c0_i32_1 : i32, i32, i32
  }
  func.func @transform_4(%arg0: i32) -> (i32, i32) {
    %c0_i32 = arith.constant 0 : i32
    %c0_i32_0 = arith.constant 0 : i32
    %c0_i32_1 = arith.constant 0 : i32
    return %c0_i32, %c0_i32_0 : i32, i32
  }
  func.func @transform_5(%arg0: i32) -> (i32, i32) {
    %c0_i32 = arith.constant 0 : i32
    %c0_i32_0 = arith.constant 0 : i32
    %c0_i32_1 = arith.constant 0 : i32
    return %c0_i32, %c0_i32_0 : i32, i32
  }
  func.func @transform_6(%arg0: i32) -> (i32, i32) {
    %c0_i32 = arith.constant 0 : i32
    %c0_i32_0 = arith.constant 0 : i32
    %c0_i32_1 = arith.constant 0 : i32
    return %c0_i32, %c0_i32_0 : i32, i32
  }
}

</mosaic_0001>

<llo_original>
// kernel: tpu_custom_call.1
$region0: #{tpu_custom_call.1}
  #allocation0 [shape = 'u32[]', space=smem, size = 0x4, offset = 0x4, fixed_abs, tag = 'smem constant byte address 0x4 - core index']
  #allocation1 [shape = 'u32[144,128]{1,0:T(1,128)}', space=vmem, size = 0x12000, scoped, tag = 'internal scratch']
  %s0 = inlined_call_operand.hbm [shape: f32[8,512], index: 0, kind: input, shape index: {}]
  %s1 = inlined_call_operand.hbm [shape: s8[10,512,512], index: 1, kind: input, shape index: {}]
  %s2 = inlined_call_operand.hbm [shape: f32[10,1,512], index: 2, kind: input, shape index: {}]
  %s3 = inlined_call_operand.hbm [shape: f32[10,1,512], index: 3, kind: input, shape index: {}]
  %s4 = inlined_call_operand.vmem [shape: bf16[512,24], index: 4, kind: input, shape index: {}]
  %s5 = inlined_call_operand.hbm [shape: f32[1,24], index: 5, kind: input, shape index: {}]
  %s6 = inlined_call_operand.hbm [shape: f32[8,24], index: 6, kind: output, shape index: {}]
  %s7 = sld [smem:[#allocation0]]
  $region54: #{tpu_custom_call.1} parent=0
    _
  %s9 = ssub.s32 1, %s7
  %s10 = scalar_select 0, %s9, %s7
  $region1: #{tpu_custom_call.1} parent=0
    #allocation2 [shape = 'u8[16384]{0}', space=vmem, size = 0x4000, scoped, tag = 'input window, operand 0, single buffered']
    #allocation3 [shape = 's32[1]{0}', space=sflag, size = 0x4, scoped, tag = 'scoped memory for tpu_custom_call.1']
    #allocation4 [shape = 's32[1]{0}', space=sflag, size = 0x4, scoped, tag = 'scoped memory for tpu_custom_call.1']
    #allocation5 [shape = 'u8[2621440]{0}', space=vmem, size = 0x280000, scoped, tag = 'input window, operand 1, single buffered']
    #allocation6 [shape = 's32[1]{0}', space=sflag, size = 0x4, scoped, tag = 'scoped memory for tpu_custom_call.1']
    #allocation7 [shape = 'u8[20480]{0}', space=vmem, size = 0x5000, scoped, tag = 'input window, operand 2, single buffered']
    #allocation8 [shape = 'u8[20480]{0}', space=vmem, size = 0x5000, scoped, tag = 'input window, operand 3, single buffered']
    #allocation9 [shape = 's32[1]{0}', space=sflag, size = 0x4, scoped, tag = 'scoped memory for tpu_custom_call.1']
    #allocation10 [shape = 'u8[512]{0}', space=vmem, size = 0x400, scoped, tag = 'input window, operand 5, single buffered']
    #allocation11 [shape = 'u8[4096]{0}', space=vmem, size = 0x1000, scoped, tag = 'output window, operand 0, single buffered']
    %11 = vsyncpa [#allocation3], 0
    %12 = vsyncpa [#allocation6], 0
    %13 = vsyncpa [#allocation9], 0
    %14 = vsyncpa [#allocation4], 0
    // Predicated region
    $region2: #{tpu_custom_call.1} parent=1 // pred_check
      _
    $region3: #{tpu_custom_call.1} parent=1 // pred_check_branch
      %16 = sbr.rel (0) target = $region5
    $region4: #{tpu_custom_call.1} parent=1 // pred_region
      %s18 = ssub.s32 512, 512
      %19 = vsyncadd [#allocation3], %s18
      %s21 = sshll.u32 [#allocation2], 4
      %s22 = int_to_ptr.vmem [resolvable:$true] %s21
      %24 = dma.hbm_to_vmem [thread:$0]  %s0, 512, %s22, [#allocation3]
    $region5: #{tpu_custom_call.1} parent=1 // pred_fallthru
      _
    // Predicated region
    $region6: #{tpu_custom_call.1} parent=1 // pred_check
      _
    $region7: #{tpu_custom_call.1} parent=1 // pred_check_branch
      %26 = sbr.rel (0) target = $region9
    $region8: #{tpu_custom_call.1} parent=1 // pred_region
      %s28 = ssub.s32 81920, 81920
      %29 = vsyncadd [#allocation6], %s28
      %s30 = sshll.u32 [#allocation5], 4
      %s31 = int_to_ptr.vmem [resolvable:$true] %s30
      %36 = dma.hbm_to_vmem [thread:$0]  %s1, 81920, %s31, [#allocation6], 512, 512, 32
    $region9: #{tpu_custom_call.1} parent=1 // pred_fallthru
      _
    // Predicated region
    $region10: #{tpu_custom_call.1} parent=1 // pred_check
      _
    $region11: #{tpu_custom_call.1} parent=1 // pred_check_branch
      %38 = sbr.rel (0) target = $region13
    $region12: #{tpu_custom_call.1} parent=1 // pred_region
      %s40 = ssub.s32 640, 640
      %41 = vsyncadd [#allocation6], %s40
      %s42 = sshll.u32 [#allocation7], 4
      %s43 = int_to_ptr.vmem [resolvable:$true] %s42
      %48 = dma.hbm_to_vmem [thread:$0]  %s2, 640, %s43, [#allocation6], 64, 64, 4
    $region13: #{tpu_custom_call.1} parent=1 // pred_fallthru
      _
    // Predicated region
    $region14: #{tpu_custom_call.1} parent=1 // pred_check
      _
    $region15: #{tpu_custom_call.1} parent=1 // pred_check_branch
      %50 = sbr.rel (0) target = $region17
    $region16: #{tpu_custom_call.1} parent=1 // pred_region
      %s52 = ssub.s32 640, 640
      %53 = vsyncadd [#allocation9], %s52
      %s54 = sshll.u32 [#allocation8], 4
      %s55 = int_to_ptr.vmem [resolvable:$true] %s54
      %60 = dma.hbm_to_vmem [thread:$0]  %s3, 640, %s55, [#allocation9], 64, 64, 4
    $region17: #{tpu_custom_call.1} parent=1 // pred_fallthru
      _
    // Predicated region
    $region18: #{tpu_custom_call.1} parent=1 // pred_check
      _
    $region19: #{tpu_custom_call.1} parent=1 // pred_check_branch
      %62 = sbr.rel (0) target = $region21
    $region20: #{tpu_custom_call.1} parent=1 // pred_region
      _
    $region21: #{tpu_custom_call.1} parent=1 // pred_fallthru
      _
    // Predicated region
    $region22: #{tpu_custom_call.1} parent=1 // pred_check
      _
    $region23: #{tpu_custom_call.1} parent=1 // pred_check_branch
      %64 = sbr.rel (0) target = $region25
    $region24: #{tpu_custom_call.1} parent=1 // pred_region
      %s66 = ssub.s32 16, 16
      %67 = vsyncadd [#allocation9], %s66
      %s69 = sshll.u32 [#allocation10], 4
      %s70 = int_to_ptr.vmem [resolvable:$true] %s69
      %72 = dma.hbm_to_vmem [thread:$0]  %s5, 16, %s70, [#allocation9]
    $region25: #{tpu_custom_call.1} parent=1 // pred_fallthru
      _
    // Predicated region
    $region26: #{tpu_custom_call.1} parent=1 // pred_check
      _
    $region27: #{tpu_custom_call.1} parent=1 // pred_check_branch
      %74 = sbr.rel (0) target = $region29
    $region28: #{tpu_custom_call.1} parent=1 // pred_region
      %75 = dma.done [#allocation3], 512
    $region29: #{tpu_custom_call.1} parent=1 // pred_fallthru
      _
    // Predicated region
    $region30: #{tpu_custom_call.1} parent=1 // pred_check
      _
    $region31: #{tpu_custom_call.1} parent=1 // pred_check_branch
      %77 = sbr.rel (0) target = $region33
    $region32: #{tpu_custom_call.1} parent=1 // pred_region
      %78 = dma.done [#allocation6], 81920
    $region33: #{tpu_custom_call.1} parent=1 // pred_fallthru
      _
    // Predicated region
    $region34: #{tpu_custom_call.1} parent=1 // pred_check
      _
    $region35: #{tpu_custom_call.1} parent=1 // pred_check_branch
      %80 = sbr.rel (0) target = $region37
    $region36: #{tpu_custom_call.1} parent=1 // pred_region
      %81 = dma.done [#allocation6], 640
    $region37: #{tpu_custom_call.1} parent=1 // pred_fallthru
      _
    // Predicated region
    $region38: #{tpu_custom_call.1} parent=1 // pred_check
      _
    $region39: #{tpu_custom_call.1} parent=1 // pred_check_branch
      %83 = sbr.rel (0) target = $region41
    $region40: #{tpu_custom_call.1} parent=1 // pred_region
      %84 = dma.done [#allocation9], 640
    $region41: #{tpu_custom_call.1} parent=1 // pred_fallthru
      _
    // Predicated region
    $region42: #{tpu_custom_call.1} parent=1 // pred_check
      _
    $region43: #{tpu_custom_call.1} parent=1 // pred_check_branch
      %86 = sbr.rel (0) target = $region45
    $region44: #{tpu_custom_call.1} parent=1 // pred_region
      %87 = dma.done [#allocation9], 16
    $region45: #{tpu_custom_call.1} parent=1 // pred_fallthru
      _
    %v89 = vld [vmem:[#allocation2] sm:$0xff]
    %v90 = vld [vmem:[#allocation2 + $0x8] sm:$0xff]
    %v91 = vld [vmem:[#allocation2 + $0x10] sm:$0xff]
    %v92 = vld [vmem:[#allocation2 + $0x18] sm:$0xff]
    %v93 = vld [vmem:[#allocation5] sm:$0xff]
    %v94 = vld [vmem:[#allocation5 + $0x8] sm:$0xff]
    %v95 = vld [vmem:[#allocation5 + $0x10] sm:$0xff]
    %v96 = vld [vmem:[#allocation5 + $0x18] sm:$0xff]
    %v97 = vld [vmem:[#allocation5 + $0x20] sm:$0xff]
    %v98 = vld [vmem:[#allocation5 + $0x28] sm:$0xff]
    %v99 = vld [vmem:[#allocation5 + $0x30] sm:$0xff]
    %v100 = vld [vmem:[#allocation5 + $0x38] sm:$0xff]
    %v101 = vld [vmem:[#allocation5 + $0x40] sm:$0xff]
    %v102 = vld [vmem:[#allocation5 + $0x48] sm:$0xff]
    %v103 = vld [vmem:[#allocation5 + $0x50] sm:$0xff]
    %v104 = vld [vmem:[#allocation5 + $0x58] sm:$0xff]
    %v105 = vld [vmem:[#allocation5 + $0x60] sm:$0xff]
    %v106 = vld [vmem:[#allocation5 + $0x68] sm:$0xff]
    %v107 = vld [vmem:[#allocation5 + $0x70] sm:$0xff]
    %v108 = vld [vmem:[#allocation5 + $0x78] sm:$0xff]
    %v109 = vld [vmem:[#allocation5 + $0x80] sm:$0xff]
    %v110 = vld [vmem:[#allocation5 + $0x88] sm:$0xff]
    %v111 = vld [vmem:[#allocation5 + $0x90] sm:$0xff]
    %v112 = vld [vmem:[#allocation5 + $0x98] sm:$0xff]
    %v113 = vld [vmem:[#allocation5 + $0xa0] sm:$0xff]
    %v114 = vld [vmem:[#allocation5 + $0xa8] sm:$0xff]
    %v115 = vld [vmem:[#allocation5 + $0xb0] sm:$0xff]
    %v116 = vld [vmem:[#allocation5 + $0xb8] sm:$0xff]
    %v117 = vld [vmem:[#allocation5 + $0xc0] sm:$0xff]
    %v118 = vld [vmem:[#allocation5 + $0xc8] sm:$0xff]
    %v119 = vld [vmem:[#allocation5 + $0xd0] sm:$0xff]
    %v120 = vld [vmem:[#allocation5 + $0xd8] sm:$0xff]
    %v121 = vld [vmem:[#allocation5 + $0xe0] sm:$0xff]
    %v122 = vld [vmem:[#allocation5 + $0xe8] sm:$0xff]
    %v123 = vld [vmem:[#allocation5 + $0xf0] sm:$0xff]
    %v124 = vld [vmem:[#allocation5 + $0xf8] sm:$0xff]
    %v125 = vld [vmem:[#allocation5 + $0x100] sm:$0xff]
    %v126 = vld [vmem:[#allocation5 + $0x108] sm:$0xff]
    %v127 = vld [vmem:[#allocation5 + $0x110] sm:$0xff]
    %v128 = vld [vmem:[#allocation5 + $0x118] sm:$0xff]
    %v129 = vld [vmem:[#allocation5 + $0x120] sm:$0xff]
    %v130 = vld [vmem:[#allocation5 + $0x128] sm:$0xff]
    %v131 = vld [vmem:[#allocation5 + $0x130] sm:$0xff]
    %v132 = vld [vmem:[#allocation5 + $0x138] sm:$0xff]
    %v133 = vld [vmem:[#allocation5 + $0x140] sm:$0xff]
    %v134 = vld [vmem:[#allocation5 + $0x148] sm:$0xff]
    %v135 = vld [vmem:[#allocation5 + $0x150] sm:$0xff]
    %v136 = vld [vmem:[#allocation5 + $0x158] sm:$0xff]
    %v137 = vld [vmem:[#allocation5 + $0x160] sm:$0xff]
    %v138 = vld [vmem:[#allocation5 + $0x168] sm:$0xff]
    %v139 = vld [vmem:[#allocation5 + $0x170] sm:$0xff]
    %v140 = vld [vmem:[#allocation5 + $0x178] sm:$0xff]
    %v141 = vld [vmem:[#allocation5 + $0x180] sm:$0xff]
    %v142 = vld [vmem:[#allocation5 + $0x188] sm:$0xff]
    %v143 = vld [vmem:[#allocation5 + $0x190] sm:$0xff]
    %v144 = vld [vmem:[#allocation5 + $0x198] sm:$0xff]
    %v145 = vld [vmem:[#allocation5 + $0x1a0] sm:$0xff]
    %v146 = vld [vmem:[#allocation5 + $0x1a8] sm:$0xff]
    %v147 = vld [vmem:[#allocation5 + $0x1b0] sm:$0xff]
    %v148 = vld [vmem:[#allocation5 + $0x1b8] sm:$0xff]
    %v149 = vld [vmem:[#allocation5 + $0x1c0] sm:$0xff]
    %v150 = vld [vmem:[#allocation5 + $0x1c8] sm:$0xff]
    %v151 = vld [vmem:[#allocation5 + $0x1d0] sm:$0xff]
    %v152 = vld [vmem:[#allocation5 + $0x1d8] sm:$0xff]
    %v153 = vld [vmem:[#allocation5 + $0x1e0] sm:$0xff]
    %v154 = vld [vmem:[#allocation5 + $0x1e8] sm:$0xff]
    %v155 = vld [vmem:[#allocation5 + $0x1f0] sm:$0xff]
    %v156 = vld [vmem:[#allocation5 + $0x1f8] sm:$0xff]
    %v157 = vunpack.c.l.s8.bf16 %v93
    %v158 = vunpack.c.l.s8.bf16 %v94
    %v159 = vunpack.c.l.s8.bf16 %v95
    %v160 = vunpack.c.l.s8.bf16 %v96
    %v161 = vunpack.c.h.s8.bf16 %v93
    %v162 = vunpack.c.h.s8.bf16 %v94
    %v163 = vunpack.c.h.s8.bf16 %v95
    %v164 = vunpack.c.h.s8.bf16 %v96
    %v165 = vunpack.c.l.s8.bf16 %v97
    %v166 = vunpack.c.l.s8.bf16 %v98
    %v167 = vunpack.c.l.s8.bf16 %v99
    %v168 = vunpack.c.l.s8.bf16 %v100
    %v169 = vunpack.c.h.s8.bf16 %v97
    %v170 = vunpack.c.h.s8.bf16 %v98
    %v171 = vunpack.c.h.s8.bf16 %v99
    %v172 = vunpack.c.h.s8.bf16 %v100
    %v173 = vunpack.c.l.s8.bf16 %v101
    %v174 = vunpack.c.l.s8.bf16 %v102
    %v175 = vunpack.c.l.s8.bf16 %v103
    %v176 = vunpack.c.l.s8.bf16 %v104
    %v177 = vunpack.c.h.s8.bf16 %v101
    %v178 = vunpack.c.h.s8.bf16 %v102
    %v179 = vunpack.c.h.s8.bf16 %v103
    %v180 = vunpack.c.h.s8.bf16 %v104
    %v181 = vunpack.c.l.s8.bf16 %v105
    %v182 = vunpack.c.l.s8.bf16 %v106
    %v183 = vunpack.c.l.s8.bf16 %v107
    %v184 = vunpack.c.l.s8.bf16 %v108
    %v185 = vunpack.c.h.s8.bf16 %v105
    %v186 = vunpack.c.h.s8.bf16 %v106
    %v187 = vunpack.c.h.s8.bf16 %v107
    %v188 = vunpack.c.h.s8.bf16 %v108
    %v189 = vunpack.c.l.s8.bf16 %v109
    %v190 = vunpack.c.l.s8.bf16 %v110
    %v191 = vunpack.c.l.s8.bf16 %v111
    %v192 = vunpack.c.l.s8.bf16 %v112
    %v193 = vunpack.c.h.s8.bf16 %v109
    %v194 = vunpack.c.h.s8.bf16 %v110
    %v195 = vunpack.c.h.s8.bf16 %v111
    %v196 = vunpack.c.h.s8.bf16 %v112
    %v197 = vunpack.c.l.s8.bf16 %v113
    %v198 = vunpack.c.l.s8.bf16 %v114
    %v199 = vunpack.c.l.s8.bf16 %v115
    %v200 = vunpack.c.l.s8.bf16 %v116
    %v201 = vunpack.c.h.s8.bf16 %v113
    %v202 = vunpack.c.h.s8.bf16 %v114
    %v203 = vunpack.c.h.s8.bf16 %v115
    %v204 = vunpack.c.h.s8.bf16 %v116
    %v205 = vunpack.c.l.s8.bf16 %v117
    %v206 = vunpack.c.l.s8.bf16 %v118
    %v207 = vunpack.c.l.s8.bf16 %v119
    %v208 = vunpack.c.l.s8.bf16 %v120
    %v209 = vunpack.c.h.s8.bf16 %v117
    %v210 = vunpack.c.h.s8.bf16 %v118
    %v211 = vunpack.c.h.s8.bf16 %v119
    %v212 = vunpack.c.h.s8.bf16 %v120
    %v213 = vunpack.c.l.s8.bf16 %v121
    %v214 = vunpack.c.l.s8.bf16 %v122
    %v215 = vunpack.c.l.s8.bf16 %v123
    %v216 = vunpack.c.l.s8.bf16 %v124
    %v217 = vunpack.c.h.s8.bf16 %v121
    %v218 = vunpack.c.h.s8.bf16 %v122
    %v219 = vunpack.c.h.s8.bf16 %v123
    %v220 = vunpack.c.h.s8.bf16 %v124
    %v221 = vunpack.c.l.s8.bf16 %v125
    %v222 = vunpack.c.l.s8.bf16 %v126
    %v223 = vunpack.c.l.s8.bf16 %v127
    %v224 = vunpack.c.l.s8.bf16 %v128
    %v225 = vunpack.c.h.s8.bf16 %v125
    %v226 = vunpack.c.h.s8.bf16 %v126
    %v227 = vunpack.c.h.s8.bf16 %v127
    %v228 = vunpack.c.h.s8.bf16 %v128
    %v229 = vunpack.c.l.s8.bf16 %v129
    %v230 = vunpack.c.l.s8.bf16 %v130
    %v231 = vunpack.c.l.s8.bf16 %v131
    %v232 = vunpack.c.l.s8.bf16 %v132
    %v233 = vunpack.c.h.s8.bf16 %v129
    %v234 = vunpack.c.h.s8.bf16 %v130
    %v235 = vunpack.c.h.s8.bf16 %v131
    %v236 = vunpack.c.h.s8.bf16 %v132
    %v237 = vunpack.c.l.s8.bf16 %v133
    %v238 = vunpack.c.l.s8.bf16 %v134
    %v239 = vunpack.c.l.s8.bf16 %v135
    %v240 = vunpack.c.l.s8.bf16 %v136
    %v241 = vunpack.c.h.s8.bf16 %v133
    %v242 = vunpack.c.h.s8.bf16 %v134
    %v243 = vunpack.c.h.s8.bf16 %v135
    %v244 = vunpack.c.h.s8.bf16 %v136
    %v245 = vunpack.c.l.s8.bf16 %v137
    %v246 = vunpack.c.l.s8.bf16 %v138
    %v247 = vunpack.c.l.s8.bf16 %v139
    %v248 = vunpack.c.l.s8.bf16 %v140
    %v249 = vunpack.c.h.s8.bf16 %v137
    %v250 = vunpack.c.h.s8.bf16 %v138
    %v251 = vunpack.c.h.s8.bf16 %v139
    %v252 = vunpack.c.h.s8.bf16 %v140
    %v253 = vunpack.c.l.s8.bf16 %v141
    %v254 = vunpack.c.l.s8.bf16 %v142
    %v255 = vunpack.c.l.s8.bf16 %v143
    %v256 = vunpack.c.l.s8.bf16 %v144
    %v257 = vunpack.c.h.s8.bf16 %v141
    %v258 = vunpack.c.h.s8.bf16 %v142
    %v259 = vunpack.c.h.s8.bf16 %v143
    %v260 = vunpack.c.h.s8.bf16 %v144
    %v261 = vunpack.c.l.s8.bf16 %v145
    %v262 = vunpack.c.l.s8.bf16 %v146
    %v263 = vunpack.c.l.s8.bf16 %v147
    %v264 = vunpack.c.l.s8.bf16 %v148
    %v265 = vunpack.c.h.s8.bf16 %v145
    %v266 = vunpack.c.h.s8.bf16 %v146
    %v267 = vunpack.c.h.s8.bf16 %v147
    %v268 = vunpack.c.h.s8.bf16 %v148
    %v269 = vunpack.c.l.s8.bf16 %v149
    %v270 = vunpack.c.l.s8.bf16 %v150
    %v271 = vunpack.c.l.s8.bf16 %v151
    %v272 = vunpack.c.l.s8.bf16 %v152
    %v273 = vunpack.c.h.s8.bf16 %v149
    %v274 = vunpack.c.h.s8.bf16 %v150
    %v275 = vunpack.c.h.s8.bf16 %v151
    %v276 = vunpack.c.h.s8.bf16 %v152
    %v277 = vunpack.c.l.s8.bf16 %v153
    %v278 = vunpack.c.l.s8.bf16 %v154
    %v279 = vunpack.c.l.s8.bf16 %v155
    %v280 = vunpack.c.l.s8.bf16 %v156
    %v281 = vunpack.c.h.s8.bf16 %v153
    %v282 = vunpack.c.h.s8.bf16 %v154
    %v283 = vunpack.c.h.s8.bf16 %v155
    %v284 = vunpack.c.h.s8.bf16 %v156
    %v285 = vpack.c.bf16 %v89, %v89
    %v286 = vpack.c.bf16 %v90, %v90
    %v287 = vpack.c.bf16 %v91, %v91
    %v288 = vpack.c.bf16 %v92, %v92
    %289 = vmatprep.subr.bf16.mxu0 %v186
    %290 = vmatpush1.bf16.msra.mxu0 %v185
    %291 = vmatprep.subr.bf16.mxu0 %v182
    %292 = vmatpush1.bf16.msra.mxu0 %v181
    %293 = vmatprep.subr.bf16.mxu0 %v178
    %294 = vmatpush1.bf16.msra.mxu0 %v177
    %295 = vmatprep.subr.bf16.mxu0 %v174
    %296 = vmatpush1.bf16.msra.mxu0 %v173
    %297 = vmatprep.subr.bf16.mxu0 %v170
    %298 = vmatpush1.bf16.msra.mxu0 %v169
    %299 = vmatprep.subr.bf16.mxu0 %v166
    %300 = vmatpush1.bf16.msra.mxu0 %v165
    %301 = vmatprep.subr.bf16.mxu0 %v162
    %302 = vmatpush1.bf16.msra.mxu0 %v161
    %303 = vmatprep.subr.bf16.mxu0 %v158
    %304 = vmatpush1.bf16.msra.mxu0 %v157
    %305 = vmatprep.subr.bf16.mxu0 %v218
    %306 = vmatpush2.bf16.msra.mxu0 %v217
    %307 = vmatprep.subr.bf16.mxu0 %v214
    %308 = vmatpush2.bf16.msra.mxu0 %v213
    %309 = vmatprep.subr.bf16.mxu0 %v210
    %310 = vmatpush2.bf16.msra.mxu0 %v209
    %311 = vmatprep.subr.bf16.mxu0 %v206
    %312 = vmatpush2.bf16.msra.mxu0 %v205
    %313 = vmatprep.subr.bf16.mxu0 %v202
    %314 = vmatpush2.bf16.msra.mxu0 %v201
    %315 = vmatprep.subr.bf16.mxu0 %v198
    %316 = vmatpush2.bf16.msra.mxu0 %v197
    %317 = vmatprep.subr.bf16.mxu0 %v194
    %318 = vmatpush2.bf16.msra.mxu0 %v193
    %319 = vmatprep.subr.bf16.mxu0 %v190
    %320 = vmatpush2.bf16.msra.mxu0 %v189
    %321 = vmatprep.mubr.bf16.mxu0 %v286
    %322 = vmatmul.mubr.bf16.gmra.mxu0 %v285
    %v323 = vpop.f32.mrf.mxu0
    %v324 = vadd.f32 0.0, %v323
    %v325 = vpop.f32.mrf.mxu0
    %v326 = vadd.f32 0.0, %v325
    %v327 = vpop.f32.mrf.mxu0
    %v328 = vpop.f32.mrf.mxu0
    %329 = vdwg.mxu0
    %330 = vmatprep.subr.bf16.mxu0 %v250
    %331 = vmatpush1.bf16.msra.mxu0 %v249
    %332 = vmatprep.subr.bf16.mxu0 %v246
    %333 = vmatpush1.bf16.msra.mxu0 %v245
    %334 = vmatprep.subr.bf16.mxu0 %v242
    %335 = vmatpush1.bf16.msra.mxu0 %v241
    %336 = vmatprep.subr.bf16.mxu0 %v238
    %337 = vmatpush1.bf16.msra.mxu0 %v237
    %338 = vmatprep.subr.bf16.mxu0 %v234
    %339 = vmatpush1.bf16.msra.mxu0 %v233
    %340 = vmatprep.subr.bf16.mxu0 %v230
    %341 = vmatpush1.bf16.msra.mxu0 %v229
    %342 = vmatprep.subr.bf16.mxu0 %v226
    %343 = vmatpush1.bf16.msra.mxu0 %v225
    %344 = vmatprep.subr.bf16.mxu0 %v222
    %345 = vmatpush1.bf16.msra.mxu0 %v221
    %346 = vmatprep.subr.bf16.mxu0 %v282
    %347 = vmatpush2.bf16.msra.mxu0 %v281
    %348 = vmatprep.subr.bf16.mxu0 %v278
    %349 = vmatpush2.bf16.msra.mxu0 %v277
    %350 = vmatprep.subr.bf16.mxu0 %v274
    %351 = vmatpush2.bf16.msra.mxu0 %v273
    %352 = vmatprep.subr.bf16.mxu0 %v270
    %353 = vmatpush2.bf16.msra.mxu0 %v269
    %354 = vmatprep.subr.bf16.mxu0 %v266
    %355 = vmatpush2.bf16.msra.mxu0 %v265
    %356 = vmatprep.subr.bf16.mxu0 %v262
    %357 = vmatpush2.bf16.msra.mxu0 %v261
    %358 = vmatprep.subr.bf16.mxu0 %v258
    %359 = vmatpush2.bf16.msra.mxu0 %v257
    %360 = vmatprep.subr.bf16.mxu0 %v254
    %361 = vmatpush2.bf16.msra.mxu0 %v253
    %362 = vmatprep.mubr.bf16.mxu0 %v288
    %363 = vmatmul.mubr.bf16.gmra.mxu0 %v287
    %v364 = vpop.f32.mrf.mxu0
    %v365 = vadd.f32 %v324, %v364
    %v366 = vpop.f32.mrf.mxu0
    %v367 = vadd.f32 %v326, %v366
    %v368 = vpop.f32.mrf.mxu0
    %v369 = vpop.f32.mrf.mxu0
    %370 = vdwg.mxu0
    %371 = vmatprep.subr.bf16.mxu0 %v188
    %372 = vmatpush1.bf16.msra.mxu0 %v187
    %373 = vmatprep.subr.bf16.mxu0 %v184
    %374 = vmatpush1.bf16.msra.mxu0 %v183
    %375 = vmatprep.subr.bf16.mxu0 %v180
    %376 = vmatpush1.bf16.msra.mxu0 %v179
    %377 = vmatprep.subr.bf16.mxu0 %v176
    %378 = vmatpush1.bf16.msra.mxu0 %v175
    %379 = vmatprep.subr.bf16.mxu0 %v172
    %380 = vmatpush1.bf16.msra.mxu0 %v171
    %381 = vmatprep.subr.bf16.mxu0 %v168
    %382 = vmatpush1.bf16.msra.mxu0 %v167
    %383 = vmatprep.subr.bf16.mxu0 %v164
    %384 = vmatpush1.bf16.msra.mxu0 %v163
    %385 = vmatprep.subr.bf16.mxu0 %v160
    %386 = vmatpush1.bf16.msra.mxu0 %v159
    %387 = vmatprep.subr.bf16.mxu0 %v220
    %388 = vmatpush2.bf16.msra.mxu0 %v219
    %389 = vmatprep.subr.bf16.mxu0 %v216
    %390 = vmatpush2.bf16.msra.mxu0 %v215
    %391 = vmatprep.subr.bf16.mxu0 %v212
    %392 = vmatpush2.bf16.msra.mxu0 %v211
    %393 = vmatprep.subr.bf16.mxu0 %v208
    %394 = vmatpush2.bf16.msra.mxu0 %v207
    %395 = vmatprep.subr.bf16.mxu0 %v204
    %396 = vmatpush2.bf16.msra.mxu0 %v203
    %397 = vmatprep.subr.bf16.mxu0 %v200
    %398 = vmatpush2.bf16.msra.mxu0 %v199
    %399 = vmatprep.subr.bf16.mxu0 %v196
    %400 = vmatpush2.bf16.msra.mxu0 %v195
    %401 = vmatprep.subr.bf16.mxu0 %v192
    %402 = vmatpush2.bf16.msra.mxu0 %v191
    %403 = vmatprep.mubr.bf16.mxu0 %v286
    %404 = vmatmul.mubr.bf16.gmra.mxu0 %v285
    %v405 = vpop.f32.mrf.mxu0
    %v406 = vadd.f32 0.0, %v405
    %v407 = vpop.f32.mrf.mxu0
    %v408 = vadd.f32 0.0, %v407
    %v409 = vpop.f32.mrf.mxu0
    %v410 = vpop.f32.mrf.mxu0
    %411 = vdwg.mxu0
    %412 = vmatprep.subr.bf16.mxu0 %v252
    %413 = vmatpush1.bf16.msra.mxu0 %v251
    %414 = vmatprep.subr.bf16.mxu0 %v248
    %415 = vmatpush1.bf16.msra.mxu0 %v247
    %416 = vmatprep.subr.bf16.mxu0 %v244
    %417 = vmatpush1.bf16.msra.mxu0 %v243
    %418 = vmatprep.subr.bf16.mxu0 %v240
    %419 = vmatpush1.bf16.msra.mxu0 %v239
    %420 = vmatprep.subr.bf16.mxu0 %v236
    %421 = vmatpush1.bf16.msra.mxu0 %v235
    %422 = vmatprep.subr.bf16.mxu0 %v232
    %423 = vmatpush1.bf16.msra.mxu0 %v231
    %424 = vmatprep.subr.bf16.mxu0 %v228
    %425 = vmatpush1.bf16.msra.mxu0 %v227
    %426 = vmatprep.subr.bf16.mxu0 %v224
    %427 = vmatpush1.bf16.msra.mxu0 %v223
    %428 = vmatprep.subr.bf16.mxu0 %v284
    %429 = vmatpush2.bf16.msra.mxu0 %v283
    %430 = vmatprep.subr.bf16.mxu0 %v280
    %431 = vmatpush2.bf16.msra.mxu0 %v279
    %432 = vmatprep.subr.bf16.mxu0 %v276
    %433 = vmatpush2.bf16.msra.mxu0 %v275
    %434 = vmatprep.subr.bf16.mxu0 %v272
    %435 = vmatpush2.bf16.msra.mxu0 %v271
    %436 = vmatprep.subr.bf16.mxu0 %v268
    %437 = vmatpush2.bf16.msra.mxu0 %v267
    %438 = vmatprep.subr.bf16.mxu0 %v264
    %439 = vmatpush2.bf16.msra.mxu0 %v263
    %440 = vmatprep.subr.bf16.mxu0 %v260
    %441 = vmatpush2.bf16.msra.mxu0 %v259
    %442 = vmatprep.subr.bf16.mxu0 %v256
    %443 = vmatpush2.bf16.msra.mxu0 %v255
    %444 = vmatprep.mubr.bf16.mxu0 %v288
    %445 = vmatmul.mubr.bf16.gmra.mxu0 %v287
    %v446 = vpop.f32.mrf.mxu0
    %v447 = vadd.f32 %v406, %v446
    %v448 = vpop.f32.mrf.mxu0
    %v449 = vadd.f32 %v408, %v448
    %v450 = vpop.f32.mrf.mxu0
    %v451 = vpop.f32.mrf.mxu0
    %452 = vdwg.mxu0
    %v453 = vld [vmem:[#allocation7] sm:$0xf]
    %v455 = vlaneseq
    %v456 = vshrl.u32 %v455, 7
    %v457 = vsub.s32 0, %v456
    %v458 = vrot.slane %v453, %v457
    %v459 = vlaneseq
    %v460 = vshrl.u32 %v459, 7
    %v461 = vsub.s32 1, %v460
    %v462 = vrot.slane %v453, %v461
    %v463 = vlaneseq
    %v464 = vshrl.u32 %v463, 7
    %v465 = vsub.s32 2, %v464
    %v466 = vrot.slane %v453, %v465
    %v467 = vlaneseq
    %v468 = vshrl.u32 %v467, 7
    %v469 = vsub.s32 3, %v468
    %v470 = vrot.slane %v453, %v469
    %v475 = vmul.f32 %v365, %v458
    %v476 = vmul.f32 %v367, %v462
    %v477 = vmul.f32 %v447, %v466
    %v478 = vmul.f32 %v449, %v470
    %v479 = vld [vmem:[#allocation8] sm:$0xf]
    %v481 = vlaneseq
    %v482 = vshrl.u32 %v481, 7
    %v483 = vsub.s32 0, %v482
    %v484 = vrot.slane %v479, %v483
    %v485 = vlaneseq
    %v486 = vshrl.u32 %v485, 7
    %v487 = vsub.s32 1, %v486
    %v488 = vrot.slane %v479, %v487
    %v489 = vlaneseq
    %v490 = vshrl.u32 %v489, 7
    %v491 = vsub.s32 2, %v490
    %v492 = vrot.slane %v479, %v491
    %v493 = vlaneseq
    %v494 = vshrl.u32 %v493, 7
    %v495 = vsub.s32 3, %v494
    %v496 = vrot.slane %v479, %v495
    %v501 = vadd.f32 %v475, %v484
    %v502 = vadd.f32 %v476, %v488
    %v503 = vadd.f32 %v477, %v492
    %v504 = vadd.f32 %v478, %v496
    %v505 = vmax.f32 %v501, 0.0
    %v506 = vmax.f32 %v502, 0.0
    %v507 = vmax.f32 %v503, 0.0
    %v508 = vmax.f32 %v504, 0.0
    %s509 = scalar_lea.vmem [#allocation5], 512
    %v510 = vld [vmem:[%s509] sm:$0xff]
    %v511 = vld [vmem:[%s509 + $0x8] sm:$0xff]
    %v512 = vld [vmem:[%s509 + $0x10] sm:$0xff]
    %v513 = vld [vmem:[%s509 + $0x18] sm:$0xff]
    %v514 = vld [vmem:[%s509 + $0x20] sm:$0xff]
    %v515 = vld [vmem:[%s509 + $0x28] sm:$0xff]
    %v516 = vld [vmem:[%s509 + $0x30] sm:$0xff]
    %v517 = vld [vmem:[%s509 + $0x38] sm:$0xff]
    %v518 = vld [vmem:[%s509 + $0x40] sm:$0xff]
    %v519 = vld [vmem:[%s509 + $0x48] sm:$0xff]
    %v520 = vld [vmem:[%s509 + $0x50] sm:$0xff]
    %v521 = vld [vmem:[%s509 + $0x58] sm:$0xff]
    %v522 = vld [vmem:[%s509 + $0x60] sm:$0xff]
    %v523 = vld [vmem:[%s509 + $0x68] sm:$0xff]
    %v524 = vld [vmem:[%s509 + $0x70] sm:$0xff]
    %v525 = vld [vmem:[%s509 + $0x78] sm:$0xff]
    %v526 = vld [vmem:[%s509 + $0x80] sm:$0xff]
    %v527 = vld [vmem:[%s509 + $0x88] sm:$0xff]
    %v528 = vld [vmem:[%s509 + $0x90] sm:$0xff]
    %v529 = vld [vmem:[%s509 + $0x98] sm:$0xff]
    %v530 = vld [vmem:[%s509 + $0xa0] sm:$0xff]
    %v531 = vld [vmem:[%s509 + $0xa8] sm:$0xff]
    %v532 = vld [vmem:[%s509 + $0xb0] sm:$0xff]
    %v533 = vld [vmem:[%s509 + $0xb8] sm:$0xff]
    %v534 = vld [vmem:[%s509 + $0xc0] sm:$0xff]
    %v535 = vld [vmem:[%s509 + $0xc8] sm:$0xff]
    %v536 = vld [vmem:[%s509 + $0xd0] sm:$0xff]
    %v537 = vld [vmem:[%s509 + $0xd8] sm:$0xff]
    %v538 = vld [vmem:[%s509 + $0xe0] sm:$0xff]
    %v539 = vld [vmem:[%s509 + $0xe8] sm:$0xff]
    %v540 = vld [vmem:[%s509 + $0xf0] sm:$0xff]
    %v541 = vld [vmem:[%s509 + $0xf8] sm:$0xff]
    %v542 = vld [vmem:[%s509 + $0x100] sm:$0xff]
    %v543 = vld [vmem:[%s509 + $0x108] sm:$0xff]
    %v544 = vld [vmem:[%s509 + $0x110] sm:$0xff]
    %v545 = vld [vmem:[%s509 + $0x118] sm:$0xff]
    %v546 = vld [vmem:[%s509 + $0x120] sm:$0xff]
    %v547 = vld [vmem:[%s509 + $0x128] sm:$0xff]
    %v548 = vld [vmem:[%s509 + $0x130] sm:$0xff]
    %v549 = vld [vmem:[%s509 + $0x138] sm:$0xff]
    %v550 = vld [vmem:[%s509 + $0x140] sm:$0xff]
    %v551 = vld [vmem:[%s509 + $0x148] sm:$0xff]
    %v552 = vld [vmem:[%s509 + $0x150] sm:$0xff]
    %v553 = vld [vmem:[%s509 + $0x158] sm:$0xff]
    %v554 = vld [vmem:[%s509 + $0x160] sm:$0xff]
    %v555 = vld [vmem:[%s509 + $0x168] sm:$0xff]
    %v556 = vld [vmem:[%s509 + $0x170] sm:$0xff]
    %v557 = vld [vmem:[%s509 + $0x178] sm:$0xff]
    %v558 = vld [vmem:[%s509 + $0x180] sm:$0xff]
    %v559 = vld [vmem:[%s509 + $0x188] sm:$0xff]
    %v560 = vld [vmem:[%s509 + $0x190] sm:$0xff]
    %v561 = vld [vmem:[%s509 + $0x198] sm:$0xff]
    %v562 = vld [vmem:[%s509 + $0x1a0] sm:$0xff]
    %v563 = vld [vmem:[%s509 + $0x1a8] sm:$0xff]
    %v564 = vld [vmem:[%s509 + $0x1b0] sm:$0xff]
    %v565 = vld [vmem:[%s509 + $0x1b8] sm:$0xff]
    %v566 = vld [vmem:[%s509 + $0x1c0] sm:$0xff]
    %v567 = vld [vmem:[%s509 + $0x1c8] sm:$0xff]
    %v568 = vld [vmem:[%s509 + $0x1d0] sm:$0xff]
    %v569 = vld [vmem:[%s509 + $0x1d8] sm:$0xff]
    %v570 = vld [vmem:[%s509 + $0x1e0] sm:$0xff]
    %v571 = vld [vmem:[%s509 + $0x1e8] sm:$0xff]
    %v572 = vld [vmem:[%s509 + $0x1f0] sm:$0xff]
    %v573 = vld [vmem:[%s509 + $0x1f8] sm:$0xff]
    %v574 = vunpack.c.l.s8.bf16 %v510
    %v575 = vunpack.c.l.s8.bf16 %v511
    %v576 = vunpack.c.l.s8.bf16 %v512
    %v577 = vunpack.c.l.s8.bf16 %v513
    %v578 = vunpack.c.h.s8.bf16 %v510
    %v579 = vunpack.c.h.s8.bf16 %v511
    %v580 = vunpack.c.h.s8.bf16 %v512
    %v581 = vunpack.c.h.s8.bf16 %v513
    %v582 = vunpack.c.l.s8.bf16 %v514
    %v583 = vunpack.c.l.s8.bf16 %v515
    %v584 = vunpack.c.l.s8.bf16 %v516
    %v585 = vunpack.c.l.s8.bf16 %v517
    %v586 = vunpack.c.h.s8.bf16 %v514
    %v587 = vunpack.c.h.s8.bf16 %v515
    %v588 = vunpack.c.h.s8.bf16 %v516
    %v589 = vunpack.c.h.s8.bf16 %v517
    %v590 = vunpack.c.l.s8.bf16 %v518
    %v591 = vunpack.c.l.s8.bf16 %v519
    %v592 = vunpack.c.l.s8.bf16 %v520
    %v593 = vunpack.c.l.s8.bf16 %v521
    %v594 = vunpack.c.h.s8.bf16 %v518
    %v595 = vunpack.c.h.s8.bf16 %v519
    %v596 = vunpack.c.h.s8.bf16 %v520
    %v597 = vunpack.c.h.s8.bf16 %v521
    %v598 = vunpack.c.l.s8.bf16 %v522
    %v599 = vunpack.c.l.s8.bf16 %v523
    %v600 = vunpack.c.l.s8.bf16 %v524
    %v601 = vunpack.c.l.s8.bf16 %v525
    %v602 = vunpack.c.h.s8.bf16 %v522
    %v603 = vunpack.c.h.s8.bf16 %v523
    %v604 = vunpack.c.h.s8.bf16 %v524
    %v605 = vunpack.c.h.s8.bf16 %v525
    %v606 = vunpack.c.l.s8.bf16 %v526
    %v607 = vunpack.c.l.s8.bf16 %v527
    %v608 = vunpack.c.l.s8.bf16 %v528
    %v609 = vunpack.c.l.s8.bf16 %v529
    %v610 = vunpack.c.h.s8.bf16 %v526
    %v611 = vunpack.c.h.s8.bf16 %v527
    %v612 = vunpack.c.h.s8.bf16 %v528
    %v613 = vunpack.c.h.s8.bf16 %v529
    %v614 = vunpack.c.l.s8.bf16 %v530
    %v615 = vunpack.c.l.s8.bf16 %v531
    %v616 = vunpack.c.l.s8.bf16 %v532
    %v617 = vunpack.c.l.s8.bf16 %v533
    %v618 = vunpack.c.h.s8.bf16 %v530
    %v619 = vunpack.c.h.s8.bf16 %v531
    %v620 = vunpack.c.h.s8.bf16 %v532
    %v621 = vunpack.c.h.s8.bf16 %v533
    %v622 = vunpack.c.l.s8.bf16 %v534
    %v623 = vunpack.c.l.s8.bf16 %v535
    %v624 = vunpack.c.l.s8.bf16 %v536
    %v625 = vunpack.c.l.s8.bf16 %v537
    %v626 = vunpack.c.h.s8.bf16 %v534
    %v627 = vunpack.c.h.s8.bf16 %v535
    %v628 = vunpack.c.h.s8.bf16 %v536
    %v629 = vunpack.c.h.s8.bf16 %v537
    %v630 = vunpack.c.l.s8.bf16 %v538
    %v631 = vunpack.c.l.s8.bf16 %v539
    %v632 = vunpack.c.l.s8.bf16 %v540
    %v633 = vunpack.c.l.s8.bf16 %v541
    %v634 = vunpack.c.h.s8.bf16 %v538
    %v635 = vunpack.c.h.s8.bf16 %v539
    %v636 = vunpack.c.h.s8.bf16 %v540
    %v637 = vunpack.c.h.s8.bf16 %v541
    %v638 = vunpack.c.l.s8.bf16 %v542
    %v639 = vunpack.c.l.s8.bf16 %v543
    %v640 = vunpack.c.l.s8.bf16 %v544
    %v641 = vunpack.c.l.s8.bf16 %v545
    %v642 = vunpack.c.h.s8.bf16 %v542
    %v643 = vunpack.c.h.s8.bf16 %v543
    %v644 = vunpack.c.h.s8.bf16 %v544
    %v645 = vunpack.c.h.s8.bf16 %v545
    %v646 = vunpack.c.l.s8.bf16 %v546
    %v647 = vunpack.c.l.s8.bf16 %v547
    %v648 = vunpack.c.l.s8.bf16 %v548
    %v649 = vunpack.c.l.s8.bf16 %v549
    %v650 = vunpack.c.h.s8.bf16 %v546
    %v651 = vunpack.c.h.s8.bf16 %v547
    %v652 = vunpack.c.h.s8.bf16 %v548
    %v653 = vunpack.c.h.s8.bf16 %v549
    %v654 = vunpack.c.l.s8.bf16 %v550
    %v655 = vunpack.c.l.s8.bf16 %v551
    %v656 = vunpack.c.l.s8.bf16 %v552
    %v657 = vunpack.c.l.s8.bf16 %v553
    %v658 = vunpack.c.h.s8.bf16 %v550
    %v659 = vunpack.c.h.s8.bf16 %v551
    %v660 = vunpack.c.h.s8.bf16 %v552
    %v661 = vunpack.c.h.s8.bf16 %v553
    %v662 = vunpack.c.l.s8.bf16 %v554
    %v663 = vunpack.c.l.s8.bf16 %v555
    %v664 = vunpack.c.l.s8.bf16 %v556
    %v665 = vunpack.c.l.s8.bf16 %v557
    %v666 = vunpack.c.h.s8.bf16 %v554
    %v667 = vunpack.c.h.s8.bf16 %v555
    %v668 = vunpack.c.h.s8.bf16 %v556
    %v669 = vunpack.c.h.s8.bf16 %v557
    %v670 = vunpack.c.l.s8.bf16 %v558
    %v671 = vunpack.c.l.s8.bf16 %v559
    %v672 = vunpack.c.l.s8.bf16 %v560
    %v673 = vunpack.c.l.s8.bf16 %v561
    %v674 = vunpack.c.h.s8.bf16 %v558
    %v675 = vunpack.c.h.s8.bf16 %v559
    %v676 = vunpack.c.h.s8.bf16 %v560
    %v677 = vunpack.c.h.s8.bf16 %v561
    %v678 = vunpack.c.l.s8.bf16 %v562
    %v679 = vunpack.c.l.s8.bf16 %v563
    %v680 = vunpack.c.l.s8.bf16 %v564
    %v681 = vunpack.c.l.s8.bf16 %v565
    %v682 = vunpack.c.h.s8.bf16 %v562
    %v683 = vunpack.c.h.s8.bf16 %v563
    %v684 = vunpack.c.h.s8.bf16 %v564
    %v685 = vunpack.c.h.s8.bf16 %v565
    %v686 = vunpack.c.l.s8.bf16 %v566
    %v687 = vunpack.c.l.s8.bf16 %v567
    %v688 = vunpack.c.l.s8.bf16 %v568
    %v689 = vunpack.c.l.s8.bf16 %v569
    %v690 = vunpack.c.h.s8.bf16 %v566
    %v691 = vunpack.c.h.s8.bf16 %v567
    %v692 = vunpack.c.h.s8.bf16 %v568
    %v693 = vunpack.c.h.s8.bf16 %v569
    %v694 = vunpack.c.l.s8.bf16 %v570
    %v695 = vunpack.c.l.s8.bf16 %v571
    %v696 = vunpack.c.l.s8.bf16 %v572
    %v697 = vunpack.c.l.s8.bf16 %v573
    %v698 = vunpack.c.h.s8.bf16 %v570
    %v699 = vunpack.c.h.s8.bf16 %v571
    %v700 = vunpack.c.h.s8.bf16 %v572
    %v701 = vunpack.c.h.s8.bf16 %v573
    %v702 = vpack.c.bf16 %v505, %v505
    %v703 = vpack.c.bf16 %v506, %v506
    %v704 = vpack.c.bf16 %v507, %v507
    %v705 = vpack.c.bf16 %v508, %v508
    %706 = vmatprep.subr.bf16.mxu0 %v603
    %707 = vmatpush1.bf16.msra.mxu0 %v602
    %708 = vmatprep.subr.bf16.mxu0 %v599
    %709 = vmatpush1.bf16.msra.mxu0 %v598
    %710 = vmatprep.subr.bf16.mxu0 %v595
    %711 = vmatpush1.bf16.msra.mxu0 %v594
    %712 = vmatprep.subr.bf16.mxu0 %v591
    %713 = vmatpush1.bf16.msra.mxu0 %v590
    %714 = vmatprep.subr.bf16.mxu0 %v587
    %715 = vmatpush1.bf16.msra.mxu0 %v586
    %716 = vmatprep.subr.bf16.mxu0 %v583
    %717 = vmatpush1.bf16.msra.mxu0 %v582
    %718 = vmatprep.subr.bf16.mxu0 %v579
    %719 = vmatpush1.bf16.msra.mxu0 %v578
    %720 = vmatprep.subr.bf16.mxu0 %v575
    %721 = vmatpush1.bf16.msra.mxu0 %v574
    %722 = vmatprep.subr.bf16.mxu0 %v635
    %723 = vmatpush2.bf16.msra.mxu0 %v634
    %724 = vmatprep.subr.bf16.mxu0 %v631
    %725 = vmatpush2.bf16.msra.mxu0 %v630
    %726 = vmatprep.subr.bf16.mxu0 %v627
    %727 = vmatpush2.bf16.msra.mxu0 %v626
    %728 = vmatprep.subr.bf16.mxu0 %v623
    %729 = vmatpush2.bf16.msra.mxu0 %v622
    %730 = vmatprep.subr.bf16.mxu0 %v619
    %731 = vmatpush2.bf16.msra.mxu0 %v618
    %732 = vmatprep.subr.bf16.mxu0 %v615
    %733 = vmatpush2.bf16.msra.mxu0 %v614
    %734 = vmatprep.subr.bf16.mxu0 %v611
    %735 = vmatpush2.bf16.msra.mxu0 %v610
    %736 = vmatprep.subr.bf16.mxu0 %v607
    %737 = vmatpush2.bf16.msra.mxu0 %v606
    %738 = vmatprep.mubr.bf16.mxu0 %v703
    %739 = vmatmul.mubr.bf16.gmra.mxu0 %v702
    %v740 = vpop.f32.mrf.mxu0
    %v741 = vadd.f32 0.0, %v740
    %v742 = vpop.f32.mrf.mxu0
    %v743 = vadd.f32 0.0, %v742
    %v744 = vpop.f32.mrf.mxu0
    %v745 = vpop.f32.mrf.mxu0
    %746 = vdwg.mxu0
    %747 = vmatprep.subr.bf16.mxu0 %v667
    %748 = vmatpush1.bf16.msra.mxu0 %v666
    %749 = vmatprep.subr.bf16.mxu0 %v663
    %750 = vmatpush1.bf16.msra.mxu0 %v662
    %751 = vmatprep.subr.bf16.mxu0 %v659
    %752 = vmatpush1.bf16.msra.mxu0 %v658
    %753 = vmatprep.subr.bf16.mxu0 %v655
    %754 = vmatpush1.bf16.msra.mxu0 %v654
    %755 = vmatprep.subr.bf16.mxu0 %v651
    %756 = vmatpush1.bf16.msra.mxu0 %v650
    %757 = vmatprep.subr.bf16.mxu0 %v647
    %758 = vmatpush1.bf16.msra.mxu0 %v646
    %759 = vmatprep.subr.bf16.mxu0 %v643
    %760 = vmatpush1.bf16.msra.mxu0 %v642
    %761 = vmatprep.subr.bf16.mxu0 %v639
    %762 = vmatpush1.bf16.msra.mxu0 %v638
    %763 = vmatprep.subr.bf16.mxu0 %v699
    %764 = vmatpush2.bf16.msra.mxu0 %v698
    %765 = vmatprep.subr.bf16.mxu0 %v695
    %766 = vmatpush2.bf16.msra.mxu0 %v694
    %767 = vmatprep.subr.bf16.mxu0 %v691
    %768 = vmatpush2.bf16.msra.mxu0 %v690
    %769 = vmatprep.subr.bf16.mxu0 %v687
    %770 = vmatpush2.bf16.msra.mxu0 %v686
    %771 = vmatprep.subr.bf16.mxu0 %v683
    %772 = vmatpush2.bf16.msra.mxu0 %v682
    %773 = vmatprep.subr.bf16.mxu0 %v679
    %774 = vmatpush2.bf16.msra.mxu0 %v678
    %775 = vmatprep.subr.bf16.mxu0 %v675
    %776 = vmatpush2.bf16.msra.mxu0 %v674
    %777 = vmatprep.subr.bf16.mxu0 %v671
    %778 = vmatpush2.bf16.msra.mxu0 %v670
    %779 = vmatprep.mubr.bf16.mxu0 %v705
    %780 = vmatmul.mubr.bf16.gmra.mxu0 %v704
    %v781 = vpop.f32.mrf.mxu0
    %v782 = vadd.f32 %v741, %v781
    %v783 = vpop.f32.mrf.mxu0
    %v784 = vadd.f32 %v743, %v783
    %v785 = vpop.f32.mrf.mxu0
    %v786 = vpop.f32.mrf.mxu0
    %787 = vdwg.mxu0
    %788 = vmatprep.subr.bf16.mxu0 %v605
    %789 = vmatpush1.bf16.msra.mxu0 %v604
    %790 = vmatprep.subr.bf16.mxu0 %v601
    %791 = vmatpush1.bf16.msra.mxu0 %v600
    %792 = vmatprep.subr.bf16.mxu0 %v597
    %793 = vmatpush1.bf16.msra.mxu0 %v596
    %794 = vmatprep.subr.bf16.mxu0 %v593
    %795 = vmatpush1.bf16.msra.mxu0 %v592
    %796 = vmatprep.subr.bf16.mxu0 %v589
    %797 = vmatpush1.bf16.msra.mxu0 %v588
    %798 = vmatprep.subr.bf16.mxu0 %v585
    %799 = vmatpush1.bf16.msra.mxu0 %v584
    %800 = vmatprep.subr.bf16.mxu0 %v581
    %801 = vmatpush1.bf16.msra.mxu0 %v580
    %802 = vmatprep.subr.bf16.mxu0 %v577
    %803 = vmatpush1.bf16.msra.mxu0 %v576
    %804 = vmatprep.subr.bf16.mxu0 %v637
    %805 = vmatpush2.bf16.msra.mxu0 %v636
    %806 = vmatprep.subr.bf16.mxu0 %v633
    %807 = vmatpush2.bf16.msra.mxu0 %v632
    %808 = vmatprep.subr.bf16.mxu0 %v629
    %809 = vmatpush2.bf16.msra.mxu0 %v628
    %810 = vmatprep.subr.bf16.mxu0 %v625
    %811 = vmatpush2.bf16.msra.mxu0 %v624
    %812 = vmatprep.subr.bf16.mxu0 %v621
    %813 = vmatpush2.bf16.msra.mxu0 %v620
    %814 = vmatprep.subr.bf16.mxu0 %v617
    %815 = vmatpush2.bf16.msra.mxu0 %v616
    %816 = vmatprep.subr.bf16.mxu0 %v613
    %817 = vmatpush2.bf16.msra.mxu0 %v612
    %818 = vmatprep.subr.bf16.mxu0 %v609
    %819 = vmatpush2.bf16.msra.mxu0 %v608
    %820 = vmatprep.mubr.bf16.mxu0 %v703
    %821 = vmatmul.mubr.bf16.gmra.mxu0 %v702
    %v822 = vpop.f32.mrf.mxu0
    %v823 = vadd.f32 0.0, %v822
    %v824 = vpop.f32.mrf.mxu0
    %v825 = vadd.f32 0.0, %v824
    %v826 = vpop.f32.mrf.mxu0
    %v827 = vpop.f32.mrf.mxu0
    %828 = vdwg.mxu0
    %829 = vmatprep.subr.bf16.mxu0 %v669
    %830 = vmatpush1.bf16.msra.mxu0 %v668
    %831 = vmatprep.subr.bf16.mxu0 %v665
    %832 = vmatpush1.bf16.msra.mxu0 %v664
    %833 = vmatprep.subr.bf16.mxu0 %v661
    %834 = vmatpush1.bf16.msra.mxu0 %v660
    %835 = vmatprep.subr.bf16.mxu0 %v657
    %836 = vmatpush1.bf16.msra.mxu0 %v656
    %837 = vmatprep.subr.bf16.mxu0 %v653
    %838 = vmatpush1.bf16.msra.mxu0 %v652
    %839 = vmatprep.subr.bf16.mxu0 %v649
    %840 = vmatpush1.bf16.msra.mxu0 %v648
    %841 = vmatprep.subr.bf16.mxu0 %v645
    %842 = vmatpush1.bf16.msra.mxu0 %v644
    %843 = vmatprep.subr.bf16.mxu0 %v641
    %844 = vmatpush1.bf16.msra.mxu0 %v640
    %845 = vmatprep.subr.bf16.mxu0 %v701
    %846 = vmatpush2.bf16.msra.mxu0 %v700
    %847 = vmatprep.subr.bf16.mxu0 %v697
    %848 = vmatpush2.bf16.msra.mxu0 %v696
    %849 = vmatprep.subr.bf16.mxu0 %v693
    %850 = vmatpush2.bf16.msra.mxu0 %v692
    %851 = vmatprep.subr.bf16.mxu0 %v689
    %852 = vmatpush2.bf16.msra.mxu0 %v688
    %853 = vmatprep.subr.bf16.mxu0 %v685
    %854 = vmatpush2.bf16.msra.mxu0 %v684
    %855 = vmatprep.subr.bf16.mxu0 %v681
    %856 = vmatpush2.bf16.msra.mxu0 %v680
    %857 = vmatprep.subr.bf16.mxu0 %v677
    %858 = vmatpush2.bf16.msra.mxu0 %v676
    %859 = vmatprep.subr.bf16.mxu0 %v673
    %860 = vmatpush2.bf16.msra.mxu0 %v672
    %861 = vmatprep.mubr.bf16.mxu0 %v705
    %862 = vmatmul.mubr.bf16.gmra.mxu0 %v704
    %v863 = vpop.f32.mrf.mxu0
    %v864 = vadd.f32 %v823, %v863
    %v865 = vpop.f32.mrf.mxu0
    %v866 = vadd.f32 %v825, %v865
    %v867 = vpop.f32.mrf.mxu0
    %v868 = vpop.f32.mrf.mxu0
    %869 = vdwg.mxu0
    %s870 = scalar_lea.vmem [#allocation7], 4
    %v871 = vld [vmem:[%s870] sm:$0xf]
    %v873 = vlaneseq
    %v874 = vshrl.u32 %v873, 7
    %v875 = vsub.s32 0, %v874
    %v876 = vrot.slane %v871, %v875
    %v877 = vlaneseq
    %v878 = vshrl.u32 %v877, 7
    %v879 = vsub.s32 1, %v878
    %v880 = vrot.slane %v871, %v879
    %v881 = vlaneseq
    %v882 = vshrl.u32 %v881, 7
    %v883 = vsub.s32 2, %v882
    %v884 = vrot.slane %v871, %v883
    %v885 = vlaneseq
    %v886 = vshrl.u32 %v885, 7
    %v887 = vsub.s32 3, %v886
    %v888 = vrot.slane %v871, %v887
    %v893 = vmul.f32 %v782, %v876
    %v894 = vmul.f32 %v784, %v880
    %v895 = vmul.f32 %v864, %v884
    %v896 = vmul.f32 %v866, %v888
    %s897 = scalar_lea.vmem [#allocation8], 4
    %v898 = vld [vmem:[%s897] sm:$0xf]
    %v900 = vlaneseq
    %v901 = vshrl.u32 %v900, 7
    %v902 = vsub.s32 0, %v901
    %v903 = vrot.slane %v898, %v902
    %v904 = vlaneseq
    %v905 = vshrl.u32 %v904, 7
    %v906 = vsub.s32 1, %v905
    %v907 = vrot.slane %v898, %v906
    %v908 = vlaneseq
    %v909 = vshrl.u32 %v908, 7
    %v910 = vsub.s32 2, %v909
    %v911 = vrot.slane %v898, %v910
    %v912 = vlaneseq
    %v913 = vshrl.u32 %v912, 7
    %v914 = vsub.s32 3, %v913
    %v915 = vrot.slane %v898, %v914
    %v920 = vadd.f32 %v893, %v903
    %v921 = vadd.f32 %v894, %v907
    %v922 = vadd.f32 %v895, %v911
    %v923 = vadd.f32 %v896, %v915
    %v924 = vmax.f32 %v920, 0.0
    %v925 = vmax.f32 %v921, 0.0
    %v926 = vmax.f32 %v922, 0.0
    %v927 = vmax.f32 %v923, 0.0
    %s928 = scalar_lea.vmem [#allocation5], 1024
    %v929 = vld [vmem:[%s928] sm:$0xff]
    %v930 = vld [vmem:[%s928 + $0x8] sm:$0xff]
    %v931 = vld [vmem:[%s928 + $0x10] sm:$0xff]
    %v932 = vld [vmem:[%s928 + $0x18] sm:$0xff]
    %v933 = vld [vmem:[%s928 + $0x20] sm:$0xff]
    %v934 = vld [vmem:[%s928 + $0x28] sm:$0xff]
    %v935 = vld [vmem:[%s928 + $0x30] sm:$0xff]
    %v936 = vld [vmem:[%s928 + $0x38] sm:$0xff]
    %v937 = vld [vmem:[%s928 + $0x40] sm:$0xff]
    %v938 = vld [vmem:[%s928 + $0x48] sm:$0xff]
    %v939 = vld [vmem:[%s928 + $0x50] sm:$0xff]
    %v940 = vld [vmem:[%s928 + $0x58] sm:$0xff]
    %v941 = vld [vmem:[%s928 + $0x60] sm:$0xff]
    %v942 = vld [vmem:[%s928 + $0x68] sm:$0xff]
    %v943 = vld [vmem:[%s928 + $0x70] sm:$0xff]
    %v944 = vld [vmem:[%s928 + $0x78] sm:$0xff]
    %v945 = vld [vmem:[%s928 + $0x80] sm:$0xff]
    %v946 = vld [vmem:[%s928 + $0x88] sm:$0xff]
    %v947 = vld [vmem:[%s928 + $0x90] sm:$0xff]
    %v948 = vld [vmem:[%s928 + $0x98] sm:$0xff]
    %v949 = vld [vmem:[%s928 + $0xa0] sm:$0xff]
    %v950 = vld [vmem:[%s928 + $0xa8] sm:$0xff]
    %v951 = vld [vmem:[%s928 + $0xb0] sm:$0xff]
    %v952 = vld [vmem:[%s928 + $0xb8] sm:$0xff]
    %v953 = vld [vmem:[%s928 + $0xc0] sm:$0xff]
    %v954 = vld [vmem:[%s928 + $0xc8] sm:$0xff]
    %v955 = vld [vmem:[%s928 + $0xd0] sm:$0xff]
    %v956 = vld [vmem:[%s928 + $0xd8] sm:$0xff]
    %v957 = vld [vmem:[%s928 + $0xe0] sm:$0xff]
    %v958 = vld [vmem:[%s928 + $0xe8] sm:$0xff]
    %v959 = vld [vmem:[%s928 + $0xf0] sm:$0xff]
    %v960 = vld [vmem:[%s928 + $0xf8] sm:$0xff]
    %v961 = vld [vmem:[%s928 + $0x100] sm:$0xff]
    %v962 = vld [vmem:[%s928 + $0x108] sm:$0xff]
    %v963 = vld [vmem:[%s928 + $0x110] sm:$0xff]
    %v964 = vld [vmem:[%s928 + $0x118] sm:$0xff]
    %v965 = vld [vmem:[%s928 + $0x120] sm:$0xff]
    %v966 = vld [vmem:[%s928 + $0x128] sm:$0xff]
    %v967 = vld [vmem:[%s928 + $0x130] sm:$0xff]
    %v968 = vld [vmem:[%s928 + $0x138] sm:$0xff]
    %v969 = vld [vmem:[%s928 + $0x140] sm:$0xff]
    %v970 = vld [vmem:[%s928 + $0x148] sm:$0xff]
    %v971 = vld [vmem:[%s928 + $0x150] sm:$0xff]
    %v972 = vld [vmem:[%s928 + $0x158] sm:$0xff]
    %v973 = vld [vmem:[%s928 + $0x160] sm:$0xff]
    %v974 = vld [vmem:[%s928 + $0x168] sm:$0xff]
    %v975 = vld [vmem:[%s928 + $0x170] sm:$0xff]
    %v976 = vld [vmem:[%s928 + $0x178] sm:$0xff]
    %v977 = vld [vmem:[%s928 + $0x180] sm:$0xff]
    %v978 = vld [vmem:[%s928 + $0x188] sm:$0xff]
    %v979 = vld [vmem:[%s928 + $0x190] sm:$0xff]
    %v980 = vld [vmem:[%s928 + $0x198] sm:$0xff]
    %v981 = vld [vmem:[%s928 + $0x1a0] sm:$0xff]
    %v982 = vld [vmem:[%s928 + $0x1a8] sm:$0xff]
    %v983 = vld [vmem:[%s928 + $0x1b0] sm:$0xff]
    %v984 = vld [vmem:[%s928 + $0x1b8] sm:$0xff]
    %v985 = vld [vmem:[%s928 + $0x1c0] sm:$0xff]
    %v986 = vld [vmem:[%s928 + $0x1c8] sm:$0xff]
    %v987 = vld [vmem:[%s928 + $0x1d0] sm:$0xff]
    %v988 = vld [vmem:[%s928 + $0x1d8] sm:$0xff]
    %v989 = vld [vmem:[%s928 + $0x1e0] sm:$0xff]
    %v990 = vld [vmem:[%s928 + $0x1e8] sm:$0xff]
    %v991 = vld [vmem:[%s928 + $0x1f0] sm:$0xff]
    %v992 = vld [vmem:[%s928 + $0x1f8] sm:$0xff]
    %v993 = vunpack.c.l.s8.bf16 %v929
    %v994 = vunpack.c.l.s8.bf16 %v930
    %v995 = vunpack.c.l.s8.bf16 %v931
    %v996 = vunpack.c.l.s8.bf16 %v932
    %v997 = vunpack.c.h.s8.bf16 %v929
    %v998 = vunpack.c.h.s8.bf16 %v930
    %v999 = vunpack.c.h.s8.bf16 %v931
    %v1000 = vunpack.c.h.s8.bf16 %v932
    %v1001 = vunpack.c.l.s8.bf16 %v933
    %v1002 = vunpack.c.l.s8.bf16 %v934
    %v1003 = vunpack.c.l.s8.bf16 %v935
    %v1004 = vunpack.c.l.s8.bf16 %v936
    %v1005 = vunpack.c.h.s8.bf16 %v933
    %v1006 = vunpack.c.h.s8.bf16 %v934
    %v1007 = vunpack.c.h.s8.bf16 %v935
    %v1008 = vunpack.c.h.s8.bf16 %v936
    %v1009 = vunpack.c.l.s8.bf16 %v937
    %v1010 = vunpack.c.l.s8.bf16 %v938
    %v1011 = vunpack.c.l.s8.bf16 %v939
    %v1012 = vunpack.c.l.s8.bf16 %v940
    %v1013 = vunpack.c.h.s8.bf16 %v937
    %v1014 = vunpack.c.h.s8.bf16 %v938
    %v1015 = vunpack.c.h.s8.bf16 %v939
    %v1016 = vunpack.c.h.s8.bf16 %v940
    %v1017 = vunpack.c.l.s8.bf16 %v941
    %v1018 = vunpack.c.l.s8.bf16 %v942
    %v1019 = vunpack.c.l.s8.bf16 %v943
    %v1020 = vunpack.c.l.s8.bf16 %v944
    %v1021 = vunpack.c.h.s8.bf16 %v941
    %v1022 = vunpack.c.h.s8.bf16 %v942
    %v1023 = vunpack.c.h.s8.bf16 %v943
    %v1024 = vunpack.c.h.s8.bf16 %v944
    %v1025 = vunpack.c.l.s8.bf16 %v945
    %v1026 = vunpack.c.l.s8.bf16 %v946
    %v1027 = vunpack.c.l.s8.bf16 %v947
    %v1028 = vunpack.c.l.s8.bf16 %v948
    %v1029 = vunpack.c.h.s8.bf16 %v945
    %v1030 = vunpack.c.h.s8.bf16 %v946
    %v1031 = vunpack.c.h.s8.bf16 %v947
    %v1032 = vunpack.c.h.s8.bf16 %v948
    %v1033 = vunpack.c.l.s8.bf16 %v949
    %v1034 = vunpack.c.l.s8.bf16 %v950
    %v1035 = vunpack.c.l.s8.bf16 %v951
    %v1036 = vunpack.c.l.s8.bf16 %v952
    %v1037 = vunpack.c.h.s8.bf16 %v949
    %v1038 = vunpack.c.h.s8.bf16 %v950
    %v1039 = vunpack.c.h.s8.bf16 %v951
    %v1040 = vunpack.c.h.s8.bf16 %v952
    %v1041 = vunpack.c.l.s8.bf16 %v953
    %v1042 = vunpack.c.l.s8.bf16 %v954
    %v1043 = vunpack.c.l.s8.bf16 %v955
    %v1044 = vunpack.c.l.s8.bf16 %v956
    %v1045 = vunpack.c.h.s8.bf16 %v953
    %v1046 = vunpack.c.h.s8.bf16 %v954
    %v1047 = vunpack.c.h.s8.bf16 %v955
    %v1048 = vunpack.c.h.s8.bf16 %v956
    %v1049 = vunpack.c.l.s8.bf16 %v957
    %v1050 = vunpack.c.l.s8.bf16 %v958
    %v1051 = vunpack.c.l.s8.bf16 %v959
    %v1052 = vunpack.c.l.s8.bf16 %v960
    %v1053 = vunpack.c.h.s8.bf16 %v957
    %v1054 = vunpack.c.h.s8.bf16 %v958
    %v1055 = vunpack.c.h.s8.bf16 %v959
    %v1056 = vunpack.c.h.s8.bf16 %v960
    %v1057 = vunpack.c.l.s8.bf16 %v961
    %v1058 = vunpack.c.l.s8.bf16 %v962
    %v1059 = vunpack.c.l.s8.bf16 %v963
    %v1060 = vunpack.c.l.s8.bf16 %v964
    %v1061 = vunpack.c.h.s8.bf16 %v961
    %v1062 = vunpack.c.h.s8.bf16 %v962
    %v1063 = vunpack.c.h.s8.bf16 %v963
    %v1064 = vunpack.c.h.s8.bf16 %v964
    %v1065 = vunpack.c.l.s8.bf16 %v965
    %v1066 = vunpack.c.l.s8.bf16 %v966
    %v1067 = vunpack.c.l.s8.bf16 %v967
    %v1068 = vunpack.c.l.s8.bf16 %v968
    %v1069 = vunpack.c.h.s8.bf16 %v965
    %v1070 = vunpack.c.h.s8.bf16 %v966
    %v1071 = vunpack.c.h.s8.bf16 %v967
    %v1072 = vunpack.c.h.s8.bf16 %v968
    %v1073 = vunpack.c.l.s8.bf16 %v969
    %v1074 = vunpack.c.l.s8.bf16 %v970
    %v1075 = vunpack.c.l.s8.bf16 %v971
    %v1076 = vunpack.c.l.s8.bf16 %v972
    %v1077 = vunpack.c.h.s8.bf16 %v969
    %v1078 = vunpack.c.h.s8.bf16 %v970
    %v1079 = vunpack.c.h.s8.bf16 %v971
    %v1080 = vunpack.c.h.s8.bf16 %v972
    %v1081 = vunpack.c.l.s8.bf16 %v973
    %v1082 = vunpack.c.l.s8.bf16 %v974
    %v1083 = vunpack.c.l.s8.bf16 %v975
    %v1084 = vunpack.c.l.s8.bf16 %v976
    %v1085 = vunpack.c.h.s8.bf16 %v973
    %v1086 = vunpack.c.h.s8.bf16 %v974
    %v1087 = vunpack.c.h.s8.bf16 %v975
    %v1088 = vunpack.c.h.s8.bf16 %v976
    %v1089 = vunpack.c.l.s8.bf16 %v977
    %v1090 = vunpack.c.l.s8.bf16 %v978
    %v1091 = vunpack.c.l.s8.bf16 %v979
    %v1092 = vunpack.c.l.s8.bf16 %v980
    %v1093 = vunpack.c.h.s8.bf16 %v977
    %v1094 = vunpack.c.h.s8.bf16 %v978
    %v1095 = vunpack.c.h.s8.bf16 %v979
    %v1096 = vunpack.c.h.s8.bf16 %v980
    %v1097 = vunpack.c.l.s8.bf16 %v981
    %v1098 = vunpack.c.l.s8.bf16 %v982
    %v1099 = vunpack.c.l.s8.bf16 %v983
    %v1100 = vunpack.c.l.s8.bf16 %v984
    %v1101 = vunpack.c.h.s8.bf16 %v981
    %v1102 = vunpack.c.h.s8.bf16 %v982
    %v1103 = vunpack.c.h.s8.bf16 %v983
    %v1104 = vunpack.c.h.s8.bf16 %v984
    %v1105 = vunpack.c.l.s8.bf16 %v985
    %v1106 = vunpack.c.l.s8.bf16 %v986
    %v1107 = vunpack.c.l.s8.bf16 %v987
    %v1108 = vunpack.c.l.s8.bf16 %v988
    %v1109 = vunpack.c.h.s8.bf16 %v985
    %v1110 = vunpack.c.h.s8.bf16 %v986
    %v1111 = vunpack.c.h.s8.bf16 %v987
    %v1112 = vunpack.c.h.s8.bf16 %v988
    %v1113 = vunpack.c.l.s8.bf16 %v989
    %v1114 = vunpack.c.l.s8.bf16 %v990
    %v1115 = vunpack.c.l.s8.bf16 %v991
    %v1116 = vunpack.c.l.s8.bf16 %v992
    %v1117 = vunpack.c.h.s8.bf16 %v989
    %v1118 = vunpack.c.h.s8.bf16 %v990
    %v1119 = vunpack.c.h.s8.bf16 %v991
    %v1120 = vunpack.c.h.s8.bf16 %v992
    %v1121 = vpack.c.bf16 %v924, %v924
    %v1122 = vpack.c.bf16 %v925, %v925
    %v1123 = vpack.c.bf16 %v926, %v926
    %v1124 = vpack.c.bf16 %v927, %v927
    %1125 = vmatprep.subr.bf16.mxu0 %v1022
    %1126 = vmatpush1.bf16.msra.mxu0 %v1021
    %1127 = vmatprep.subr.bf16.mxu0 %v1018
    %1128 = vmatpush1.bf16.msra.mxu0 %v1017
    %1129 = vmatprep.subr.bf16.mxu0 %v1014
    %1130 = vmatpush1.bf16.msra.mxu0 %v1013
    %1131 = vmatprep.subr.bf16.mxu0 %v1010
    %1132 = vmatpush1.bf16.msra.mxu0 %v1009
    %1133 = vmatprep.subr.bf16.mxu0 %v1006
    %1134 = vmatpush1.bf16.msra.mxu0 %v1005
    %1135 = vmatprep.subr.bf16.mxu0 %v1002
    %1136 = vmatpush1.bf16.msra.mxu0 %v1001
    %1137 = vmatprep.subr.bf16.mxu0 %v998
    %1138 = vmatpush1.bf16.msra.mxu0 %v997
    %1139 = vmatprep.subr.bf16.mxu0 %v994
    %1140 = vmatpush1.bf16.msra.mxu0 %v993
    %1141 = vmatprep.subr.bf16.mxu0 %v1054
    %1142 = vmatpush2.bf16.msra.mxu0 %v1053
    %1143 = vmatprep.subr.bf16.mxu0 %v1050
    %1144 = vmatpush2.bf16.msra.mxu0 %v1049
    %1145 = vmatprep.subr.bf16.mxu0 %v1046
    %1146 = vmatpush2.bf16.msra.mxu0 %v1045
    %1147 = vmatprep.subr.bf16.mxu0 %v1042
    %1148 = vmatpush2.bf16.msra.mxu0 %v1041
    %1149 = vmatprep.subr.bf16.mxu0 %v1038
    %1150 = vmatpush2.bf16.msra.mxu0 %v1037
    %1151 = vmatprep.subr.bf16.mxu0 %v1034
    %1152 = vmatpush2.bf16.msra.mxu0 %v1033
    %1153 = vmatprep.subr.bf16.mxu0 %v1030
    %1154 = vmatpush2.bf16.msra.mxu0 %v1029
    %1155 = vmatprep.subr.bf16.mxu0 %v1026
    %1156 = vmatpush2.bf16.msra.mxu0 %v1025
    %1157 = vmatprep.mubr.bf16.mxu0 %v1122
    %1158 = vmatmul.mubr.bf16.gmra.mxu0 %v1121
    %v1159 = vpop.f32.mrf.mxu0
    %v1160 = vadd.f32 0.0, %v1159
    %v1161 = vpop.f32.mrf.mxu0
    %v1162 = vadd.f32 0.0, %v1161
    %v1163 = vpop.f32.mrf.mxu0
    %v1164 = vpop.f32.mrf.mxu0
    %1165 = vdwg.mxu0
    %1166 = vmatprep.subr.bf16.mxu0 %v1086
    %1167 = vmatpush1.bf16.msra.mxu0 %v1085
    %1168 = vmatprep.subr.bf16.mxu0 %v1082
    %1169 = vmatpush1.bf16.msra.mxu0 %v1081
    %1170 = vmatprep.subr.bf16.mxu0 %v1078
    %1171 = vmatpush1.bf16.msra.mxu0 %v1077
    %1172 = vmatprep.subr.bf16.mxu0 %v1074
    %1173 = vmatpush1.bf16.msra.mxu0 %v1073
    %1174 = vmatprep.subr.bf16.mxu0 %v1070
    %1175 = vmatpush1.bf16.msra.mxu0 %v1069
    %1176 = vmatprep.subr.bf16.mxu0 %v1066
    %1177 = vmatpush1.bf16.msra.mxu0 %v1065
    %1178 = vmatprep.subr.bf16.mxu0 %v1062
    %1179 = vmatpush1.bf16.msra.mxu0 %v1061
    %1180 = vmatprep.subr.bf16.mxu0 %v1058
    %1181 = vmatpush1.bf16.msra.mxu0 %v1057
    %1182 = vmatprep.subr.bf16.mxu0 %v1118
    %1183 = vmatpush2.bf16.msra.mxu0 %v1117
    %1184 = vmatprep.subr.bf16.mxu0 %v1114
    %1185 = vmatpush2.bf16.msra.mxu0 %v1113
    %1186 = vmatprep.subr.bf16.mxu0 %v1110
    %1187 = vmatpush2.bf16.msra.mxu0 %v1109
    %1188 = vmatprep.subr.bf16.mxu0 %v1106
    %1189 = vmatpush2.bf16.msra.mxu0 %v1105
    %1190 = vmatprep.subr.bf16.mxu0 %v1102
    %1191 = vmatpush2.bf16.msra.mxu0 %v1101
    %1192 = vmatprep.subr.bf16.mxu0 %v1098
    %1193 = vmatpush2.bf16.msra.mxu0 %v1097
    %1194 = vmatprep.subr.bf16.mxu0 %v1094
    %1195 = vmatpush2.bf16.msra.mxu0 %v1093
    %1196 = vmatprep.subr.bf16.mxu0 %v1090
    %1197 = vmatpush2.bf16.msra.mxu0 %v1089
    %1198 = vmatprep.mubr.bf16.mxu0 %v1124
    %1199 = vmatmul.mubr.bf16.gmra.mxu0 %v1123
    %v1200 = vpop.f32.mrf.mxu0
    %v1201 = vadd.f32 %v1160, %v1200
    %v1202 = vpop.f32.mrf.mxu0
    %v1203 = vadd.f32 %v1162, %v1202
    %v1204 = vpop.f32.mrf.mxu0
    %v1205 = vpop.f32.mrf.mxu0
    %1206 = vdwg.mxu0
    %1207 = vmatprep.subr.bf16.mxu0 %v1024
    %1208 = vmatpush1.bf16.msra.mxu0 %v1023
    %1209 = vmatprep.subr.bf16.mxu0 %v1020
    %1210 = vmatpush1.bf16.msra.mxu0 %v1019
    %1211 = vmatprep.subr.bf16.mxu0 %v1016
    %1212 = vmatpush1.bf16.msra.mxu0 %v1015
    %1213 = vmatprep.subr.bf16.mxu0 %v1012
    %1214 = vmatpush1.bf16.msra.mxu0 %v1011
    %1215 = vmatprep.subr.bf16.mxu0 %v1008
    %1216 = vmatpush1.bf16.msra.mxu0 %v1007
    %1217 = vmatprep.subr.bf16.mxu0 %v1004
    %1218 = vmatpush1.bf16.msra.mxu0 %v1003
    %1219 = vmatprep.subr.bf16.mxu0 %v1000
    %1220 = vmatpush1.bf16.msra.mxu0 %v999
    %1221 = vmatprep.subr.bf16.mxu0 %v996
    %1222 = vmatpush1.bf16.msra.mxu0 %v995
    %1223 = vmatprep.subr.bf16.mxu0 %v1056
    %1224 = vmatpush2.bf16.msra.mxu0 %v1055
    %1225 = vmatprep.subr.bf16.mxu0 %v1052
    %1226 = vmatpush2.bf16.msra.mxu0 %v1051
    %1227 = vmatprep.subr.bf16.mxu0 %v1048
    %1228 = vmatpush2.bf16.msra.mxu0 %v1047
    %1229 = vmatprep.subr.bf16.mxu0 %v1044
    %1230 = vmatpush2.bf16.msra.mxu0 %v1043
    %1231 = vmatprep.subr.bf16.mxu0 %v1040
    %1232 = vmatpush2.bf16.msra.mxu0 %v1039
    %1233 = vmatprep.subr.bf16.mxu0 %v1036
    %1234 = vmatpush2.bf16.msra.mxu0 %v1035
    %1235 = vmatprep.subr.bf16.mxu0 %v1032
    %1236 = vmatpush2.bf16.msra.mxu0 %v1031
    %1237 = vmatprep.subr.bf16.mxu0 %v1028
    %1238 = vmatpush2.bf16.msra.mxu0 %v1027
    %1239 = vmatprep.mubr.bf16.mxu0 %v1122
    %1240 = vmatmul.mubr.bf16.gmra.mxu0 %v1121
    %v1241 = vpop.f32.mrf.mxu0
    %v1242 = vadd.f32 0.0, %v1241
    %v1243 = vpop.f32.mrf.mxu0
    %v1244 = vadd.f32 0.0, %v1243
    %v1245 = vpop.f32.mrf.mxu0
    %v1246 = vpop.f32.mrf.mxu0
    %1247 = vdwg.mxu0
    %1248 = vmatprep.subr.bf16.mxu0 %v1088
    %1249 = vmatpush1.bf16.msra.mxu0 %v1087
    %1250 = vmatprep.subr.bf16.mxu0 %v1084
    %1251 = vmatpush1.bf16.msra.mxu0 %v1083
    %1252 = vmatprep.subr.bf16.mxu0 %v1080
    %1253 = vmatpush1.bf16.msra.mxu0 %v1079
    %1254 = vmatprep.subr.bf16.mxu0 %v1076
    %1255 = vmatpush1.bf16.msra.mxu0 %v1075
    %1256 = vmatprep.subr.bf16.mxu0 %v1072
    %1257 = vmatpush1.bf16.msra.mxu0 %v1071
    %1258 = vmatprep.subr.bf16.mxu0 %v1068
    %1259 = vmatpush1.bf16.msra.mxu0 %v1067
    %1260 = vmatprep.subr.bf16.mxu0 %v1064
    %1261 = vmatpush1.bf16.msra.mxu0 %v1063
    %1262 = vmatprep.subr.bf16.mxu0 %v1060
    %1263 = vmatpush1.bf16.msra.mxu0 %v1059
    %1264 = vmatprep.subr.bf16.mxu0 %v1120
    %1265 = vmatpush2.bf16.msra.mxu0 %v1119
    %1266 = vmatprep.subr.bf16.mxu0 %v1116
    %1267 = vmatpush2.bf16.msra.mxu0 %v1115
    %1268 = vmatprep.subr.bf16.mxu0 %v1112
    %1269 = vmatpush2.bf16.msra.mxu0 %v1111
    %1270 = vmatprep.subr.bf16.mxu0 %v1108
    %1271 = vmatpush2.bf16.msra.mxu0 %v1107
    %1272 = vmatprep.subr.bf16.mxu0 %v1104
    %1273 = vmatpush2.bf16.msra.mxu0 %v1103
    %1274 = vmatprep.subr.bf16.mxu0 %v1100
    %1275 = vmatpush2.bf16.msra.mxu0 %v1099
    %1276 = vmatprep.subr.bf16.mxu0 %v1096
    %1277 = vmatpush2.bf16.msra.mxu0 %v1095
    %1278 = vmatprep.subr.bf16.mxu0 %v1092
    %1279 = vmatpush2.bf16.msra.mxu0 %v1091
    %1280 = vmatprep.mubr.bf16.mxu0 %v1124
    %1281 = vmatmul.mubr.bf16.gmra.mxu0 %v1123
    %v1282 = vpop.f32.mrf.mxu0
    %v1283 = vadd.f32 %v1242, %v1282
    %v1284 = vpop.f32.mrf.mxu0
    %v1285 = vadd.f32 %v1244, %v1284
    %v1286 = vpop.f32.mrf.mxu0
    %v1287 = vpop.f32.mrf.mxu0
    %1288 = vdwg.mxu0
    %s1289 = scalar_lea.vmem [#allocation7], 8
    %v1290 = vld [vmem:[%s1289] sm:$0xf]
    %v1292 = vlaneseq
    %v1293 = vshrl.u32 %v1292, 7
    %v1294 = vsub.s32 0, %v1293
    %v1295 = vrot.slane %v1290, %v1294
    %v1296 = vlaneseq
    %v1297 = vshrl.u32 %v1296, 7
    %v1298 = vsub.s32 1, %v1297
    %v1299 = vrot.slane %v1290, %v1298
    %v1300 = vlaneseq
    %v1301 = vshrl.u32 %v1300, 7
    %v1302 = vsub.s32 2, %v1301
    %v1303 = vrot.slane %v1290, %v1302
    %v1304 = vlaneseq
    %v1305 = vshrl.u32 %v1304, 7
    %v1306 = vsub.s32 3, %v1305
    %v1307 = vrot.slane %v1290, %v1306
    %v1312 = vmul.f32 %v1201, %v1295
    %v1313 = vmul.f32 %v1203, %v1299
    %v1314 = vmul.f32 %v1283, %v1303
    %v1315 = vmul.f32 %v1285, %v1307
    %s1316 = scalar_lea.vmem [#allocation8], 8
    %v1317 = vld [vmem:[%s1316] sm:$0xf]
    %v1319 = vlaneseq
    %v1320 = vshrl.u32 %v1319, 7
    %v1321 = vsub.s32 0, %v1320
    %v1322 = vrot.slane %v1317, %v1321
    %v1323 = vlaneseq
    %v1324 = vshrl.u32 %v1323, 7
    %v1325 = vsub.s32 1, %v1324
    %v1326 = vrot.slane %v1317, %v1325
    %v1327 = vlaneseq
    %v1328 = vshrl.u32 %v1327, 7
    %v1329 = vsub.s32 2, %v1328
    %v1330 = vrot.slane %v1317, %v1329
    %v1331 = vlaneseq
    %v1332 = vshrl.u32 %v1331, 7
    %v1333 = vsub.s32 3, %v1332
    %v1334 = vrot.slane %v1317, %v1333
    %v1339 = vadd.f32 %v1312, %v1322
    %v1340 = vadd.f32 %v1313, %v1326
    %v1341 = vadd.f32 %v1314, %v1330
    %v1342 = vadd.f32 %v1315, %v1334
    %v1343 = vmax.f32 %v1339, 0.0
    %v1344 = vmax.f32 %v1340, 0.0
    %v1345 = vmax.f32 %v1341, 0.0
    %v1346 = vmax.f32 %v1342, 0.0
    %s1347 = scalar_lea.vmem [#allocation5], 1536
    %v1348 = vld [vmem:[%s1347] sm:$0xff]
    %v1349 = vld [vmem:[%s1347 + $0x8] sm:$0xff]
    %v1350 = vld [vmem:[%s1347 + $0x10] sm:$0xff]
    %v1351 = vld [vmem:[%s1347 + $0x18] sm:$0xff]
    %v1352 = vld [vmem:[%s1347 + $0x20] sm:$0xff]
    %v1353 = vld [vmem:[%s1347 + $0x28] sm:$0xff]
    %v1354 = vld [vmem:[%s1347 + $0x30] sm:$0xff]
    %v1355 = vld [vmem:[%s1347 + $0x38] sm:$0xff]
    %v1356 = vld [vmem:[%s1347 + $0x40] sm:$0xff]
    %v1357 = vld [vmem:[%s1347 + $0x48] sm:$0xff]
    %v1358 = vld [vmem:[%s1347 + $0x50] sm:$0xff]
    %v1359 = vld [vmem:[%s1347 + $0x58] sm:$0xff]
    %v1360 = vld [vmem:[%s1347 + $0x60] sm:$0xff]
    %v1361 = vld [vmem:[%s1347 + $0x68] sm:$0xff]
    %v1362 = vld [vmem:[%s1347 + $0x70] sm:$0xff]
    %v1363 = vld [vmem:[%s1347 + $0x78] sm:$0xff]
    %v1364 = vld [vmem:[%s1347 + $0x80] sm:$0xff]
    %v1365 = vld [vmem:[%s1347 + $0x88] sm:$0xff]
    %v1366 = vld [vmem:[%s1347 + $0x90] sm:$0xff]
    %v1367 = vld [vmem:[%s1347 + $0x98] sm:$0xff]
    %v1368 = vld [vmem:[%s1347 + $0xa0] sm:$0xff]
    %v1369 = vld [vmem:[%s1347 + $0xa8] sm:$0xff]
    %v1370 = vld [vmem:[%s1347 + $0xb0] sm:$0xff]
    %v1371 = vld [vmem:[%s1347 + $0xb8] sm:$0xff]
    %v1372 = vld [vmem:[%s1347 + $0xc0] sm:$0xff]
    %v1373 = vld [vmem:[%s1347 + $0xc8] sm:$0xff]
    %v1374 = vld [vmem:[%s1347 + $0xd0] sm:$0xff]
    %v1375 = vld [vmem:[%s1347 + $0xd8] sm:$0xff]
    %v1376 = vld [vmem:[%s1347 + $0xe0] sm:$0xff]
    %v1377 = vld [vmem:[%s1347 + $0xe8] sm:$0xff]
    %v1378 = vld [vmem:[%s1347 + $0xf0] sm:$0xff]
    %v1379 = vld [vmem:[%s1347 + $0xf8] sm:$0xff]
    %v1380 = vld [vmem:[%s1347 + $0x100] sm:$0xff]
    %v1381 = vld [vmem:[%s1347 + $0x108] sm:$0xff]
    %v1382 = vld [vmem:[%s1347 + $0x110] sm:$0xff]
    %v1383 = vld [vmem:[%s1347 + $0x118] sm:$0xff]
    %v1384 = vld [vmem:[%s1347 + $0x120] sm:$0xff]
    %v1385 = vld [vmem:[%s1347 + $0x128] sm:$0xff]
    %v1386 = vld [vmem:[%s1347 + $0x130] sm:$0xff]
    %v1387 = vld [vmem:[%s1347 + $0x138] sm:$0xff]
    %v1388 = vld [vmem:[%s1347 + $0x140] sm:$0xff]
    %v1389 = vld [vmem:[%s1347 + $0x148] sm:$0xff]
    %v1390 = vld [vmem:[%s1347 + $0x150] sm:$0xff]
    %v1391 = vld [vmem:[%s1347 + $0x158] sm:$0xff]
    %v1392 = vld [vmem:[%s1347 + $0x160] sm:$0xff]
    %v1393 = vld [vmem:[%s1347 + $0x168] sm:$0xff]
    %v1394 = vld [vmem:[%s1347 + $0x170] sm:$0xff]
    %v1395 = vld [vmem:[%s1347 + $0x178] sm:$0xff]
    %v1396 = vld [vmem:[%s1347 + $0x180] sm:$0xff]
    %v1397 = vld [vmem:[%s1347 + $0x188] sm:$0xff]
    %v1398 = vld [vmem:[%s1347 + $0x190] sm:$0xff]
    %v1399 = vld [vmem:[%s1347 + $0x198] sm:$0xff]
    %v1400 = vld [vmem:[%s1347 + $0x1a0] sm:$0xff]
    %v1401 = vld [vmem:[%s1347 + $0x1a8] sm:$0xff]
    %v1402 = vld [vmem:[%s1347 + $0x1b0] sm:$0xff]
    %v1403 = vld [vmem:[%s1347 + $0x1b8] sm:$0xff]
    %v1404 = vld [vmem:[%s1347 + $0x1c0] sm:$0xff]
    %v1405 = vld [vmem:[%s1347 + $0x1c8] sm:$0xff]
    %v1406 = vld [vmem:[%s1347 + $0x1d0] sm:$0xff]
    %v1407 = vld [vmem:[%s1347 + $0x1d8] sm:$0xff]
    %v1408 = vld [vmem:[%s1347 + $0x1e0] sm:$0xff]
    %v1409 = vld [vmem:[%s1347 + $0x1e8] sm:$0xff]
    %v1410 = vld [vmem:[%s1347 + $0x1f0] sm:$0xff]
    %v1411 = vld [vmem:[%s1347 + $0x1f8] sm:$0xff]
    %v1412 = vunpack.c.l.s8.bf16 %v1348
    %v1413 = vunpack.c.l.s8.bf16 %v1349
    %v1414 = vunpack.c.l.s8.bf16 %v1350
    %v1415 = vunpack.c.l.s8.bf16 %v1351
    %v1416 = vunpack.c.h.s8.bf16 %v1348
    %v1417 = vunpack.c.h.s8.bf16 %v1349
    %v1418 = vunpack.c.h.s8.bf16 %v1350
    %v1419 = vunpack.c.h.s8.bf16 %v1351
    %v1420 = vunpack.c.l.s8.bf16 %v1352
    %v1421 = vunpack.c.l.s8.bf16 %v1353
    %v1422 = vunpack.c.l.s8.bf16 %v1354
    %v1423 = vunpack.c.l.s8.bf16 %v1355
    %v1424 = vunpack.c.h.s8.bf16 %v1352
    %v1425 = vunpack.c.h.s8.bf16 %v1353
    %v1426 = vunpack.c.h.s8.bf16 %v1354
    %v1427 = vunpack.c.h.s8.bf16 %v1355
    %v1428 = vunpack.c.l.s8.bf16 %v1356
    %v1429 = vunpack.c.l.s8.bf16 %v1357
    %v1430 = vunpack.c.l.s8.bf16 %v1358
    %v1431 = vunpack.c.l.s8.bf16 %v1359
    %v1432 = vunpack.c.h.s8.bf16 %v1356
    %v1433 = vunpack.c.h.s8.bf16 %v1357
    %v1434 = vunpack.c.h.s8.bf16 %v1358
    %v1435 = vunpack.c.h.s8.bf16 %v1359
    %v1436 = vunpack.c.l.s8.bf16 %v1360
    %v1437 = vunpack.c.l.s8.bf16 %v1361
    %v1438 = vunpack.c.l.s8.bf16 %v1362
    %v1439 = vunpack.c.l.s8.bf16 %v1363
    %v1440 = vunpack.c.h.s8.bf16 %v1360
    %v1441 = vunpack.c.h.s8.bf16 %v1361
    %v1442 = vunpack.c.h.s8.bf16 %v1362
    %v1443 = vunpack.c.h.s8.bf16 %v1363
    %v1444 = vunpack.c.l.s8.bf16 %v1364
    %v1445 = vunpack.c.l.s8.bf16 %v1365
    %v1446 = vunpack.c.l.s8.bf16 %v1366
    %v1447 = vunpack.c.l.s8.bf16 %v1367
    %v1448 = vunpack.c.h.s8.bf16 %v1364
    %v1449 = vunpack.c.h.s8.bf16 %v1365
    %v1450 = vunpack.c.h.s8.bf16 %v1366
    %v1451 = vunpack.c.h.s8.bf16 %v1367
    %v1452 = vunpack.c.l.s8.bf16 %v1368
    %v1453 = vunpack.c.l.s8.bf16 %v1369
    %v1454 = vunpack.c.l.s8.bf16 %v1370
    %v1455 = vunpack.c.l.s8.bf16 %v1371
    %v1456 = vunpack.c.h.s8.bf16 %v1368
    %v1457 = vunpack.c.h.s8.bf16 %v1369
    %v1458 = vunpack.c.h.s8.bf16 %v1370
    %v1459 = vunpack.c.h.s8.bf16 %v1371
    %v1460 = vunpack.c.l.s8.bf16 %v1372
    %v1461 = vunpack.c.l.s8.bf16 %v1373
    %v1462 = vunpack.c.l.s8.bf16 %v1374
    %v1463 = vunpack.c.l.s8.bf16 %v1375
    %v1464 = vunpack.c.h.s8.bf16 %v1372
    %v1465 = vunpack.c.h.s8.bf16 %v1373
    %v1466 = vunpack.c.h.s8.bf16 %v1374
    %v1467 = vunpack.c.h.s8.bf16 %v1375
    %v1468 = vunpack.c.l.s8.bf16 %v1376
    %v1469 = vunpack.c.l.s8.bf16 %v1377
    %v1470 = vunpack.c.l.s8.bf16 %v1378
    %v1471 = vunpack.c.l.s8.bf16 %v1379
    %v1472 = vunpack.c.h.s8.bf16 %v1376
    %v1473 = vunpack.c.h.s8.bf16 %v1377
    %v1474 = vunpack.c.h.s8.bf16 %v1378
    %v1475 = vunpack.c.h.s8.bf16 %v1379
    %v1476 = vunpack.c.l.s8.bf16 %v1380
    %v1477 = vunpack.c.l.s8.bf16 %v1381
    %v1478 = vunpack.c.l.s8.bf16 %v1382
    %v1479 = vunpack.c.l.s8.bf16 %v1383
    %v1480 = vunpack.c.h.s8.bf16 %v1380
    %v1481 = vunpack.c.h.s8.bf16 %v1381
    %v1482 = vunpack.c.h.s8.bf16 %v1382
    %v1483 = vunpack.c.h.s8.bf16 %v1383
    %v1484 = vunpack.c.l.s8.bf16 %v1384
    %v1485 = vunpack.c.l.s8.bf16 %v1385
    %v1486 = vunpack.c.l.s8.bf16 %v1386
    %v1487 = vunpack.c.l.s8.bf16 %v1387
    %v1488 = vunpack.c.h.s8.bf16 %v1384
    %v1489 = vunpack.c.h.s8.bf16 %v1385
    %v1490 = vunpack.c.h.s8.bf16 %v1386
    %v1491 = vunpack.c.h.s8.bf16 %v1387
    %v1492 = vunpack.c.l.s8.bf16 %v1388
    %v1493 = vunpack.c.l.s8.bf16 %v1389
    %v1494 = vunpack.c.l.s8.bf16 %v1390
    %v1495 = vunpack.c.l.s8.bf16 %v1391
    %v1496 = vunpack.c.h.s8.bf16 %v1388
    %v1497 = vunpack.c.h.s8.bf16 %v1389
    %v1498 = vunpack.c.h.s8.bf16 %v1390
    %v1499 = vunpack.c.h.s8.bf16 %v1391
    %v1500 = vunpack.c.l.s8.bf16 %v1392
    %v1501 = vunpack.c.l.s8.bf16 %v1393
    %v1502 = vunpack.c.l.s8.bf16 %v1394
    %v1503 = vunpack.c.l.s8.bf16 %v1395
    %v1504 = vunpack.c.h.s8.bf16 %v1392
    %v1505 = vunpack.c.h.s8.bf16 %v1393
    %v1506 = vunpack.c.h.s8.bf16 %v1394
    %v1507 = vunpack.c.h.s8.bf16 %v1395
    %v1508 = vunpack.c.l.s8.bf16 %v1396
    %v1509 = vunpack.c.l.s8.bf16 %v1397
    %v1510 = vunpack.c.l.s8.bf16 %v1398
    %v1511 = vunpack.c.l.s8.bf16 %v1399
    %v1512 = vunpack.c.h.s8.bf16 %v1396
    %v1513 = vunpack.c.h.s8.bf16 %v1397
    %v1514 = vunpack.c.h.s8.bf16 %v1398
    %v1515 = vunpack.c.h.s8.bf16 %v1399
    %v1516 = vunpack.c.l.s8.bf16 %v1400
    %v1517 = vunpack.c.l.s8.bf16 %v1401
    %v1518 = vunpack.c.l.s8.bf16 %v1402
    %v1519 = vunpack.c.l.s8.bf16 %v1403
    %v1520 = vunpack.c.h.s8.bf16 %v1400
    %v1521 = vunpack.c.h.s8.bf16 %v1401
    %v1522 = vunpack.c.h.s8.bf16 %v1402
    %v1523 = vunpack.c.h.s8.bf16 %v1403
    %v1524 = vunpack.c.l.s8.bf16 %v1404
    %v1525 = vunpack.c.l.s8.bf16 %v1405
    %v1526 = vunpack.c.l.s8.bf16 %v1406
    %v1527 = vunpack.c.l.s8.bf16 %v1407
    %v1528 = vunpack.c.h.s8.bf16 %v1404
    %v1529 = vunpack.c.h.s8.bf16 %v1405
    %v1530 = vunpack.c.h.s8.bf16 %v1406
    %v1531 = vunpack.c.h.s8.bf16 %v1407
    %v1532 = vunpack.c.l.s8.bf16 %v1408
    %v1533 = vunpack.c.l.s8.bf16 %v1409
    %v1534 = vunpack.c.l.s8.bf16 %v1410
    %v1535 = vunpack.c.l.s8.bf16 %v1411
    %v1536 = vunpack.c.h.s8.bf16 %v1408
    %v1537 = vunpack.c.h.s8.bf16 %v1409
    %v1538 = vunpack.c.h.s8.bf16 %v1410
    %v1539 = vunpack.c.h.s8.bf16 %v1411
    %v1540 = vpack.c.bf16 %v1343, %v1343
    %v1541 = vpack.c.bf16 %v1344, %v1344
    %v1542 = vpack.c.bf16 %v1345, %v1345
    %v1543 = vpack.c.bf16 %v1346, %v1346
    %1544 = vmatprep.subr.bf16.mxu0 %v1441
    %1545 = vmatpush1.bf16.msra.mxu0 %v1440
    %1546 = vmatprep.subr.bf16.mxu0 %v1437
    %1547 = vmatpush1.bf16.msra.mxu0 %v1436
    %1548 = vmatprep.subr.bf16.mxu0 %v1433
    %1549 = vmatpush1.bf16.msra.mxu0 %v1432
    %1550 = vmatprep.subr.bf16.mxu0 %v1429
    %1551 = vmatpush1.bf16.msra.mxu0 %v1428
    %1552 = vmatprep.subr.bf16.mxu0 %v1425
    %1553 = vmatpush1.bf16.msra.mxu0 %v1424
    %1554 = vmatprep.subr.bf16.mxu0 %v1421
    %1555 = vmatpush1.bf16.msra.mxu0 %v1420
    %1556 = vmatprep.subr.bf16.mxu0 %v1417
    %1557 = vmatpush1.bf16.msra.mxu0 %v1416
    %1558 = vmatprep.subr.bf16.mxu0 %v1413
    %1559 = vmatpush1.bf16.msra.mxu0 %v1412
    %1560 = vmatprep.subr.bf16.mxu0 %v1473
    %1561 = vmatpush2.bf16.msra.mxu0 %v1472
    %1562 = vmatprep.subr.bf16.mxu0 %v1469
    %1563 = vmatpush2.bf16.msra.mxu0 %v1468
    %1564 = vmatprep.subr.bf16.mxu0 %v1465
    %1565 = vmatpush2.bf16.msra.mxu0 %v1464
    %1566 = vmatprep.subr.bf16.mxu0 %v1461
    %1567 = vmatpush2.bf16.msra.mxu0 %v1460
    %1568 = vmatprep.subr.bf16.mxu0 %v1457
    %1569 = vmatpush2.bf16.msra.mxu0 %v1456
    %1570 = vmatprep.subr.bf16.mxu0 %v1453
    %1571 = vmatpush2.bf16.msra.mxu0 %v1452
    %1572 = vmatprep.subr.bf16.mxu0 %v1449
    %1573 = vmatpush2.bf16.msra.mxu0 %v1448
    %1574 = vmatprep.subr.bf16.mxu0 %v1445
    %1575 = vmatpush2.bf16.msra.mxu0 %v1444
    %1576 = vmatprep.mubr.bf16.mxu0 %v1541
    %1577 = vmatmul.mubr.bf16.gmra.mxu0 %v1540
    %v1578 = vpop.f32.mrf.mxu0
    %v1579 = vadd.f32 0.0, %v1578
    %v1580 = vpop.f32.mrf.mxu0
    %v1581 = vadd.f32 0.0, %v1580
    %v1582 = vpop.f32.mrf.mxu0
    %v1583 = vpop.f32.mrf.mxu0
    %1584 = vdwg.mxu0
    %1585 = vmatprep.subr.bf16.mxu0 %v1505
    %1586 = vmatpush1.bf16.msra.mxu0 %v1504
    %1587 = vmatprep.subr.bf16.mxu0 %v1501
    %1588 = vmatpush1.bf16.msra.mxu0 %v1500
    %1589 = vmatprep.subr.bf16.mxu0 %v1497
    %1590 = vmatpush1.bf16.msra.mxu0 %v1496
    %1591 = vmatprep.subr.bf16.mxu0 %v1493
    %1592 = vmatpush1.bf16.msra.mxu0 %v1492
    %1593 = vmatprep.subr.bf16.mxu0 %v1489
    %1594 = vmatpush1.bf16.msra.mxu0 %v1488
    %1595 = vmatprep.subr.bf16.mxu0 %v1485
    %1596 = vmatpush1.bf16.msra.mxu0 %v1484
    %1597 = vmatprep.subr.bf16.mxu0 %v1481
    %1598 = vmatpush1.bf16.msra.mxu0 %v1480
    %1599 = vmatprep.subr.bf16.mxu0 %v1477
    %1600 = vmatpush1.bf16.msra.mxu0 %v1476
    %1601 = vmatprep.subr.bf16.mxu0 %v1537
    %1602 = vmatpush2.bf16.msra.mxu0 %v1536
    %1603 = vmatprep.subr.bf16.mxu0 %v1533
    %1604 = vmatpush2.bf16.msra.mxu0 %v1532
    %1605 = vmatprep.subr.bf16.mxu0 %v1529
    %1606 = vmatpush2.bf16.msra.mxu0 %v1528
    %1607 = vmatprep.subr.bf16.mxu0 %v1525
    %1608 = vmatpush2.bf16.msra.mxu0 %v1524
    %1609 = vmatprep.subr.bf16.mxu0 %v1521
    %1610 = vmatpush2.bf16.msra.mxu0 %v1520
    %1611 = vmatprep.subr.bf16.mxu0 %v1517
    %1612 = vmatpush2.bf16.msra.mxu0 %v1516
    %1613 = vmatprep.subr.bf16.mxu0 %v1513
    %1614 = vmatpush2.bf16.msra.mxu0 %v1512
    %1615 = vmatprep.subr.bf16.mxu0 %v1509
    %1616 = vmatpush2.bf16.msra.mxu0 %v1508
    %1617 = vmatprep.mubr.bf16.mxu0 %v1543
    %1618 = vmatmul.mubr.bf16.gmra.mxu0 %v1542
    %v1619 = vpop.f32.mrf.mxu0
    %v1620 = vadd.f32 %v1579, %v1619
    %v1621 = vpop.f32.mrf.mxu0
    %v1622 = vadd.f32 %v1581, %v1621
    %v1623 = vpop.f32.mrf.mxu0
    %v1624 = vpop.f32.mrf.mxu0
    %1625 = vdwg.mxu0
    %1626 = vmatprep.subr.bf16.mxu0 %v1443
    %1627 = vmatpush1.bf16.msra.mxu0 %v1442
    %1628 = vmatprep.subr.bf16.mxu0 %v1439
    %1629 = vmatpush1.bf16.msra.mxu0 %v1438
    %1630 = vmatprep.subr.bf16.mxu0 %v1435
    %1631 = vmatpush1.bf16.msra.mxu0 %v1434
    %1632 = vmatprep.subr.bf16.mxu0 %v1431
    %1633 = vmatpush1.bf16.msra.mxu0 %v1430
    %1634 = vmatprep.subr.bf16.mxu0 %v1427
    %1635 = vmatpush1.bf16.msra.mxu0 %v1426
    %1636 = vmatprep.subr.bf16.mxu0 %v1423
    %1637 = vmatpush1.bf16.msra.mxu0 %v1422
    %1638 = vmatprep.subr.bf16.mxu0 %v1419
    %1639 = vmatpush1.bf16.msra.mxu0 %v1418
    %1640 = vmatprep.subr.bf16.mxu0 %v1415
    %1641 = vmatpush1.bf16.msra.mxu0 %v1414
    %1642 = vmatprep.subr.bf16.mxu0 %v1475
    %1643 = vmatpush2.bf16.msra.mxu0 %v1474
    %1644 = vmatprep.subr.bf16.mxu0 %v1471
    %1645 = vmatpush2.bf16.msra.mxu0 %v1470
    %1646 = vmatprep.subr.bf16.mxu0 %v1467
    %1647 = vmatpush2.bf16.msra.mxu0 %v1466
    %1648 = vmatprep.subr.bf16.mxu0 %v1463
    %1649 = vmatpush2.bf16.msra.mxu0 %v1462
    %1650 = vmatprep.subr.bf16.mxu0 %v1459
    %1651 = vmatpush2.bf16.msra.mxu0 %v1458
    %1652 = vmatprep.subr.bf16.mxu0 %v1455
    %1653 = vmatpush2.bf16.msra.mxu0 %v1454
    %1654 = vmatprep.subr.bf16.mxu0 %v1451
    %1655 = vmatpush2.bf16.msra.mxu0 %v1450
    %1656 = vmatprep.subr.bf16.mxu0 %v1447
    %1657 = vmatpush2.bf16.msra.mxu0 %v1446
    %1658 = vmatprep.mubr.bf16.mxu0 %v1541
    %1659 = vmatmul.mubr.bf16.gmra.mxu0 %v1540
    %v1660 = vpop.f32.mrf.mxu0
    %v1661 = vadd.f32 0.0, %v1660
    %v1662 = vpop.f32.mrf.mxu0
    %v1663 = vadd.f32 0.0, %v1662
    %v1664 = vpop.f32.mrf.mxu0
    %v1665 = vpop.f32.mrf.mxu0
    %1666 = vdwg.mxu0
    %1667 = vmatprep.subr.bf16.mxu0 %v1507
    %1668 = vmatpush1.bf16.msra.mxu0 %v1506
    %1669 = vmatprep.subr.bf16.mxu0 %v1503
    %1670 = vmatpush1.bf16.msra.mxu0 %v1502
    %1671 = vmatprep.subr.bf16.mxu0 %v1499
    %1672 = vmatpush1.bf16.msra.mxu0 %v1498
    %1673 = vmatprep.subr.bf16.mxu0 %v1495
    %1674 = vmatpush1.bf16.msra.mxu0 %v1494
    %1675 = vmatprep.subr.bf16.mxu0 %v1491
    %1676 = vmatpush1.bf16.msra.mxu0 %v1490
    %1677 = vmatprep.subr.bf16.mxu0 %v1487
    %1678 = vmatpush1.bf16.msra.mxu0 %v1486
    %1679 = vmatprep.subr.bf16.mxu0 %v1483
    %1680 = vmatpush1.bf16.msra.mxu0 %v1482
    %1681 = vmatprep.subr.bf16.mxu0 %v1479
    %1682 = vmatpush1.bf16.msra.mxu0 %v1478
    %1683 = vmatprep.subr.bf16.mxu0 %v1539
    %1684 = vmatpush2.bf16.msra.mxu0 %v1538
    %1685 = vmatprep.subr.bf16.mxu0 %v1535
    %1686 = vmatpush2.bf16.msra.mxu0 %v1534
    %1687 = vmatprep.subr.bf16.mxu0 %v1531
    %1688 = vmatpush2.bf16.msra.mxu0 %v1530
    %1689 = vmatprep.subr.bf16.mxu0 %v1527
    %1690 = vmatpush2.bf16.msra.mxu0 %v1526
    %1691 = vmatprep.subr.bf16.mxu0 %v1523
    %1692 = vmatpush2.bf16.msra.mxu0 %v1522
    %1693 = vmatprep.subr.bf16.mxu0 %v1519
    %1694 = vmatpush2.bf16.msra.mxu0 %v1518
    %1695 = vmatprep.subr.bf16.mxu0 %v1515
    %1696 = vmatpush2.bf16.msra.mxu0 %v1514
    %1697 = vmatprep.subr.bf16.mxu0 %v1511
    %1698 = vmatpush2.bf16.msra.mxu0 %v1510
    %1699 = vmatprep.mubr.bf16.mxu0 %v1543
    %1700 = vmatmul.mubr.bf16.gmra.mxu0 %v1542
    %v1701 = vpop.f32.mrf.mxu0
    %v1702 = vadd.f32 %v1661, %v1701
    %v1703 = vpop.f32.mrf.mxu0
    %v1704 = vadd.f32 %v1663, %v1703
    %v1705 = vpop.f32.mrf.mxu0
    %v1706 = vpop.f32.mrf.mxu0
    %1707 = vdwg.mxu0
    %s1708 = scalar_lea.vmem [#allocation7], 12
    %v1709 = vld [vmem:[%s1708] sm:$0xf]
    %v1711 = vlaneseq
    %v1712 = vshrl.u32 %v1711, 7
    %v1713 = vsub.s32 0, %v1712
    %v1714 = vrot.slane %v1709, %v1713
    %v1715 = vlaneseq
    %v1716 = vshrl.u32 %v1715, 7
    %v1717 = vsub.s32 1, %v1716
    %v1718 = vrot.slane %v1709, %v1717
    %v1719 = vlaneseq
    %v1720 = vshrl.u32 %v1719, 7
    %v1721 = vsub.s32 2, %v1720
    %v1722 = vrot.slane %v1709, %v1721
    %v1723 = vlaneseq
    %v1724 = vshrl.u32 %v1723, 7
    %v1725 = vsub.s32 3, %v1724
    %v1726 = vrot.slane %v1709, %v1725
    %v1731 = vmul.f32 %v1620, %v1714
    %v1732 = vmul.f32 %v1622, %v1718
    %v1733 = vmul.f32 %v1702, %v1722
    %v1734 = vmul.f32 %v1704, %v1726
    %s1735 = scalar_lea.vmem [#allocation8], 12
    %v1736 = vld [vmem:[%s1735] sm:$0xf]
    %v1738 = vlaneseq
    %v1739 = vshrl.u32 %v1738, 7
    %v1740 = vsub.s32 0, %v1739
    %v1741 = vrot.slane %v1736, %v1740
    %v1742 = vlaneseq
    %v1743 = vshrl.u32 %v1742, 7
    %v1744 = vsub.s32 1, %v1743
    %v1745 = vrot.slane %v1736, %v1744
    %v1746 = vlaneseq
    %v1747 = vshrl.u32 %v1746, 7
    %v1748 = vsub.s32 2, %v1747
    %v1749 = vrot.slane %v1736, %v1748
    %v1750 = vlaneseq
    %v1751 = vshrl.u32 %v1750, 7
    %v1752 = vsub.s32 3, %v1751
    %v1753 = vrot.slane %v1736, %v1752
    %v1758 = vadd.f32 %v1731, %v1741
    %v1759 = vadd.f32 %v1732, %v1745
    %v1760 = vadd.f32 %v1733, %v1749
    %v1761 = vadd.f32 %v1734, %v1753
    %v1762 = vmax.f32 %v1758, 0.0
    %v1763 = vmax.f32 %v1759, 0.0
    %v1764 = vmax.f32 %v1760, 0.0
    %v1765 = vmax.f32 %v1761, 0.0
    %s1766 = scalar_lea.vmem [#allocation5], 2048
    %v1767 = vld [vmem:[%s1766] sm:$0xff]
    %v1768 = vld [vmem:[%s1766 + $0x8] sm:$0xff]
    %v1769 = vld [vmem:[%s1766 + $0x10] sm:$0xff]
    %v1770 = vld [vmem:[%s1766 + $0x18] sm:$0xff]
    %v1771 = vld [vmem:[%s1766 + $0x20] sm:$0xff]
    %v1772 = vld [vmem:[%s1766 + $0x28] sm:$0xff]
    %v1773 = vld [vmem:[%s1766 + $0x30] sm:$0xff]
    %v1774 = vld [vmem:[%s1766 + $0x38] sm:$0xff]
    %v1775 = vld [vmem:[%s1766 + $0x40] sm:$0xff]
    %v1776 = vld [vmem:[%s1766 + $0x48] sm:$0xff]
    %v1777 = vld [vmem:[%s1766 + $0x50] sm:$0xff]
    %v1778 = vld [vmem:[%s1766 + $0x58] sm:$0xff]
    %v1779 = vld [vmem:[%s1766 + $0x60] sm:$0xff]
    %v1780 = vld [vmem:[%s1766 + $0x68] sm:$0xff]
    %v1781 = vld [vmem:[%s1766 + $0x70] sm:$0xff]
    %v1782 = vld [vmem:[%s1766 + $0x78] sm:$0xff]
    %v1783 = vld [vmem:[%s1766 + $0x80] sm:$0xff]
    %v1784 = vld [vmem:[%s1766 + $0x88] sm:$0xff]
    %v1785 = vld [vmem:[%s1766 + $0x90] sm:$0xff]
    %v1786 = vld [vmem:[%s1766 + $0x98] sm:$0xff]
    %v1787 = vld [vmem:[%s1766 + $0xa0] sm:$0xff]
    %v1788 = vld [vmem:[%s1766 + $0xa8] sm:$0xff]
    %v1789 = vld [vmem:[%s1766 + $0xb0] sm:$0xff]
    %v1790 = vld [vmem:[%s1766 + $0xb8] sm:$0xff]
    %v1791 = vld [vmem:[%s1766 + $0xc0] sm:$0xff]
    %v1792 = vld [vmem:[%s1766 + $0xc8] sm:$0xff]
    %v1793 = vld [vmem:[%s1766 + $0xd0] sm:$0xff]
    %v1794 = vld [vmem:[%s1766 + $0xd8] sm:$0xff]
    %v1795 = vld [vmem:[%s1766 + $0xe0] sm:$0xff]
    %v1796 = vld [vmem:[%s1766 + $0xe8] sm:$0xff]
    %v1797 = vld [vmem:[%s1766 + $0xf0] sm:$0xff]
    %v1798 = vld [vmem:[%s1766 + $0xf8] sm:$0xff]
    %v1799 = vld [vmem:[%s1766 + $0x100] sm:$0xff]
    %v1800 = vld [vmem:[%s1766 + $0x108] sm:$0xff]
    %v1801 = vld [vmem:[%s1766 + $0x110] sm:$0xff]
    %v1802 = vld [vmem:[%s1766 + $0x118] sm:$0xff]
    %v1803 = vld [vmem:[%s1766 + $0x120] sm:$0xff]
    %v1804 = vld [vmem:[%s1766 + $0x128] sm:$0xff]
    %v1805 = vld [vmem:[%s1766 + $0x130] sm:$0xff]
    %v1806 = vld [vmem:[%s1766 + $0x138] sm:$0xff]
    %v1807 = vld [vmem:[%s1766 + $0x140] sm:$0xff]
    %v1808 = vld [vmem:[%s1766 + $0x148] sm:$0xff]
    %v1809 = vld [vmem:[%s1766 + $0x150] sm:$0xff]
    %v1810 = vld [vmem:[%s1766 + $0x158] sm:$0xff]
    %v1811 = vld [vmem:[%s1766 + $0x160] sm:$0xff]
    %v1812 = vld [vmem:[%s1766 + $0x168] sm:$0xff]
    %v1813 = vld [vmem:[%s1766 + $0x170] sm:$0xff]
    %v1814 = vld [vmem:[%s1766 + $0x178] sm:$0xff]
    %v1815 = vld [vmem:[%s1766 + $0x180] sm:$0xff]
    %v1816 = vld [vmem:[%s1766 + $0x188] sm:$0xff]
    %v1817 = vld [vmem:[%s1766 + $0x190] sm:$0xff]
    %v1818 = vld [vmem:[%s1766 + $0x198] sm:$0xff]
    %v1819 = vld [vmem:[%s1766 + $0x1a0] sm:$0xff]
    %v1820 = vld [vmem:[%s1766 + $0x1a8] sm:$0xff]
    %v1821 = vld [vmem:[%s1766 + $0x1b0] sm:$0xff]
    %v1822 = vld [vmem:[%s1766 + $0x1b8] sm:$0xff]
    %v1823 = vld [vmem:[%s1766 + $0x1c0] sm:$0xff]
    %v1824 = vld [vmem:[%s1766 + $0x1c8] sm:$0xff]
    %v1825 = vld [vmem:[%s1766 + $0x1d0] sm:$0xff]
    %v1826 = vld [vmem:[%s1766 + $0x1d8] sm:$0xff]
    %v1827 = vld [vmem:[%s1766 + $0x1e0] sm:$0xff]
    %v1828 = vld [vmem:[%s1766 + $0x1e8] sm:$0xff]
    %v1829 = vld [vmem:[%s1766 + $0x1f0] sm:$0xff]
    %v1830 = vld [vmem:[%s1766 + $0x1f8] sm:$0xff]
    %v1831 = vunpack.c.l.s8.bf16 %v1767
    %v1832 = vunpack.c.l.s8.bf16 %v1768
    %v1833 = vunpack.c.l.s8.bf16 %v1769
    %v1834 = vunpack.c.l.s8.bf16 %v1770
    %v1835 = vunpack.c.h.s8.bf16 %v1767
    %v1836 = vunpack.c.h.s8.bf16 %v1768
    %v1837 = vunpack.c.h.s8.bf16 %v1769
    %v1838 = vunpack.c.h.s8.bf16 %v1770
    %v1839 = vunpack.c.l.s8.bf16 %v1771
    %v1840 = vunpack.c.l.s8.bf16 %v1772
    %v1841 = vunpack.c.l.s8.bf16 %v1773
    %v1842 = vunpack.c.l.s8.bf16 %v1774
    %v1843 = vunpack.c.h.s8.bf16 %v1771
    %v1844 = vunpack.c.h.s8.bf16 %v1772
    %v1845 = vunpack.c.h.s8.bf16 %v1773
    %v1846 = vunpack.c.h.s8.bf16 %v1774
    %v1847 = vunpack.c.l.s8.bf16 %v1775
    %v1848 = vunpack.c.l.s8.bf16 %v1776
    %v1849 = vunpack.c.l.s8.bf16 %v1777
    %v1850 = vunpack.c.l.s8.bf16 %v1778
    %v1851 = vunpack.c.h.s8.bf16 %v1775
    %v1852 = vunpack.c.h.s8.bf16 %v1776
    %v1853 = vunpack.c.h.s8.bf16 %v1777
    %v1854 = vunpack.c.h.s8.bf16 %v1778
    %v1855 = vunpack.c.l.s8.bf16 %v1779
    %v1856 = vunpack.c.l.s8.bf16 %v1780
    %v1857 = vunpack.c.l.s8.bf16 %v1781
    %v1858 = vunpack.c.l.s8.bf16 %v1782
    %v1859 = vunpack.c.h.s8.bf16 %v1779
    %v1860 = vunpack.c.h.s8.bf16 %v1780
    %v1861 = vunpack.c.h.s8.bf16 %v1781
    %v1862 = vunpack.c.h.s8.bf16 %v1782
    %v1863 = vunpack.c.l.s8.bf16 %v1783
    %v1864 = vunpack.c.l.s8.bf16 %v1784
    %v1865 = vunpack.c.l.s8.bf16 %v1785
    %v1866 = vunpack.c.l.s8.bf16 %v1786
    %v1867 = vunpack.c.h.s8.bf16 %v1783
    %v1868 = vunpack.c.h.s8.bf16 %v1784
    %v1869 = vunpack.c.h.s8.bf16 %v1785
    %v1870 = vunpack.c.h.s8.bf16 %v1786
    %v1871 = vunpack.c.l.s8.bf16 %v1787
    %v1872 = vunpack.c.l.s8.bf16 %v1788
    %v1873 = vunpack.c.l.s8.bf16 %v1789
    %v1874 = vunpack.c.l.s8.bf16 %v1790
    %v1875 = vunpack.c.h.s8.bf16 %v1787
    %v1876 = vunpack.c.h.s8.bf16 %v1788
    %v1877 = vunpack.c.h.s8.bf16 %v1789
    %v1878 = vunpack.c.h.s8.bf16 %v1790
    %v1879 = vunpack.c.l.s8.bf16 %v1791
    %v1880 = vunpack.c.l.s8.bf16 %v1792
    %v1881 = vunpack.c.l.s8.bf16 %v1793
    %v1882 = vunpack.c.l.s8.bf16 %v1794
    %v1883 = vunpack.c.h.s8.bf16 %v1791
    %v1884 = vunpack.c.h.s8.bf16 %v1792
    %v1885 = vunpack.c.h.s8.bf16 %v1793
    %v1886 = vunpack.c.h.s8.bf16 %v1794
    %v1887 = vunpack.c.l.s8.bf16 %v1795
    %v1888 = vunpack.c.l.s8.bf16 %v1796
    %v1889 = vunpack.c.l.s8.bf16 %v1797
    %v1890 = vunpack.c.l.s8.bf16 %v1798
    %v1891 = vunpack.c.h.s8.bf16 %v1795
    %v1892 = vunpack.c.h.s8.bf16 %v1796
    %v1893 = vunpack.c.h.s8.bf16 %v1797
    %v1894 = vunpack.c.h.s8.bf16 %v1798
    %v1895 = vunpack.c.l.s8.bf16 %v1799
    %v1896 = vunpack.c.l.s8.bf16 %v1800
    %v1897 = vunpack.c.l.s8.bf16 %v1801
    %v1898 = vunpack.c.l.s8.bf16 %v1802
    %v1899 = vunpack.c.h.s8.bf16 %v1799
    %v1900 = vunpack.c.h.s8.bf16 %v1800
    %v1901 = vunpack.c.h.s8.bf16 %v1801
    %v1902 = vunpack.c.h.s8.bf16 %v1802
    %v1903 = vunpack.c.l.s8.bf16 %v1803
    %v1904 = vunpack.c.l.s8.bf16 %v1804
    %v1905 = vunpack.c.l.s8.bf16 %v1805
    %v1906 = vunpack.c.l.s8.bf16 %v1806
    %v1907 = vunpack.c.h.s8.bf16 %v1803
    %v1908 = vunpack.c.h.s8.bf16 %v1804
    %v1909 = vunpack.c.h.s8.bf16 %v1805
    %v1910 = vunpack.c.h.s8.bf16 %v1806
    %v1911 = vunpack.c.l.s8.bf16 %v1807
    %v1912 = vunpack.c.l.s8.bf16 %v1808
    %v1913 = vunpack.c.l.s8.bf16 %v1809
    %v1914 = vunpack.c.l.s8.bf16 %v1810
    %v1915 = vunpack.c.h.s8.bf16 %v1807
    %v1916 = vunpack.c.h.s8.bf16 %v1808
    %v1917 = vunpack.c.h.s8.bf16 %v1809
    %v1918 = vunpack.c.h.s8.bf16 %v1810
    %v1919 = vunpack.c.l.s8.bf16 %v1811
    %v1920 = vunpack.c.l.s8.bf16 %v1812
    %v1921 = vunpack.c.l.s8.bf16 %v1813
    %v1922 = vunpack.c.l.s8.bf16 %v1814
    %v1923 = vunpack.c.h.s8.bf16 %v1811
    %v1924 = vunpack.c.h.s8.bf16 %v1812
    %v1925 = vunpack.c.h.s8.bf16 %v1813
    %v1926 = vunpack.c.h.s8.bf16 %v1814
    %v1927 = vunpack.c.l.s8.bf16 %v1815
    %v1928 = vunpack.c.l.s8.bf16 %v1816
    %v1929 = vunpack.c.l.s8.bf16 %v1817
    %v1930 = vunpack.c.l.s8.bf16 %v1818
    %v1931 = vunpack.c.h.s8.bf16 %v1815
    %v1932 = vunpack.c.h.s8.bf16 %v1816
    %v1933 = vunpack.c.h.s8.bf16 %v1817
    %v1934 = vunpack.c.h.s8.bf16 %v1818
    %v1935 = vunpack.c.l.s8.bf16 %v1819
    %v1936 = vunpack.c.l.s8.bf16 %v1820
    %v1937 = vunpack.c.l.s8.bf16 %v1821
    %v1938 = vunpack.c.l.s8.bf16 %v1822
    %v1939 = vunpack.c.h.s8.bf16 %v1819
    %v1940 = vunpack.c.h.s8.bf16 %v1820
    %v1941 = vunpack.c.h.s8.bf16 %v1821
    %v1942 = vunpack.c.h.s8.bf16 %v1822
    %v1943 = vunpack.c.l.s8.bf16 %v1823
    %v1944 = vunpack.c.l.s8.bf16 %v1824
    %v1945 = vunpack.c.l.s8.bf16 %v1825
    %v1946 = vunpack.c.l.s8.bf16 %v1826
    %v1947 = vunpack.c.h.s8.bf16 %v1823
    %v1948 = vunpack.c.h.s8.bf16 %v1824
    %v1949 = vunpack.c.h.s8.bf16 %v1825
    %v1950 = vunpack.c.h.s8.bf16 %v1826
    %v1951 = vunpack.c.l.s8.bf16 %v1827
    %v1952 = vunpack.c.l.s8.bf16 %v1828
    %v1953 = vunpack.c.l.s8.bf16 %v1829
    %v1954 = vunpack.c.l.s8.bf16 %v1830
    %v1955 = vunpack.c.h.s8.bf16 %v1827
    %v1956 = vunpack.c.h.s8.bf16 %v1828
    %v1957 = vunpack.c.h.s8.bf16 %v1829
    %v1958 = vunpack.c.h.s8.bf16 %v1830
    %v1959 = vpack.c.bf16 %v1762, %v1762
    %v1960 = vpack.c.bf16 %v1763, %v1763
    %v1961 = vpack.c.bf16 %v1764, %v1764
    %v1962 = vpack.c.bf16 %v1765, %v1765
    %1963 = vmatprep.subr.bf16.mxu0 %v1860
    %1964 = vmatpush1.bf16.msra.mxu0 %v1859
    %1965 = vmatprep.subr.bf16.mxu0 %v1856
    %1966 = vmatpush1.bf16.msra.mxu0 %v1855
    %1967 = vmatprep.subr.bf16.mxu0 %v1852
    %1968 = vmatpush1.bf16.msra.mxu0 %v1851
    %1969 = vmatprep.subr.bf16.mxu0 %v1848
    %1970 = vmatpush1.bf16.msra.mxu0 %v1847
    %1971 = vmatprep.subr.bf16.mxu0 %v1844
    %1972 = vmatpush1.bf16.msra.mxu0 %v1843
    %1973 = vmatprep.subr.bf16.mxu0 %v1840
    %1974 = vmatpush1.bf16.msra.mxu0 %v1839
    %1975 = vmatprep.subr.bf16.mxu0 %v1836
    %1976 = vmatpush1.bf16.msra.mxu0 %v1835
    %1977 = vmatprep.subr.bf16.mxu0 %v1832
    %1978 = vmatpush1.bf16.msra.mxu0 %v1831
    %1979 = vmatprep.subr.bf16.mxu0 %v1892
    %1980 = vmatpush2.bf16.msra.mxu0 %v1891
    %1981 = vmatprep.subr.bf16.mxu0 %v1888
    %1982 = vmatpush2.bf16.msra.mxu0 %v1887
    %1983 = vmatprep.subr.bf16.mxu0 %v1884
    %1984 = vmatpush2.bf16.msra.mxu0 %v1883
    %1985 = vmatprep.subr.bf16.mxu0 %v1880
    %1986 = vmatpush2.bf16.msra.mxu0 %v1879
    %1987 = vmatprep.subr.bf16.mxu0 %v1876
    %1988 = vmatpush2.bf16.msra.mxu0 %v1875
    %1989 = vmatprep.subr.bf16.mxu0 %v1872
    %1990 = vmatpush2.bf16.msra.mxu0 %v1871
    %1991 = vmatprep.subr.bf16.mxu0 %v1868
    %1992 = vmatpush2.bf16.msra.mxu0 %v1867
    %1993 = vmatprep.subr.bf16.mxu0 %v1864
    %1994 = vmatpush2.bf16.msra.mxu0 %v1863
    %1995 = vmatprep.mubr.bf16.mxu0 %v1960
    %1996 = vmatmul.mubr.bf16.gmra.mxu0 %v1959
    %v1997 = vpop.f32.mrf.mxu0
    %v1998 = vadd.f32 0.0, %v1997
    %v1999 = vpop.f32.mrf.mxu0
    %v2000 = vadd.f32 0.0, %v1999
    %v2001 = vpop.f32.mrf.mxu0
    %v2002 = vpop.f32.mrf.mxu0
    %2003 = vdwg.mxu0
    %2004 = vmatprep.subr.bf16.mxu0 %v1924
    %2005 = vmatpush1.bf16.msra.mxu0 %v1923
    %2006 = vmatprep.subr.bf16.mxu0 %v1920
    %2007 = vmatpush1.bf16.msra.mxu0 %v1919
    %2008 = vmatprep.subr.bf16.mxu0 %v1916
    %2009 = vmatpush1.bf16.msra.mxu0 %v1915
    %2010 = vmatprep.subr.bf16.mxu0 %v1912
    %2011 = vmatpush1.bf16.msra.mxu0 %v1911
    %2012 = vmatprep.subr.bf16.mxu0 %v1908
    %2013 = vmatpush1.bf16.msra.mxu0 %v1907
    %2014 = vmatprep.subr.bf16.mxu0 %v1904
    %2015 = vmatpush1.bf16.msra.mxu0 %v1903
    %2016 = vmatprep.subr.bf16.mxu0 %v1900
    %2017 = vmatpush1.bf16.msra.mxu0 %v1899
    %2018 = vmatprep.subr.bf16.mxu0 %v1896
    %2019 = vmatpush1.bf16.msra.mxu0 %v1895
    %2020 = vmatprep.subr.bf16.mxu0 %v1956
    %2021 = vmatpush2.bf16.msra.mxu0 %v1955
    %2022 = vmatprep.subr.bf16.mxu0 %v1952
    %2023 = vmatpush2.bf16.msra.mxu0 %v1951
    %2024 = vmatprep.subr.bf16.mxu0 %v1948
    %2025 = vmatpush2.bf16.msra.mxu0 %v1947
    %2026 = vmatprep.subr.bf16.mxu0 %v1944
    %2027 = vmatpush2.bf16.msra.mxu0 %v1943
    %2028 = vmatprep.subr.bf16.mxu0 %v1940
    %2029 = vmatpush2.bf16.msra.mxu0 %v1939
    %2030 = vmatprep.subr.bf16.mxu0 %v1936
    %2031 = vmatpush2.bf16.msra.mxu0 %v1935
    %2032 = vmatprep.subr.bf16.mxu0 %v1932
    %2033 = vmatpush2.bf16.msra.mxu0 %v1931
    %2034 = vmatprep.subr.bf16.mxu0 %v1928
    %2035 = vmatpush2.bf16.msra.mxu0 %v1927
    %2036 = vmatprep.mubr.bf16.mxu0 %v1962
    %2037 = vmatmul.mubr.bf16.gmra.mxu0 %v1961
    %v2038 = vpop.f32.mrf.mxu0
    %v2039 = vadd.f32 %v1998, %v2038
    %v2040 = vpop.f32.mrf.mxu0
    %v2041 = vadd.f32 %v2000, %v2040
    %v2042 = vpop.f32.mrf.mxu0
    %v2043 = vpop.f32.mrf.mxu0
    %2044 = vdwg.mxu0
    %2045 = vmatprep.subr.bf16.mxu0 %v1862
    %2046 = vmatpush1.bf16.msra.mxu0 %v1861
    %2047 = vmatprep.subr.bf16.mxu0 %v1858
    %2048 = vmatpush1.bf16.msra.mxu0 %v1857
    %2049 = vmatprep.subr.bf16.mxu0 %v1854
    %2050 = vmatpush1.bf16.msra.mxu0 %v1853
    %2051 = vmatprep.subr.bf16.mxu0 %v1850
    %2052 = vmatpush1.bf16.msra.mxu0 %v1849
    %2053 = vmatprep.subr.bf16.mxu0 %v1846
    %2054 = vmatpush1.bf16.msra.mxu0 %v1845
    %2055 = vmatprep.subr.bf16.mxu0 %v1842
    %2056 = vmatpush1.bf16.msra.mxu0 %v1841
    %2057 = vmatprep.subr.bf16.mxu0 %v1838
    %2058 = vmatpush1.bf16.msra.mxu0 %v1837
    %2059 = vmatprep.subr.bf16.mxu0 %v1834
    %2060 = vmatpush1.bf16.msra.mxu0 %v1833
    %2061 = vmatprep.subr.bf16.mxu0 %v1894
    %2062 = vmatpush2.bf16.msra.mxu0 %v1893
    %2063 = vmatprep.subr.bf16.mxu0 %v1890
    %2064 = vmatpush2.bf16.msra.mxu0 %v1889
    %2065 = vmatprep.subr.bf16.mxu0 %v1886
    %2066 = vmatpush2.bf16.msra.mxu0 %v1885
    %2067 = vmatprep.subr.bf16.mxu0 %v1882
    %2068 = vmatpush2.bf16.msra.mxu0 %v1881
    %2069 = vmatprep.subr.bf16.mxu0 %v1878
    %2070 = vmatpush2.bf16.msra.mxu0 %v1877
    %2071 = vmatprep.subr.bf16.mxu0 %v1874
    %2072 = vmatpush2.bf16.msra.mxu0 %v1873
    %2073 = vmatprep.subr.bf16.mxu0 %v1870
    %2074 = vmatpush2.bf16.msra.mxu0 %v1869
    %2075 = vmatprep.subr.bf16.mxu0 %v1866
    %2076 = vmatpush2.bf16.msra.mxu0 %v1865
    %2077 = vmatprep.mubr.bf16.mxu0 %v1960
    %2078 = vmatmul.mubr.bf16.gmra.mxu0 %v1959
    %v2079 = vpop.f32.mrf.mxu0
    %v2080 = vadd.f32 0.0, %v2079
    %v2081 = vpop.f32.mrf.mxu0
    %v2082 = vadd.f32 0.0, %v2081
    %v2083 = vpop.f32.mrf.mxu0
    %v2084 = vpop.f32.mrf.mxu0
    %2085 = vdwg.mxu0
    %2086 = vmatprep.subr.bf16.mxu0 %v1926
    %2087 = vmatpush1.bf16.msra.mxu0 %v1925
    %2088 = vmatprep.subr.bf16.mxu0 %v1922
    %2089 = vmatpush1.bf16.msra.mxu0 %v1921
    %2090 = vmatprep.subr.bf16.mxu0 %v1918
    %2091 = vmatpush1.bf16.msra.mxu0 %v1917
    %2092 = vmatprep.subr.bf16.mxu0 %v1914
    %2093 = vmatpush1.bf16.msra.mxu0 %v1913
    %2094 = vmatprep.subr.bf16.mxu0 %v1910
    %2095 = vmatpush1.bf16.msra.mxu0 %v1909
    %2096 = vmatprep.subr.bf16.mxu0 %v1906
    %2097 = vmatpush1.bf16.msra.mxu0 %v1905
    %2098 = vmatprep.subr.bf16.mxu0 %v1902
    %2099 = vmatpush1.bf16.msra.mxu0 %v1901
    %2100 = vmatprep.subr.bf16.mxu0 %v1898
    %2101 = vmatpush1.bf16.msra.mxu0 %v1897
    %2102 = vmatprep.subr.bf16.mxu0 %v1958
    %2103 = vmatpush2.bf16.msra.mxu0 %v1957
    %2104 = vmatprep.subr.bf16.mxu0 %v1954
    %2105 = vmatpush2.bf16.msra.mxu0 %v1953
    %2106 = vmatprep.subr.bf16.mxu0 %v1950
    %2107 = vmatpush2.bf16.msra.mxu0 %v1949
    %2108 = vmatprep.subr.bf16.mxu0 %v1946
    %2109 = vmatpush2.bf16.msra.mxu0 %v1945
    %2110 = vmatprep.subr.bf16.mxu0 %v1942
    %2111 = vmatpush2.bf16.msra.mxu0 %v1941
    %2112 = vmatprep.subr.bf16.mxu0 %v1938
    %2113 = vmatpush2.bf16.msra.mxu0 %v1937
    %2114 = vmatprep.subr.bf16.mxu0 %v1934
    %2115 = vmatpush2.bf16.msra.mxu0 %v1933
    %2116 = vmatprep.subr.bf16.mxu0 %v1930
    %2117 = vmatpush2.bf16.msra.mxu0 %v1929
    %2118 = vmatprep.mubr.bf16.mxu0 %v1962
    %2119 = vmatmul.mubr.bf16.gmra.mxu0 %v1961
    %v2120 = vpop.f32.mrf.mxu0
    %v2121 = vadd.f32 %v2080, %v2120
    %v2122 = vpop.f32.mrf.mxu0
    %v2123 = vadd.f32 %v2082, %v2122
    %v2124 = vpop.f32.mrf.mxu0
    %v2125 = vpop.f32.mrf.mxu0
    %2126 = vdwg.mxu0
    %s2127 = scalar_lea.vmem [#allocation7], 16
    %v2128 = vld [vmem:[%s2127] sm:$0xf]
    %v2130 = vlaneseq
    %v2131 = vshrl.u32 %v2130, 7
    %v2132 = vsub.s32 0, %v2131
    %v2133 = vrot.slane %v2128, %v2132
    %v2134 = vlaneseq
    %v2135 = vshrl.u32 %v2134, 7
    %v2136 = vsub.s32 1, %v2135
    %v2137 = vrot.slane %v2128, %v2136
    %v2138 = vlaneseq
    %v2139 = vshrl.u32 %v2138, 7
    %v2140 = vsub.s32 2, %v2139
    %v2141 = vrot.slane %v2128, %v2140
    %v2142 = vlaneseq
    %v2143 = vshrl.u32 %v2142, 7
    %v2144 = vsub.s32 3, %v2143
    %v2145 = vrot.slane %v2128, %v2144
    %v2150 = vmul.f32 %v2039, %v2133
    %v2151 = vmul.f32 %v2041, %v2137
    %v2152 = vmul.f32 %v2121, %v2141
    %v2153 = vmul.f32 %v2123, %v2145
    %s2154 = scalar_lea.vmem [#allocation8], 16
    %v2155 = vld [vmem:[%s2154] sm:$0xf]
    %v2157 = vlaneseq
    %v2158 = vshrl.u32 %v2157, 7
    %v2159 = vsub.s32 0, %v2158
    %v2160 = vrot.slane %v2155, %v2159
    %v2161 = vlaneseq
    %v2162 = vshrl.u32 %v2161, 7
    %v2163 = vsub.s32 1, %v2162
    %v2164 = vrot.slane %v2155, %v2163
    %v2165 = vlaneseq
    %v2166 = vshrl.u32 %v2165, 7
    %v2167 = vsub.s32 2, %v2166
    %v2168 = vrot.slane %v2155, %v2167
    %v2169 = vlaneseq
    %v2170 = vshrl.u32 %v2169, 7
    %v2171 = vsub.s32 3, %v2170
    %v2172 = vrot.slane %v2155, %v2171
    %v2177 = vadd.f32 %v2150, %v2160
    %v2178 = vadd.f32 %v2151, %v2164
    %v2179 = vadd.f32 %v2152, %v2168
    %v2180 = vadd.f32 %v2153, %v2172
    %v2181 = vmax.f32 %v2177, 0.0
    %v2182 = vmax.f32 %v2178, 0.0
    %v2183 = vmax.f32 %v2179, 0.0
    %v2184 = vmax.f32 %v2180, 0.0
    %s2185 = scalar_lea.vmem [#allocation5], 2560
    %v2186 = vld [vmem:[%s2185] sm:$0xff]
    %v2187 = vld [vmem:[%s2185 + $0x8] sm:$0xff]
    %v2188 = vld [vmem:[%s2185 + $0x10] sm:$0xff]
    %v2189 = vld [vmem:[%s2185 + $0x18] sm:$0xff]
    %v2190 = vld [vmem:[%s2185 + $0x20] sm:$0xff]
    %v2191 = vld [vmem:[%s2185 + $0x28] sm:$0xff]
    %v2192 = vld [vmem:[%s2185 + $0x30] sm:$0xff]
    %v2193 = vld [vmem:[%s2185 + $0x38] sm:$0xff]
    %v2194 = vld [vmem:[%s2185 + $0x40] sm:$0xff]
    %v2195 = vld [vmem:[%s2185 + $0x48] sm:$0xff]
    %v2196 = vld [vmem:[%s2185 + $0x50] sm:$0xff]
    %v2197 = vld [vmem:[%s2185 + $0x58] sm:$0xff]
    %v2198 = vld [vmem:[%s2185 + $0x60] sm:$0xff]
    %v2199 = vld [vmem:[%s2185 + $0x68] sm:$0xff]
    %v2200 = vld [vmem:[%s2185 + $0x70] sm:$0xff]
    %v2201 = vld [vmem:[%s2185 + $0x78] sm:$0xff]
    %v2202 = vld [vmem:[%s2185 + $0x80] sm:$0xff]
    %v2203 = vld [vmem:[%s2185 + $0x88] sm:$0xff]
    %v2204 = vld [vmem:[%s2185 + $0x90] sm:$0xff]
    %v2205 = vld [vmem:[%s2185 + $0x98] sm:$0xff]
    %v2206 = vld [vmem:[%s2185 + $0xa0] sm:$0xff]
    %v2207 = vld [vmem:[%s2185 + $0xa8] sm:$0xff]
    %v2208 = vld [vmem:[%s2185 + $0xb0] sm:$0xff]
    %v2209 = vld [vmem:[%s2185 + $0xb8] sm:$0xff]
    %v2210 = vld [vmem:[%s2185 + $0xc0] sm:$0xff]
    %v2211 = vld [vmem:[%s2185 + $0xc8] sm:$0xff]
    %v2212 = vld [vmem:[%s2185 + $0xd0] sm:$0xff]
    %v2213 = vld [vmem:[%s2185 + $0xd8] sm:$0xff]
    %v2214 = vld [vmem:[%s2185 + $0xe0] sm:$0xff]
    %v2215 = vld [vmem:[%s2185 + $0xe8] sm:$0xff]
    %v2216 = vld [vmem:[%s2185 + $0xf0] sm:$0xff]
    %v2217 = vld [vmem:[%s2185 + $0xf8] sm:$0xff]
    %v2218 = vld [vmem:[%s2185 + $0x100] sm:$0xff]
    %v2219 = vld [vmem:[%s2185 + $0x108] sm:$0xff]
    %v2220 = vld [vmem:[%s2185 + $0x110] sm:$0xff]
    %v2221 = vld [vmem:[%s2185 + $0x118] sm:$0xff]
    %v2222 = vld [vmem:[%s2185 + $0x120] sm:$0xff]
    %v2223 = vld [vmem:[%s2185 + $0x128] sm:$0xff]
    %v2224 = vld [vmem:[%s2185 + $0x130] sm:$0xff]
    %v2225 = vld [vmem:[%s2185 + $0x138] sm:$0xff]
    %v2226 = vld [vmem:[%s2185 + $0x140] sm:$0xff]
    %v2227 = vld [vmem:[%s2185 + $0x148] sm:$0xff]
    %v2228 = vld [vmem:[%s2185 + $0x150] sm:$0xff]
    %v2229 = vld [vmem:[%s2185 + $0x158] sm:$0xff]
    %v2230 = vld [vmem:[%s2185 + $0x160] sm:$0xff]
    %v2231 = vld [vmem:[%s2185 + $0x168] sm:$0xff]
    %v2232 = vld [vmem:[%s2185 + $0x170] sm:$0xff]
    %v2233 = vld [vmem:[%s2185 + $0x178] sm:$0xff]
    %v2234 = vld [vmem:[%s2185 + $0x180] sm:$0xff]
    %v2235 = vld [vmem:[%s2185 + $0x188] sm:$0xff]
    %v2236 = vld [vmem:[%s2185 + $0x190] sm:$0xff]
    %v2237 = vld [vmem:[%s2185 + $0x198] sm:$0xff]
    %v2238 = vld [vmem:[%s2185 + $0x1a0] sm:$0xff]
    %v2239 = vld [vmem:[%s2185 + $0x1a8] sm:$0xff]
    %v2240 = vld [vmem:[%s2185 + $0x1b0] sm:$0xff]
    %v2241 = vld [vmem:[%s2185 + $0x1b8] sm:$0xff]
    %v2242 = vld [vmem:[%s2185 + $0x1c0] sm:$0xff]
    %v2243 = vld [vmem:[%s2185 + $0x1c8] sm:$0xff]
    %v2244 = vld [vmem:[%s2185 + $0x1d0] sm:$0xff]
    %v2245 = vld [vmem:[%s2185 + $0x1d8] sm:$0xff]
    %v2246 = vld [vmem:[%s2185 + $0x1e0] sm:$0xff]
    %v2247 = vld [vmem:[%s2185 + $0x1e8] sm:$0xff]
    %v2248 = vld [vmem:[%s2185 + $0x1f0] sm:$0xff]
    %v2249 = vld [vmem:[%s2185 + $0x1f8] sm:$0xff]
    %v2250 = vunpack.c.l.s8.bf16 %v2186
    %v2251 = vunpack.c.l.s8.bf16 %v2187
    %v2252 = vunpack.c.l.s8.bf16 %v2188
    %v2253 = vunpack.c.l.s8.bf16 %v2189
    %v2254 = vunpack.c.h.s8.bf16 %v2186
    %v2255 = vunpack.c.h.s8.bf16 %v2187
    %v2256 = vunpack.c.h.s8.bf16 %v2188
    %v2257 = vunpack.c.h.s8.bf16 %v2189
    %v2258 = vunpack.c.l.s8.bf16 %v2190
    %v2259 = vunpack.c.l.s8.bf16 %v2191
    %v2260 = vunpack.c.l.s8.bf16 %v2192
    %v2261 = vunpack.c.l.s8.bf16 %v2193
    %v2262 = vunpack.c.h.s8.bf16 %v2190
    %v2263 = vunpack.c.h.s8.bf16 %v2191
    %v2264 = vunpack.c.h.s8.bf16 %v2192
    %v2265 = vunpack.c.h.s8.bf16 %v2193
    %v2266 = vunpack.c.l.s8.bf16 %v2194
    %v2267 = vunpack.c.l.s8.bf16 %v2195
    %v2268 = vunpack.c.l.s8.bf16 %v2196
    %v2269 = vunpack.c.l.s8.bf16 %v2197
    %v2270 = vunpack.c.h.s8.bf16 %v2194
    %v2271 = vunpack.c.h.s8.bf16 %v2195
    %v2272 = vunpack.c.h.s8.bf16 %v2196
    %v2273 = vunpack.c.h.s8.bf16 %v2197
    %v2274 = vunpack.c.l.s8.bf16 %v2198
    %v2275 = vunpack.c.l.s8.bf16 %v2199
    %v2276 = vunpack.c.l.s8.bf16 %v2200
    %v2277 = vunpack.c.l.s8.bf16 %v2201
    %v2278 = vunpack.c.h.s8.bf16 %v2198
    %v2279 = vunpack.c.h.s8.bf16 %v2199
    %v2280 = vunpack.c.h.s8.bf16 %v2200
    %v2281 = vunpack.c.h.s8.bf16 %v2201
    %v2282 = vunpack.c.l.s8.bf16 %v2202
    %v2283 = vunpack.c.l.s8.bf16 %v2203
    %v2284 = vunpack.c.l.s8.bf16 %v2204
    %v2285 = vunpack.c.l.s8.bf16 %v2205
    %v2286 = vunpack.c.h.s8.bf16 %v2202
    %v2287 = vunpack.c.h.s8.bf16 %v2203
    %v2288 = vunpack.c.h.s8.bf16 %v2204
    %v2289 = vunpack.c.h.s8.bf16 %v2205
    %v2290 = vunpack.c.l.s8.bf16 %v2206
    %v2291 = vunpack.c.l.s8.bf16 %v2207
    %v2292 = vunpack.c.l.s8.bf16 %v2208
    %v2293 = vunpack.c.l.s8.bf16 %v2209
    %v2294 = vunpack.c.h.s8.bf16 %v2206
    %v2295 = vunpack.c.h.s8.bf16 %v2207
    %v2296 = vunpack.c.h.s8.bf16 %v2208
    %v2297 = vunpack.c.h.s8.bf16 %v2209
    %v2298 = vunpack.c.l.s8.bf16 %v2210
    %v2299 = vunpack.c.l.s8.bf16 %v2211
    %v2300 = vunpack.c.l.s8.bf16 %v2212
    %v2301 = vunpack.c.l.s8.bf16 %v2213
    %v2302 = vunpack.c.h.s8.bf16 %v2210
    %v2303 = vunpack.c.h.s8.bf16 %v2211
    %v2304 = vunpack.c.h.s8.bf16 %v2212
    %v2305 = vunpack.c.h.s8.bf16 %v2213
    %v2306 = vunpack.c.l.s8.bf16 %v2214
    %v2307 = vunpack.c.l.s8.bf16 %v2215
    %v2308 = vunpack.c.l.s8.bf16 %v2216
    %v2309 = vunpack.c.l.s8.bf16 %v2217
    %v2310 = vunpack.c.h.s8.bf16 %v2214
    %v2311 = vunpack.c.h.s8.bf16 %v2215
    %v2312 = vunpack.c.h.s8.bf16 %v2216
    %v2313 = vunpack.c.h.s8.bf16 %v2217
    %v2314 = vunpack.c.l.s8.bf16 %v2218
    %v2315 = vunpack.c.l.s8.bf16 %v2219
    %v2316 = vunpack.c.l.s8.bf16 %v2220
    %v2317 = vunpack.c.l.s8.bf16 %v2221
    %v2318 = vunpack.c.h.s8.bf16 %v2218
    %v2319 = vunpack.c.h.s8.bf16 %v2219
    %v2320 = vunpack.c.h.s8.bf16 %v2220
    %v2321 = vunpack.c.h.s8.bf16 %v2221
    %v2322 = vunpack.c.l.s8.bf16 %v2222
    %v2323 = vunpack.c.l.s8.bf16 %v2223
    %v2324 = vunpack.c.l.s8.bf16 %v2224
    %v2325 = vunpack.c.l.s8.bf16 %v2225
    %v2326 = vunpack.c.h.s8.bf16 %v2222
    %v2327 = vunpack.c.h.s8.bf16 %v2223
    %v2328 = vunpack.c.h.s8.bf16 %v2224
    %v2329 = vunpack.c.h.s8.bf16 %v2225
    %v2330 = vunpack.c.l.s8.bf16 %v2226
    %v2331 = vunpack.c.l.s8.bf16 %v2227
    %v2332 = vunpack.c.l.s8.bf16 %v2228
    %v2333 = vunpack.c.l.s8.bf16 %v2229
    %v2334 = vunpack.c.h.s8.bf16 %v2226
    %v2335 = vunpack.c.h.s8.bf16 %v2227
    %v2336 = vunpack.c.h.s8.bf16 %v2228
    %v2337 = vunpack.c.h.s8.bf16 %v2229
    %v2338 = vunpack.c.l.s8.bf16 %v2230
    %v2339 = vunpack.c.l.s8.bf16 %v2231
    %v2340 = vunpack.c.l.s8.bf16 %v2232
    %v2341 = vunpack.c.l.s8.bf16 %v2233
    %v2342 = vunpack.c.h.s8.bf16 %v2230
    %v2343 = vunpack.c.h.s8.bf16 %v2231
    %v2344 = vunpack.c.h.s8.bf16 %v2232
    %v2345 = vunpack.c.h.s8.bf16 %v2233
    %v2346 = vunpack.c.l.s8.bf16 %v2234
    %v2347 = vunpack.c.l.s8.bf16 %v2235
    %v2348 = vunpack.c.l.s8.bf16 %v2236
    %v2349 = vunpack.c.l.s8.bf16 %v2237
    %v2350 = vunpack.c.h.s8.bf16 %v2234
    %v2351 = vunpack.c.h.s8.bf16 %v2235
    %v2352 = vunpack.c.h.s8.bf16 %v2236
    %v2353 = vunpack.c.h.s8.bf16 %v2237
    %v2354 = vunpack.c.l.s8.bf16 %v2238
    %v2355 = vunpack.c.l.s8.bf16 %v2239
    %v2356 = vunpack.c.l.s8.bf16 %v2240
    %v2357 = vunpack.c.l.s8.bf16 %v2241
    %v2358 = vunpack.c.h.s8.bf16 %v2238
    %v2359 = vunpack.c.h.s8.bf16 %v2239
    %v2360 = vunpack.c.h.s8.bf16 %v2240
    %v2361 = vunpack.c.h.s8.bf16 %v2241
    %v2362 = vunpack.c.l.s8.bf16 %v2242
    %v2363 = vunpack.c.l.s8.bf16 %v2243
    %v2364 = vunpack.c.l.s8.bf16 %v2244
    %v2365 = vunpack.c.l.s8.bf16 %v2245
    %v2366 = vunpack.c.h.s8.bf16 %v2242
    %v2367 = vunpack.c.h.s8.bf16 %v2243
    %v2368 = vunpack.c.h.s8.bf16 %v2244
    %v2369 = vunpack.c.h.s8.bf16 %v2245
    %v2370 = vunpack.c.l.s8.bf16 %v2246
    %v2371 = vunpack.c.l.s8.bf16 %v2247
    %v2372 = vunpack.c.l.s8.bf16 %v2248
    %v2373 = vunpack.c.l.s8.bf16 %v2249
    %v2374 = vunpack.c.h.s8.bf16 %v2246
    %v2375 = vunpack.c.h.s8.bf16 %v2247
    %v2376 = vunpack.c.h.s8.bf16 %v2248
    %v2377 = vunpack.c.h.s8.bf16 %v2249
    %v2378 = vpack.c.bf16 %v2181, %v2181
    %v2379 = vpack.c.bf16 %v2182, %v2182
    %v2380 = vpack.c.bf16 %v2183, %v2183
    %v2381 = vpack.c.bf16 %v2184, %v2184
    %2382 = vmatprep.subr.bf16.mxu0 %v2279
    %2383 = vmatpush1.bf16.msra.mxu0 %v2278
    %2384 = vmatprep.subr.bf16.mxu0 %v2275
    %2385 = vmatpush1.bf16.msra.mxu0 %v2274
    %2386 = vmatprep.subr.bf16.mxu0 %v2271
    %2387 = vmatpush1.bf16.msra.mxu0 %v2270
    %2388 = vmatprep.subr.bf16.mxu0 %v2267
    %2389 = vmatpush1.bf16.msra.mxu0 %v2266
    %2390 = vmatprep.subr.bf16.mxu0 %v2263
    %2391 = vmatpush1.bf16.msra.mxu0 %v2262
    %2392 = vmatprep.subr.bf16.mxu0 %v2259
    %2393 = vmatpush1.bf16.msra.mxu0 %v2258
    %2394 = vmatprep.subr.bf16.mxu0 %v2255
    %2395 = vmatpush1.bf16.msra.mxu0 %v2254
    %2396 = vmatprep.subr.bf16.mxu0 %v2251
    %2397 = vmatpush1.bf16.msra.mxu0 %v2250
    %2398 = vmatprep.subr.bf16.mxu0 %v2311
    %2399 = vmatpush2.bf16.msra.mxu0 %v2310
    %2400 = vmatprep.subr.bf16.mxu0 %v2307
    %2401 = vmatpush2.bf16.msra.mxu0 %v2306
    %2402 = vmatprep.subr.bf16.mxu0 %v2303
    %2403 = vmatpush2.bf16.msra.mxu0 %v2302
    %2404 = vmatprep.subr.bf16.mxu0 %v2299
    %2405 = vmatpush2.bf16.msra.mxu0 %v2298
    %2406 = vmatprep.subr.bf16.mxu0 %v2295
    %2407 = vmatpush2.bf16.msra.mxu0 %v2294
    %2408 = vmatprep.subr.bf16.mxu0 %v2291
    %2409 = vmatpush2.bf16.msra.mxu0 %v2290
    %2410 = vmatprep.subr.bf16.mxu0 %v2287
    %2411 = vmatpush2.bf16.msra.mxu0 %v2286
    %2412 = vmatprep.subr.bf16.mxu0 %v2283
    %2413 = vmatpush2.bf16.msra.mxu0 %v2282
    %2414 = vmatprep.mubr.bf16.mxu0 %v2379
    %2415 = vmatmul.mubr.bf16.gmra.mxu0 %v2378
    %v2416 = vpop.f32.mrf.mxu0
    %v2417 = vadd.f32 0.0, %v2416
    %v2418 = vpop.f32.mrf.mxu0
    %v2419 = vadd.f32 0.0, %v2418
    %v2420 = vpop.f32.mrf.mxu0
    %v2421 = vpop.f32.mrf.mxu0
    %2422 = vdwg.mxu0
    %2423 = vmatprep.subr.bf16.mxu0 %v2343
    %2424 = vmatpush1.bf16.msra.mxu0 %v2342
    %2425 = vmatprep.subr.bf16.mxu0 %v2339
    %2426 = vmatpush1.bf16.msra.mxu0 %v2338
    %2427 = vmatprep.subr.bf16.mxu0 %v2335
    %2428 = vmatpush1.bf16.msra.mxu0 %v2334
    %2429 = vmatprep.subr.bf16.mxu0 %v2331
    %2430 = vmatpush1.bf16.msra.mxu0 %v2330
    %2431 = vmatprep.subr.bf16.mxu0 %v2327
    %2432 = vmatpush1.bf16.msra.mxu0 %v2326
    %2433 = vmatprep.subr.bf16.mxu0 %v2323
    %2434 = vmatpush1.bf16.msra.mxu0 %v2322
    %2435 = vmatprep.subr.bf16.mxu0 %v2319
    %2436 = vmatpush1.bf16.msra.mxu0 %v2318
    %2437 = vmatprep.subr.bf16.mxu0 %v2315
    %2438 = vmatpush1.bf16.msra.mxu0 %v2314
    %2439 = vmatprep.subr.bf16.mxu0 %v2375
    %2440 = vmatpush2.bf16.msra.mxu0 %v2374
    %2441 = vmatprep.subr.bf16.mxu0 %v2371
    %2442 = vmatpush2.bf16.msra.mxu0 %v2370
    %2443 = vmatprep.subr.bf16.mxu0 %v2367
    %2444 = vmatpush2.bf16.msra.mxu0 %v2366
    %2445 = vmatprep.subr.bf16.mxu0 %v2363
    %2446 = vmatpush2.bf16.msra.mxu0 %v2362
    %2447 = vmatprep.subr.bf16.mxu0 %v2359
    %2448 = vmatpush2.bf16.msra.mxu0 %v2358
    %2449 = vmatprep.subr.bf16.mxu0 %v2355
    %2450 = vmatpush2.bf16.msra.mxu0 %v2354
    %2451 = vmatprep.subr.bf16.mxu0 %v2351
    %2452 = vmatpush2.bf16.msra.mxu0 %v2350
    %2453 = vmatprep.subr.bf16.mxu0 %v2347
    %2454 = vmatpush2.bf16.msra.mxu0 %v2346
    %2455 = vmatprep.mubr.bf16.mxu0 %v2381
    %2456 = vmatmul.mubr.bf16.gmra.mxu0 %v2380
    %v2457 = vpop.f32.mrf.mxu0
    %v2458 = vadd.f32 %v2417, %v2457
    %v2459 = vpop.f32.mrf.mxu0
    %v2460 = vadd.f32 %v2419, %v2459
    %v2461 = vpop.f32.mrf.mxu0
    %v2462 = vpop.f32.mrf.mxu0
    %2463 = vdwg.mxu0
    %2464 = vmatprep.subr.bf16.mxu0 %v2281
    %2465 = vmatpush1.bf16.msra.mxu0 %v2280
    %2466 = vmatprep.subr.bf16.mxu0 %v2277
    %2467 = vmatpush1.bf16.msra.mxu0 %v2276
    %2468 = vmatprep.subr.bf16.mxu0 %v2273
    %2469 = vmatpush1.bf16.msra.mxu0 %v2272
    %2470 = vmatprep.subr.bf16.mxu0 %v2269
    %2471 = vmatpush1.bf16.msra.mxu0 %v2268
    %2472 = vmatprep.subr.bf16.mxu0 %v2265
    %2473 = vmatpush1.bf16.msra.mxu0 %v2264
    %2474 = vmatprep.subr.bf16.mxu0 %v2261
    %2475 = vmatpush1.bf16.msra.mxu0 %v2260
    %2476 = vmatprep.subr.bf16.mxu0 %v2257
    %2477 = vmatpush1.bf16.msra.mxu0 %v2256
    %2478 = vmatprep.subr.bf16.mxu0 %v2253
    %2479 = vmatpush1.bf16.msra.mxu0 %v2252
    %2480 = vmatprep.subr.bf16.mxu0 %v2313
    %2481 = vmatpush2.bf16.msra.mxu0 %v2312
    %2482 = vmatprep.subr.bf16.mxu0 %v2309
    %2483 = vmatpush2.bf16.msra.mxu0 %v2308
    %2484 = vmatprep.subr.bf16.mxu0 %v2305
    %2485 = vmatpush2.bf16.msra.mxu0 %v2304
    %2486 = vmatprep.subr.bf16.mxu0 %v2301
    %2487 = vmatpush2.bf16.msra.mxu0 %v2300
    %2488 = vmatprep.subr.bf16.mxu0 %v2297
    %2489 = vmatpush2.bf16.msra.mxu0 %v2296
    %2490 = vmatprep.subr.bf16.mxu0 %v2293
    %2491 = vmatpush2.bf16.msra.mxu0 %v2292
    %2492 = vmatprep.subr.bf16.mxu0 %v2289
    %2493 = vmatpush2.bf16.msra.mxu0 %v2288
    %2494 = vmatprep.subr.bf16.mxu0 %v2285
    %2495 = vmatpush2.bf16.msra.mxu0 %v2284
    %2496 = vmatprep.mubr.bf16.mxu0 %v2379
    %2497 = vmatmul.mubr.bf16.gmra.mxu0 %v2378
    %v2498 = vpop.f32.mrf.mxu0
    %v2499 = vadd.f32 0.0, %v2498
    %v2500 = vpop.f32.mrf.mxu0
    %v2501 = vadd.f32 0.0, %v2500
    %v2502 = vpop.f32.mrf.mxu0
    %v2503 = vpop.f32.mrf.mxu0
    %2504 = vdwg.mxu0
    %2505 = vmatprep.subr.bf16.mxu0 %v2345
    %2506 = vmatpush1.bf16.msra.mxu0 %v2344
    %2507 = vmatprep.subr.bf16.mxu0 %v2341
    %2508 = vmatpush1.bf16.msra.mxu0 %v2340
    %2509 = vmatprep.subr.bf16.mxu0 %v2337
    %2510 = vmatpush1.bf16.msra.mxu0 %v2336
    %2511 = vmatprep.subr.bf16.mxu0 %v2333
    %2512 = vmatpush1.bf16.msra.mxu0 %v2332
    %2513 = vmatprep.subr.bf16.mxu0 %v2329
    %2514 = vmatpush1.bf16.msra.mxu0 %v2328
    %2515 = vmatprep.subr.bf16.mxu0 %v2325
    %2516 = vmatpush1.bf16.msra.mxu0 %v2324
    %2517 = vmatprep.subr.bf16.mxu0 %v2321
    %2518 = vmatpush1.bf16.msra.mxu0 %v2320
    %2519 = vmatprep.subr.bf16.mxu0 %v2317
    %2520 = vmatpush1.bf16.msra.mxu0 %v2316
    %2521 = vmatprep.subr.bf16.mxu0 %v2377
    %2522 = vmatpush2.bf16.msra.mxu0 %v2376
    %2523 = vmatprep.subr.bf16.mxu0 %v2373
    %2524 = vmatpush2.bf16.msra.mxu0 %v2372
    %2525 = vmatprep.subr.bf16.mxu0 %v2369
    %2526 = vmatpush2.bf16.msra.mxu0 %v2368
    %2527 = vmatprep.subr.bf16.mxu0 %v2365
    %2528 = vmatpush2.bf16.msra.mxu0 %v2364
    %2529 = vmatprep.subr.bf16.mxu0 %v2361
    %2530 = vmatpush2.bf16.msra.mxu0 %v2360
    %2531 = vmatprep.subr.bf16.mxu0 %v2357
    %2532 = vmatpush2.bf16.msra.mxu0 %v2356
    %2533 = vmatprep.subr.bf16.mxu0 %v2353
    %2534 = vmatpush2.bf16.msra.mxu0 %v2352
    %2535 = vmatprep.subr.bf16.mxu0 %v2349
    %2536 = vmatpush2.bf16.msra.mxu0 %v2348
    %2537 = vmatprep.mubr.bf16.mxu0 %v2381
    %2538 = vmatmul.mubr.bf16.gmra.mxu0 %v2380
    %v2539 = vpop.f32.mrf.mxu0
    %v2540 = vadd.f32 %v2499, %v2539
    %v2541 = vpop.f32.mrf.mxu0
    %v2542 = vadd.f32 %v2501, %v2541
    %v2543 = vpop.f32.mrf.mxu0
    %v2544 = vpop.f32.mrf.mxu0
    %2545 = vdwg.mxu0
    %s2546 = scalar_lea.vmem [#allocation7], 20
    %v2547 = vld [vmem:[%s2546] sm:$0xf]
    %v2549 = vlaneseq
    %v2550 = vshrl.u32 %v2549, 7
    %v2551 = vsub.s32 0, %v2550
    %v2552 = vrot.slane %v2547, %v2551
    %v2553 = vlaneseq
    %v2554 = vshrl.u32 %v2553, 7
    %v2555 = vsub.s32 1, %v2554
    %v2556 = vrot.slane %v2547, %v2555
    %v2557 = vlaneseq
    %v2558 = vshrl.u32 %v2557, 7
    %v2559 = vsub.s32 2, %v2558
    %v2560 = vrot.slane %v2547, %v2559
    %v2561 = vlaneseq
    %v2562 = vshrl.u32 %v2561, 7
    %v2563 = vsub.s32 3, %v2562
    %v2564 = vrot.slane %v2547, %v2563
    %v2569 = vmul.f32 %v2458, %v2552
    %v2570 = vmul.f32 %v2460, %v2556
    %v2571 = vmul.f32 %v2540, %v2560
    %v2572 = vmul.f32 %v2542, %v2564
    %s2573 = scalar_lea.vmem [#allocation8], 20
    %v2574 = vld [vmem:[%s2573] sm:$0xf]
    %v2576 = vlaneseq
    %v2577 = vshrl.u32 %v2576, 7
    %v2578 = vsub.s32 0, %v2577
    %v2579 = vrot.slane %v2574, %v2578
    %v2580 = vlaneseq
    %v2581 = vshrl.u32 %v2580, 7
    %v2582 = vsub.s32 1, %v2581
    %v2583 = vrot.slane %v2574, %v2582
    %v2584 = vlaneseq
    %v2585 = vshrl.u32 %v2584, 7
    %v2586 = vsub.s32 2, %v2585
    %v2587 = vrot.slane %v2574, %v2586
    %v2588 = vlaneseq
    %v2589 = vshrl.u32 %v2588, 7
    %v2590 = vsub.s32 3, %v2589
    %v2591 = vrot.slane %v2574, %v2590
    %v2596 = vadd.f32 %v2569, %v2579
    %v2597 = vadd.f32 %v2570, %v2583
    %v2598 = vadd.f32 %v2571, %v2587
    %v2599 = vadd.f32 %v2572, %v2591
    %v2600 = vmax.f32 %v2596, 0.0
    %v2601 = vmax.f32 %v2597, 0.0
    %v2602 = vmax.f32 %v2598, 0.0
    %v2603 = vmax.f32 %v2599, 0.0
    %s2604 = scalar_lea.vmem [#allocation5], 3072
    %v2605 = vld [vmem:[%s2604] sm:$0xff]
    %v2606 = vld [vmem:[%s2604 + $0x8] sm:$0xff]
    %v2607 = vld [vmem:[%s2604 + $0x10] sm:$0xff]
    %v2608 = vld [vmem:[%s2604 + $0x18] sm:$0xff]
    %v2609 = vld [vmem:[%s2604 + $0x20] sm:$0xff]
    %v2610 = vld [vmem:[%s2604 + $0x28] sm:$0xff]
    %v2611 = vld [vmem:[%s2604 + $0x30] sm:$0xff]
    %v2612 = vld [vmem:[%s2604 + $0x38] sm:$0xff]
    %v2613 = vld [vmem:[%s2604 + $0x40] sm:$0xff]
    %v2614 = vld [vmem:[%s2604 + $0x48] sm:$0xff]
    %v2615 = vld [vmem:[%s2604 + $0x50] sm:$0xff]
    %v2616 = vld [vmem:[%s2604 + $0x58] sm:$0xff]
    %v2617 = vld [vmem:[%s2604 + $0x60] sm:$0xff]
    %v2618 = vld [vmem:[%s2604 + $0x68] sm:$0xff]
    %v2619 = vld [vmem:[%s2604 + $0x70] sm:$0xff]
    %v2620 = vld [vmem:[%s2604 + $0x78] sm:$0xff]
    %v2621 = vld [vmem:[%s2604 + $0x80] sm:$0xff]
    %v2622 = vld [vmem:[%s2604 + $0x88] sm:$0xff]
    %v2623 = vld [vmem:[%s2604 + $0x90] sm:$0xff]
    %v2624 = vld [vmem:[%s2604 + $0x98] sm:$0xff]
    %v2625 = vld [vmem:[%s2604 + $0xa0] sm:$0xff]
    %v2626 = vld [vmem:[%s2604 + $0xa8] sm:$0xff]
    %v2627 = vld [vmem:[%s2604 + $0xb0] sm:$0xff]
    %v2628 = vld [vmem:[%s2604 + $0xb8] sm:$0xff]
    %v2629 = vld [vmem:[%s2604 + $0xc0] sm:$0xff]
    %v2630 = vld [vmem:[%s2604 + $0xc8] sm:$0xff]
    %v2631 = vld [vmem:[%s2604 + $0xd0] sm:$0xff]
    %v2632 = vld [vmem:[%s2604 + $0xd8] sm:$0xff]
    %v2633 = vld [vmem:[%s2604 + $0xe0] sm:$0xff]
    %v2634 = vld [vmem:[%s2604 + $0xe8] sm:$0xff]
    %v2635 = vld [vmem:[%s2604 + $0xf0] sm:$0xff]
    %v2636 = vld [vmem:[%s2604 + $0xf8] sm:$0xff]
    %v2637 = vld [vmem:[%s2604 + $0x100] sm:$0xff]
    %v2638 = vld [vmem:[%s2604 + $0x108] sm:$0xff]
    %v2639 = vld [vmem:[%s2604 + $0x110] sm:$0xff]
    %v2640 = vld [vmem:[%s2604 + $0x118] sm:$0xff]
    %v2641 = vld [vmem:[%s2604 + $0x120] sm:$0xff]
    %v2642 = vld [vmem:[%s2604 + $0x128] sm:$0xff]
    %v2643 = vld [vmem:[%s2604 + $0x130] sm:$0xff]
    %v2644 = vld [vmem:[%s2604 + $0x138] sm:$0xff]
    %v2645 = vld [vmem:[%s2604 + $0x140] sm:$0xff]
    %v2646 = vld [vmem:[%s2604 + $0x148] sm:$0xff]
    %v2647 = vld [vmem:[%s2604 + $0x150] sm:$0xff]
    %v2648 = vld [vmem:[%s2604 + $0x158] sm:$0xff]
    %v2649 = vld [vmem:[%s2604 + $0x160] sm:$0xff]
    %v2650 = vld [vmem:[%s2604 + $0x168] sm:$0xff]
    %v2651 = vld [vmem:[%s2604 + $0x170] sm:$0xff]
    %v2652 = vld [vmem:[%s2604 + $0x178] sm:$0xff]
    %v2653 = vld [vmem:[%s2604 + $0x180] sm:$0xff]
    %v2654 = vld [vmem:[%s2604 + $0x188] sm:$0xff]
    %v2655 = vld [vmem:[%s2604 + $0x190] sm:$0xff]
    %v2656 = vld [vmem:[%s2604 + $0x198] sm:$0xff]
    %v2657 = vld [vmem:[%s2604 + $0x1a0] sm:$0xff]
    %v2658 = vld [vmem:[%s2604 + $0x1a8] sm:$0xff]
    %v2659 = vld [vmem:[%s2604 + $0x1b0] sm:$0xff]
    %v2660 = vld [vmem:[%s2604 + $0x1b8] sm:$0xff]
    %v2661 = vld [vmem:[%s2604 + $0x1c0] sm:$0xff]
    %v2662 = vld [vmem:[%s2604 + $0x1c8] sm:$0xff]
    %v2663 = vld [vmem:[%s2604 + $0x1d0] sm:$0xff]
    %v2664 = vld [vmem:[%s2604 + $0x1d8] sm:$0xff]
    %v2665 = vld [vmem:[%s2604 + $0x1e0] sm:$0xff]
    %v2666 = vld [vmem:[%s2604 + $0x1e8] sm:$0xff]
    %v2667 = vld [vmem:[%s2604 + $0x1f0] sm:$0xff]
    %v2668 = vld [vmem:[%s2604 + $0x1f8] sm:$0xff]
    %v2669 = vunpack.c.l.s8.bf16 %v2605
    %v2670 = vunpack.c.l.s8.bf16 %v2606
    %v2671 = vunpack.c.l.s8.bf16 %v2607
    %v2672 = vunpack.c.l.s8.bf16 %v2608
    %v2673 = vunpack.c.h.s8.bf16 %v2605
    %v2674 = vunpack.c.h.s8.bf16 %v2606
    %v2675 = vunpack.c.h.s8.bf16 %v2607
    %v2676 = vunpack.c.h.s8.bf16 %v2608
    %v2677 = vunpack.c.l.s8.bf16 %v2609
    %v2678 = vunpack.c.l.s8.bf16 %v2610
    %v2679 = vunpack.c.l.s8.bf16 %v2611
    %v2680 = vunpack.c.l.s8.bf16 %v2612
    %v2681 = vunpack.c.h.s8.bf16 %v2609
    %v2682 = vunpack.c.h.s8.bf16 %v2610
    %v2683 = vunpack.c.h.s8.bf16 %v2611
    %v2684 = vunpack.c.h.s8.bf16 %v2612
    %v2685 = vunpack.c.l.s8.bf16 %v2613
    %v2686 = vunpack.c.l.s8.bf16 %v2614
    %v2687 = vunpack.c.l.s8.bf16 %v2615
    %v2688 = vunpack.c.l.s8.bf16 %v2616
    %v2689 = vunpack.c.h.s8.bf16 %v2613
    %v2690 = vunpack.c.h.s8.bf16 %v2614
    %v2691 = vunpack.c.h.s8.bf16 %v2615
    %v2692 = vunpack.c.h.s8.bf16 %v2616
    %v2693 = vunpack.c.l.s8.bf16 %v2617
    %v2694 = vunpack.c.l.s8.bf16 %v2618
    %v2695 = vunpack.c.l.s8.bf16 %v2619
    %v2696 = vunpack.c.l.s8.bf16 %v2620
    %v2697 = vunpack.c.h.s8.bf16 %v2617
    %v2698 = vunpack.c.h.s8.bf16 %v2618
    %v2699 = vunpack.c.h.s8.bf16 %v2619
    %v2700 = vunpack.c.h.s8.bf16 %v2620
    %v2701 = vunpack.c.l.s8.bf16 %v2621
    %v2702 = vunpack.c.l.s8.bf16 %v2622
    %v2703 = vunpack.c.l.s8.bf16 %v2623
    %v2704 = vunpack.c.l.s8.bf16 %v2624
    %v2705 = vunpack.c.h.s8.bf16 %v2621
    %v2706 = vunpack.c.h.s8.bf16 %v2622
    %v2707 = vunpack.c.h.s8.bf16 %v2623
    %v2708 = vunpack.c.h.s8.bf16 %v2624
    %v2709 = vunpack.c.l.s8.bf16 %v2625
    %v2710 = vunpack.c.l.s8.bf16 %v2626
    %v2711 = vunpack.c.l.s8.bf16 %v2627
    %v2712 = vunpack.c.l.s8.bf16 %v2628
    %v2713 = vunpack.c.h.s8.bf16 %v2625
    %v2714 = vunpack.c.h.s8.bf16 %v2626
    %v2715 = vunpack.c.h.s8.bf16 %v2627
    %v2716 = vunpack.c.h.s8.bf16 %v2628
    %v2717 = vunpack.c.l.s8.bf16 %v2629
    %v2718 = vunpack.c.l.s8.bf16 %v2630
    %v2719 = vunpack.c.l.s8.bf16 %v2631
    %v2720 = vunpack.c.l.s8.bf16 %v2632
    %v2721 = vunpack.c.h.s8.bf16 %v2629
    %v2722 = vunpack.c.h.s8.bf16 %v2630
    %v2723 = vunpack.c.h.s8.bf16 %v2631
    %v2724 = vunpack.c.h.s8.bf16 %v2632
    %v2725 = vunpack.c.l.s8.bf16 %v2633
    %v2726 = vunpack.c.l.s8.bf16 %v2634
    %v2727 = vunpack.c.l.s8.bf16 %v2635
    %v2728 = vunpack.c.l.s8.bf16 %v2636
    %v2729 = vunpack.c.h.s8.bf16 %v2633
    %v2730 = vunpack.c.h.s8.bf16 %v2634
    %v2731 = vunpack.c.h.s8.bf16 %v2635
    %v2732 = vunpack.c.h.s8.bf16 %v2636
    %v2733 = vunpack.c.l.s8.bf16 %v2637
    %v2734 = vunpack.c.l.s8.bf16 %v2638
    %v2735 = vunpack.c.l.s8.bf16 %v2639
    %v2736 = vunpack.c.l.s8.bf16 %v2640
    %v2737 = vunpack.c.h.s8.bf16 %v2637
    %v2738 = vunpack.c.h.s8.bf16 %v2638
    %v2739 = vunpack.c.h.s8.bf16 %v2639
    %v2740 = vunpack.c.h.s8.bf16 %v2640
    %v2741 = vunpack.c.l.s8.bf16 %v2641
    %v2742 = vunpack.c.l.s8.bf16 %v2642
    %v2743 = vunpack.c.l.s8.bf16 %v2643
    %v2744 = vunpack.c.l.s8.bf16 %v2644
    %v2745 = vunpack.c.h.s8.bf16 %v2641
    %v2746 = vunpack.c.h.s8.bf16 %v2642
    %v2747 = vunpack.c.h.s8.bf16 %v2643
    %v2748 = vunpack.c.h.s8.bf16 %v2644
    %v2749 = vunpack.c.l.s8.bf16 %v2645
    %v2750 = vunpack.c.l.s8.bf16 %v2646
    %v2751 = vunpack.c.l.s8.bf16 %v2647
    %v2752 = vunpack.c.l.s8.bf16 %v2648
    %v2753 = vunpack.c.h.s8.bf16 %v2645
    %v2754 = vunpack.c.h.s8.bf16 %v2646
    %v2755 = vunpack.c.h.s8.bf16 %v2647
    %v2756 = vunpack.c.h.s8.bf16 %v2648
    %v2757 = vunpack.c.l.s8.bf16 %v2649
    %v2758 = vunpack.c.l.s8.bf16 %v2650
    %v2759 = vunpack.c.l.s8.bf16 %v2651
    %v2760 = vunpack.c.l.s8.bf16 %v2652
    %v2761 = vunpack.c.h.s8.bf16 %v2649
    %v2762 = vunpack.c.h.s8.bf16 %v2650
    %v2763 = vunpack.c.h.s8.bf16 %v2651
    %v2764 = vunpack.c.h.s8.bf16 %v2652
    %v2765 = vunpack.c.l.s8.bf16 %v2653
    %v2766 = vunpack.c.l.s8.bf16 %v2654
    %v2767 = vunpack.c.l.s8.bf16 %v2655
    %v2768 = vunpack.c.l.s8.bf16 %v2656
    %v2769 = vunpack.c.h.s8.bf16 %v2653
    %v2770 = vunpack.c.h.s8.bf16 %v2654
    %v2771 = vunpack.c.h.s8.bf16 %v2655
    %v2772 = vunpack.c.h.s8.bf16 %v2656
    %v2773 = vunpack.c.l.s8.bf16 %v2657
    %v2774 = vunpack.c.l.s8.bf16 %v2658
    %v2775 = vunpack.c.l.s8.bf16 %v2659
    %v2776 = vunpack.c.l.s8.bf16 %v2660
    %v2777 = vunpack.c.h.s8.bf16 %v2657
    %v2778 = vunpack.c.h.s8.bf16 %v2658
    %v2779 = vunpack.c.h.s8.bf16 %v2659
    %v2780 = vunpack.c.h.s8.bf16 %v2660
    %v2781 = vunpack.c.l.s8.bf16 %v2661
    %v2782 = vunpack.c.l.s8.bf16 %v2662
    %v2783 = vunpack.c.l.s8.bf16 %v2663
    %v2784 = vunpack.c.l.s8.bf16 %v2664
    %v2785 = vunpack.c.h.s8.bf16 %v2661
    %v2786 = vunpack.c.h.s8.bf16 %v2662
    %v2787 = vunpack.c.h.s8.bf16 %v2663
    %v2788 = vunpack.c.h.s8.bf16 %v2664
    %v2789 = vunpack.c.l.s8.bf16 %v2665
    %v2790 = vunpack.c.l.s8.bf16 %v2666
    %v2791 = vunpack.c.l.s8.bf16 %v2667
    %v2792 = vunpack.c.l.s8.bf16 %v2668
    %v2793 = vunpack.c.h.s8.bf16 %v2665
    %v2794 = vunpack.c.h.s8.bf16 %v2666
    %v2795 = vunpack.c.h.s8.bf16 %v2667
    %v2796 = vunpack.c.h.s8.bf16 %v2668
    %v2797 = vpack.c.bf16 %v2600, %v2600
    %v2798 = vpack.c.bf16 %v2601, %v2601
    %v2799 = vpack.c.bf16 %v2602, %v2602
    %v2800 = vpack.c.bf16 %v2603, %v2603
    %2801 = vmatprep.subr.bf16.mxu0 %v2698
    %2802 = vmatpush1.bf16.msra.mxu0 %v2697
    %2803 = vmatprep.subr.bf16.mxu0 %v2694
    %2804 = vmatpush1.bf16.msra.mxu0 %v2693
    %2805 = vmatprep.subr.bf16.mxu0 %v2690
    %2806 = vmatpush1.bf16.msra.mxu0 %v2689
    %2807 = vmatprep.subr.bf16.mxu0 %v2686
    %2808 = vmatpush1.bf16.msra.mxu0 %v2685
    %2809 = vmatprep.subr.bf16.mxu0 %v2682
    %2810 = vmatpush1.bf16.msra.mxu0 %v2681
    %2811 = vmatprep.subr.bf16.mxu0 %v2678
    %2812 = vmatpush1.bf16.msra.mxu0 %v2677
    %2813 = vmatprep.subr.bf16.mxu0 %v2674
    %2814 = vmatpush1.bf16.msra.mxu0 %v2673
    %2815 = vmatprep.subr.bf16.mxu0 %v2670
    %2816 = vmatpush1.bf16.msra.mxu0 %v2669
    %2817 = vmatprep.subr.bf16.mxu0 %v2730
    %2818 = vmatpush2.bf16.msra.mxu0 %v2729
    %2819 = vmatprep.subr.bf16.mxu0 %v2726
    %2820 = vmatpush2.bf16.msra.mxu0 %v2725
    %2821 = vmatprep.subr.bf16.mxu0 %v2722
    %2822 = vmatpush2.bf16.msra.mxu0 %v2721
    %2823 = vmatprep.subr.bf16.mxu0 %v2718
    %2824 = vmatpush2.bf16.msra.mxu0 %v2717
    %2825 = vmatprep.subr.bf16.mxu0 %v2714
    %2826 = vmatpush2.bf16.msra.mxu0 %v2713
    %2827 = vmatprep.subr.bf16.mxu0 %v2710
    %2828 = vmatpush2.bf16.msra.mxu0 %v2709
    %2829 = vmatprep.subr.bf16.mxu0 %v2706
    %2830 = vmatpush2.bf16.msra.mxu0 %v2705
    %2831 = vmatprep.subr.bf16.mxu0 %v2702
    %2832 = vmatpush2.bf16.msra.mxu0 %v2701
    %2833 = vmatprep.mubr.bf16.mxu0 %v2798
    %2834 = vmatmul.mubr.bf16.gmra.mxu0 %v2797
    %v2835 = vpop.f32.mrf.mxu0
    %v2836 = vadd.f32 0.0, %v2835
    %v2837 = vpop.f32.mrf.mxu0
    %v2838 = vadd.f32 0.0, %v2837
    %v2839 = vpop.f32.mrf.mxu0
    %v2840 = vpop.f32.mrf.mxu0
    %2841 = vdwg.mxu0
    %2842 = vmatprep.subr.bf16.mxu0 %v2762
    %2843 = vmatpush1.bf16.msra.mxu0 %v2761
    %2844 = vmatprep.subr.bf16.mxu0 %v2758
    %2845 = vmatpush1.bf16.msra.mxu0 %v2757
    %2846 = vmatprep.subr.bf16.mxu0 %v2754
    %2847 = vmatpush1.bf16.msra.mxu0 %v2753
    %2848 = vmatprep.subr.bf16.mxu0 %v2750
    %2849 = vmatpush1.bf16.msra.mxu0 %v2749
    %2850 = vmatprep.subr.bf16.mxu0 %v2746
    %2851 = vmatpush1.bf16.msra.mxu0 %v2745
    %2852 = vmatprep.subr.bf16.mxu0 %v2742
    %2853 = vmatpush1.bf16.msra.mxu0 %v2741
    %2854 = vmatprep.subr.bf16.mxu0 %v2738
    %2855 = vmatpush1.bf16.msra.mxu0 %v2737
    %2856 = vmatprep.subr.bf16.mxu0 %v2734
    %2857 = vmatpush1.bf16.msra.mxu0 %v2733
    %2858 = vmatprep.subr.bf16.mxu0 %v2794
    %2859 = vmatpush2.bf16.msra.mxu0 %v2793
    %2860 = vmatprep.subr.bf16.mxu0 %v2790
    %2861 = vmatpush2.bf16.msra.mxu0 %v2789
    %2862 = vmatprep.subr.bf16.mxu0 %v2786
    %2863 = vmatpush2.bf16.msra.mxu0 %v2785
    %2864 = vmatprep.subr.bf16.mxu0 %v2782
    %2865 = vmatpush2.bf16.msra.mxu0 %v2781
    %2866 = vmatprep.subr.bf16.mxu0 %v2778
    %2867 = vmatpush2.bf16.msra.mxu0 %v2777
    %2868 = vmatprep.subr.bf16.mxu0 %v2774
    %2869 = vmatpush2.bf16.msra.mxu0 %v2773
    %2870 = vmatprep.subr.bf16.mxu0 %v2770
    %2871 = vmatpush2.bf16.msra.mxu0 %v2769
    %2872 = vmatprep.subr.bf16.mxu0 %v2766
    %2873 = vmatpush2.bf16.msra.mxu0 %v2765
    %2874 = vmatprep.mubr.bf16.mxu0 %v2800
    %2875 = vmatmul.mubr.bf16.gmra.mxu0 %v2799
    %v2876 = vpop.f32.mrf.mxu0
    %v2877 = vadd.f32 %v2836, %v2876
    %v2878 = vpop.f32.mrf.mxu0
    %v2879 = vadd.f32 %v2838, %v2878
    %v2880 = vpop.f32.mrf.mxu0
    %v2881 = vpop.f32.mrf.mxu0
    %2882 = vdwg.mxu0
    %2883 = vmatprep.subr.bf16.mxu0 %v2700
    %2884 = vmatpush1.bf16.msra.mxu0 %v2699
    %2885 = vmatprep.subr.bf16.mxu0 %v2696
    %2886 = vmatpush1.bf16.msra.mxu0 %v2695
    %2887 = vmatprep.subr.bf16.mxu0 %v2692
    %2888 = vmatpush1.bf16.msra.mxu0 %v2691
    %2889 = vmatprep.subr.bf16.mxu0 %v2688
    %2890 = vmatpush1.bf16.msra.mxu0 %v2687
    %2891 = vmatprep.subr.bf16.mxu0 %v2684
    %2892 = vmatpush1.bf16.msra.mxu0 %v2683
    %2893 = vmatprep.subr.bf16.mxu0 %v2680
    %2894 = vmatpush1.bf16.msra.mxu0 %v2679
    %2895 = vmatprep.subr.bf16.mxu0 %v2676
    %2896 = vmatpush1.bf16.msra.mxu0 %v2675
    %2897 = vmatprep.subr.bf16.mxu0 %v2672
    %2898 = vmatpush1.bf16.msra.mxu0 %v2671
    %2899 = vmatprep.subr.bf16.mxu0 %v2732
    %2900 = vmatpush2.bf16.msra.mxu0 %v2731
    %2901 = vmatprep.subr.bf16.mxu0 %v2728
    %2902 = vmatpush2.bf16.msra.mxu0 %v2727
    %2903 = vmatprep.subr.bf16.mxu0 %v2724
    %2904 = vmatpush2.bf16.msra.mxu0 %v2723
    %2905 = vmatprep.subr.bf16.mxu0 %v2720
    %2906 = vmatpush2.bf16.msra.mxu0 %v2719
    %2907 = vmatprep.subr.bf16.mxu0 %v2716
    %2908 = vmatpush2.bf16.msra.mxu0 %v2715
    %2909 = vmatprep.subr.bf16.mxu0 %v2712
    %2910 = vmatpush2.bf16.msra.mxu0 %v2711
    %2911 = vmatprep.subr.bf16.mxu0 %v2708
    %2912 = vmatpush2.bf16.msra.mxu0 %v2707
    %2913 = vmatprep.subr.bf16.mxu0 %v2704
    %2914 = vmatpush2.bf16.msra.mxu0 %v2703
    %2915 = vmatprep.mubr.bf16.mxu0 %v2798
    %2916 = vmatmul.mubr.bf16.gmra.mxu0 %v2797
    %v2917 = vpop.f32.mrf.mxu0
    %v2918 = vadd.f32 0.0, %v2917
    %v2919 = vpop.f32.mrf.mxu0
    %v2920 = vadd.f32 0.0, %v2919
    %v2921 = vpop.f32.mrf.mxu0
    %v2922 = vpop.f32.mrf.mxu0
    %2923 = vdwg.mxu0
    %2924 = vmatprep.subr.bf16.mxu0 %v2764
    %2925 = vmatpush1.bf16.msra.mxu0 %v2763
    %2926 = vmatprep.subr.bf16.mxu0 %v2760
    %2927 = vmatpush1.bf16.msra.mxu0 %v2759
    %2928 = vmatprep.subr.bf16.mxu0 %v2756
    %2929 = vmatpush1.bf16.msra.mxu0 %v2755
    %2930 = vmatprep.subr.bf16.mxu0 %v2752
    %2931 = vmatpush1.bf16.msra.mxu0 %v2751
    %2932 = vmatprep.subr.bf16.mxu0 %v2748
    %2933 = vmatpush1.bf16.msra.mxu0 %v2747
    %2934 = vmatprep.subr.bf16.mxu0 %v2744
    %2935 = vmatpush1.bf16.msra.mxu0 %v2743
    %2936 = vmatprep.subr.bf16.mxu0 %v2740
    %2937 = vmatpush1.bf16.msra.mxu0 %v2739
    %2938 = vmatprep.subr.bf16.mxu0 %v2736
    %2939 = vmatpush1.bf16.msra.mxu0 %v2735
    %2940 = vmatprep.subr.bf16.mxu0 %v2796
    %2941 = vmatpush2.bf16.msra.mxu0 %v2795
    %2942 = vmatprep.subr.bf16.mxu0 %v2792
    %2943 = vmatpush2.bf16.msra.mxu0 %v2791
    %2944 = vmatprep.subr.bf16.mxu0 %v2788
    %2945 = vmatpush2.bf16.msra.mxu0 %v2787
    %2946 = vmatprep.subr.bf16.mxu0 %v2784
    %2947 = vmatpush2.bf16.msra.mxu0 %v2783
    %2948 = vmatprep.subr.bf16.mxu0 %v2780
    %2949 = vmatpush2.bf16.msra.mxu0 %v2779
    %2950 = vmatprep.subr.bf16.mxu0 %v2776
    %2951 = vmatpush2.bf16.msra.mxu0 %v2775
    %2952 = vmatprep.subr.bf16.mxu0 %v2772
    %2953 = vmatpush2.bf16.msra.mxu0 %v2771
    %2954 = vmatprep.subr.bf16.mxu0 %v2768
    %2955 = vmatpush2.bf16.msra.mxu0 %v2767
    %2956 = vmatprep.mubr.bf16.mxu0 %v2800
    %2957 = vmatmul.mubr.bf16.gmra.mxu0 %v2799
    %v2958 = vpop.f32.mrf.mxu0
    %v2959 = vadd.f32 %v2918, %v2958
    %v2960 = vpop.f32.mrf.mxu0
    %v2961 = vadd.f32 %v2920, %v2960
    %v2962 = vpop.f32.mrf.mxu0
    %v2963 = vpop.f32.mrf.mxu0
    %2964 = vdwg.mxu0
    %s2965 = scalar_lea.vmem [#allocation7], 24
    %v2966 = vld [vmem:[%s2965] sm:$0xf]
    %v2968 = vlaneseq
    %v2969 = vshrl.u32 %v2968, 7
    %v2970 = vsub.s32 0, %v2969
    %v2971 = vrot.slane %v2966, %v2970
    %v2972 = vlaneseq
    %v2973 = vshrl.u32 %v2972, 7
    %v2974 = vsub.s32 1, %v2973
    %v2975 = vrot.slane %v2966, %v2974
    %v2976 = vlaneseq
    %v2977 = vshrl.u32 %v2976, 7
    %v2978 = vsub.s32 2, %v2977
    %v2979 = vrot.slane %v2966, %v2978
    %v2980 = vlaneseq
    %v2981 = vshrl.u32 %v2980, 7
    %v2982 = vsub.s32 3, %v2981
    %v2983 = vrot.slane %v2966, %v2982
    %v2988 = vmul.f32 %v2877, %v2971
    %v2989 = vmul.f32 %v2879, %v2975
    %v2990 = vmul.f32 %v2959, %v2979
    %v2991 = vmul.f32 %v2961, %v2983
    %s2992 = scalar_lea.vmem [#allocation8], 24
    %v2993 = vld [vmem:[%s2992] sm:$0xf]
    %v2995 = vlaneseq
    %v2996 = vshrl.u32 %v2995, 7
    %v2997 = vsub.s32 0, %v2996
    %v2998 = vrot.slane %v2993, %v2997
    %v2999 = vlaneseq
    %v3000 = vshrl.u32 %v2999, 7
    %v3001 = vsub.s32 1, %v3000
    %v3002 = vrot.slane %v2993, %v3001
    %v3003 = vlaneseq
    %v3004 = vshrl.u32 %v3003, 7
    %v3005 = vsub.s32 2, %v3004
    %v3006 = vrot.slane %v2993, %v3005
    %v3007 = vlaneseq
    %v3008 = vshrl.u32 %v3007, 7
    %v3009 = vsub.s32 3, %v3008
    %v3010 = vrot.slane %v2993, %v3009
    %v3015 = vadd.f32 %v2988, %v2998
    %v3016 = vadd.f32 %v2989, %v3002
    %v3017 = vadd.f32 %v2990, %v3006
    %v3018 = vadd.f32 %v2991, %v3010
    %v3019 = vmax.f32 %v3015, 0.0
    %v3020 = vmax.f32 %v3016, 0.0
    %v3021 = vmax.f32 %v3017, 0.0
    %v3022 = vmax.f32 %v3018, 0.0
    %s3023 = scalar_lea.vmem [#allocation5], 3584
    %v3024 = vld [vmem:[%s3023] sm:$0xff]
    %v3025 = vld [vmem:[%s3023 + $0x8] sm:$0xff]
    %v3026 = vld [vmem:[%s3023 + $0x10] sm:$0xff]
    %v3027 = vld [vmem:[%s3023 + $0x18] sm:$0xff]
    %v3028 = vld [vmem:[%s3023 + $0x20] sm:$0xff]
    %v3029 = vld [vmem:[%s3023 + $0x28] sm:$0xff]
    %v3030 = vld [vmem:[%s3023 + $0x30] sm:$0xff]
    %v3031 = vld [vmem:[%s3023 + $0x38] sm:$0xff]
    %v3032 = vld [vmem:[%s3023 + $0x40] sm:$0xff]
    %v3033 = vld [vmem:[%s3023 + $0x48] sm:$0xff]
    %v3034 = vld [vmem:[%s3023 + $0x50] sm:$0xff]
    %v3035 = vld [vmem:[%s3023 + $0x58] sm:$0xff]
    %v3036 = vld [vmem:[%s3023 + $0x60] sm:$0xff]
    %v3037 = vld [vmem:[%s3023 + $0x68] sm:$0xff]
    %v3038 = vld [vmem:[%s3023 + $0x70] sm:$0xff]
    %v3039 = vld [vmem:[%s3023 + $0x78] sm:$0xff]
    %v3040 = vld [vmem:[%s3023 + $0x80] sm:$0xff]
    %v3041 = vld [vmem:[%s3023 + $0x88] sm:$0xff]
    %v3042 = vld [vmem:[%s3023 + $0x90] sm:$0xff]
    %v3043 = vld [vmem:[%s3023 + $0x98] sm:$0xff]
    %v3044 = vld [vmem:[%s3023 + $0xa0] sm:$0xff]
    %v3045 = vld [vmem:[%s3023 + $0xa8] sm:$0xff]
    %v3046 = vld [vmem:[%s3023 + $0xb0] sm:$0xff]
    %v3047 = vld [vmem:[%s3023 + $0xb8] sm:$0xff]
    %v3048 = vld [vmem:[%s3023 + $0xc0] sm:$0xff]
    %v3049 = vld [vmem:[%s3023 + $0xc8] sm:$0xff]
    %v3050 = vld [vmem:[%s3023 + $0xd0] sm:$0xff]
    %v3051 = vld [vmem:[%s3023 + $0xd8] sm:$0xff]
    %v3052 = vld [vmem:[%s3023 + $0xe0] sm:$0xff]
    %v3053 = vld [vmem:[%s3023 + $0xe8] sm:$0xff]
    %v3054 = vld [vmem:[%s3023 + $0xf0] sm:$0xff]
    %v3055 = vld [vmem:[%s3023 + $0xf8] sm:$0xff]
    %v3056 = vld [vmem:[%s3023 + $0x100] sm:$0xff]
    %v3057 = vld [vmem:[%s3023 + $0x108] sm:$0xff]
    %v3058 = vld [vmem:[%s3023 + $0x110] sm:$0xff]
    %v3059 = vld [vmem:[%s3023 + $0x118] sm:$0xff]
    %v3060 = vld [vmem:[%s3023 + $0x120] sm:$0xff]
    %v3061 = vld [vmem:[%s3023 + $0x128] sm:$0xff]
    %v3062 = vld [vmem:[%s3023 + $0x130] sm:$0xff]
    %v3063 = vld [vmem:[%s3023 + $0x138] sm:$0xff]
    %v3064 = vld [vmem:[%s3023 + $0x140] sm:$0xff]
    %v3065 = vld [vmem:[%s3023 + $0x148] sm:$0xff]
    %v3066 = vld [vmem:[%s3023 + $0x150] sm:$0xff]
    %v3067 = vld [vmem:[%s3023 + $0x158] sm:$0xff]
    %v3068 = vld [vmem:[%s3023 + $0x160] sm:$0xff]
    %v3069 = vld [vmem:[%s3023 + $0x168] sm:$0xff]
    %v3070 = vld [vmem:[%s3023 + $0x170] sm:$0xff]
    %v3071 = vld [vmem:[%s3023 + $0x178] sm:$0xff]
    %v3072 = vld [vmem:[%s3023 + $0x180] sm:$0xff]
    %v3073 = vld [vmem:[%s3023 + $0x188] sm:$0xff]
    %v3074 = vld [vmem:[%s3023 + $0x190] sm:$0xff]
    %v3075 = vld [vmem:[%s3023 + $0x198] sm:$0xff]
    %v3076 = vld [vmem:[%s3023 + $0x1a0] sm:$0xff]
    %v3077 = vld [vmem:[%s3023 + $0x1a8] sm:$0xff]
    %v3078 = vld [vmem:[%s3023 + $0x1b0] sm:$0xff]
    %v3079 = vld [vmem:[%s3023 + $0x1b8] sm:$0xff]
    %v3080 = vld [vmem:[%s3023 + $0x1c0] sm:$0xff]
    %v3081 = vld [vmem:[%s3023 + $0x1c8] sm:$0xff]
    %v3082 = vld [vmem:[%s3023 + $0x1d0] sm:$0xff]
    %v3083 = vld [vmem:[%s3023 + $0x1d8] sm:$0xff]
    %v3084 = vld [vmem:[%s3023 + $0x1e0] sm:$0xff]
    %v3085 = vld [vmem:[%s3023 + $0x1e8] sm:$0xff]
    %v3086 = vld [vmem:[%s3023 + $0x1f0] sm:$0xff]
    %v3087 = vld [vmem:[%s3023 + $0x1f8] sm:$0xff]
    %v3088 = vunpack.c.l.s8.bf16 %v3024
    %v3089 = vunpack.c.l.s8.bf16 %v3025
    %v3090 = vunpack.c.l.s8.bf16 %v3026
    %v3091 = vunpack.c.l.s8.bf16 %v3027
    %v3092 = vunpack.c.h.s8.bf16 %v3024
    %v3093 = vunpack.c.h.s8.bf16 %v3025
    %v3094 = vunpack.c.h.s8.bf16 %v3026
    %v3095 = vunpack.c.h.s8.bf16 %v3027
    %v3096 = vunpack.c.l.s8.bf16 %v3028
    %v3097 = vunpack.c.l.s8.bf16 %v3029
    %v3098 = vunpack.c.l.s8.bf16 %v3030
    %v3099 = vunpack.c.l.s8.bf16 %v3031
    %v3100 = vunpack.c.h.s8.bf16 %v3028
    %v3101 = vunpack.c.h.s8.bf16 %v3029
    %v3102 = vunpack.c.h.s8.bf16 %v3030
    %v3103 = vunpack.c.h.s8.bf16 %v3031
    %v3104 = vunpack.c.l.s8.bf16 %v3032
    %v3105 = vunpack.c.l.s8.bf16 %v3033
    %v3106 = vunpack.c.l.s8.bf16 %v3034
    %v3107 = vunpack.c.l.s8.bf16 %v3035
    %v3108 = vunpack.c.h.s8.bf16 %v3032
    %v3109 = vunpack.c.h.s8.bf16 %v3033
    %v3110 = vunpack.c.h.s8.bf16 %v3034
    %v3111 = vunpack.c.h.s8.bf16 %v3035
    %v3112 = vunpack.c.l.s8.bf16 %v3036
    %v3113 = vunpack.c.l.s8.bf16 %v3037
    %v3114 = vunpack.c.l.s8.bf16 %v3038
    %v3115 = vunpack.c.l.s8.bf16 %v3039
    %v3116 = vunpack.c.h.s8.bf16 %v3036
    %v3117 = vunpack.c.h.s8.bf16 %v3037
    %v3118 = vunpack.c.h.s8.bf16 %v3038
    %v3119 = vunpack.c.h.s8.bf16 %v3039
    %v3120 = vunpack.c.l.s8.bf16 %v3040
    %v3121 = vunpack.c.l.s8.bf16 %v3041
    %v3122 = vunpack.c.l.s8.bf16 %v3042
    %v3123 = vunpack.c.l.s8.bf16 %v3043
    %v3124 = vunpack.c.h.s8.bf16 %v3040
    %v3125 = vunpack.c.h.s8.bf16 %v3041
    %v3126 = vunpack.c.h.s8.bf16 %v3042
    %v3127 = vunpack.c.h.s8.bf16 %v3043
    %v3128 = vunpack.c.l.s8.bf16 %v3044
    %v3129 = vunpack.c.l.s8.bf16 %v3045
    %v3130 = vunpack.c.l.s8.bf16 %v3046
    %v3131 = vunpack.c.l.s8.bf16 %v3047
    %v3132 = vunpack.c.h.s8.bf16 %v3044
    %v3133 = vunpack.c.h.s8.bf16 %v3045
    %v3134 = vunpack.c.h.s8.bf16 %v3046
    %v3135 = vunpack.c.h.s8.bf16 %v3047
    %v3136 = vunpack.c.l.s8.bf16 %v3048
    %v3137 = vunpack.c.l.s8.bf16 %v3049
    %v3138 = vunpack.c.l.s8.bf16 %v3050
    %v3139 = vunpack.c.l.s8.bf16 %v3051
    %v3140 = vunpack.c.h.s8.bf16 %v3048
    %v3141 = vunpack.c.h.s8.bf16 %v3049
    %v3142 = vunpack.c.h.s8.bf16 %v3050
    %v3143 = vunpack.c.h.s8.bf16 %v3051
    %v3144 = vunpack.c.l.s8.bf16 %v3052
    %v3145 = vunpack.c.l.s8.bf16 %v3053
    %v3146 = vunpack.c.l.s8.bf16 %v3054
    %v3147 = vunpack.c.l.s8.bf16 %v3055
    %v3148 = vunpack.c.h.s8.bf16 %v3052
    %v3149 = vunpack.c.h.s8.bf16 %v3053
    %v3150 = vunpack.c.h.s8.bf16 %v3054
    %v3151 = vunpack.c.h.s8.bf16 %v3055
    %v3152 = vunpack.c.l.s8.bf16 %v3056
    %v3153 = vunpack.c.l.s8.bf16 %v3057
    %v3154 = vunpack.c.l.s8.bf16 %v3058
    %v3155 = vunpack.c.l.s8.bf16 %v3059
    %v3156 = vunpack.c.h.s8.bf16 %v3056
    %v3157 = vunpack.c.h.s8.bf16 %v3057
    %v3158 = vunpack.c.h.s8.bf16 %v3058
    %v3159 = vunpack.c.h.s8.bf16 %v3059
    %v3160 = vunpack.c.l.s8.bf16 %v3060
    %v3161 = vunpack.c.l.s8.bf16 %v3061
    %v3162 = vunpack.c.l.s8.bf16 %v3062
    %v3163 = vunpack.c.l.s8.bf16 %v3063
    %v3164 = vunpack.c.h.s8.bf16 %v3060
    %v3165 = vunpack.c.h.s8.bf16 %v3061
    %v3166 = vunpack.c.h.s8.bf16 %v3062
    %v3167 = vunpack.c.h.s8.bf16 %v3063
    %v3168 = vunpack.c.l.s8.bf16 %v3064
    %v3169 = vunpack.c.l.s8.bf16 %v3065
    %v3170 = vunpack.c.l.s8.bf16 %v3066
    %v3171 = vunpack.c.l.s8.bf16 %v3067
    %v3172 = vunpack.c.h.s8.bf16 %v3064
    %v3173 = vunpack.c.h.s8.bf16 %v3065
    %v3174 = vunpack.c.h.s8.bf16 %v3066
    %v3175 = vunpack.c.h.s8.bf16 %v3067
    %v3176 = vunpack.c.l.s8.bf16 %v3068
    %v3177 = vunpack.c.l.s8.bf16 %v3069
    %v3178 = vunpack.c.l.s8.bf16 %v3070
    %v3179 = vunpack.c.l.s8.bf16 %v3071
    %v3180 = vunpack.c.h.s8.bf16 %v3068
    %v3181 = vunpack.c.h.s8.bf16 %v3069
    %v3182 = vunpack.c.h.s8.bf16 %v3070
    %v3183 = vunpack.c.h.s8.bf16 %v3071
    %v3184 = vunpack.c.l.s8.bf16 %v3072
    %v3185 = vunpack.c.l.s8.bf16 %v3073
    %v3186 = vunpack.c.l.s8.bf16 %v3074
    %v3187 = vunpack.c.l.s8.bf16 %v3075
    %v3188 = vunpack.c.h.s8.bf16 %v3072
    %v3189 = vunpack.c.h.s8.bf16 %v3073
    %v3190 = vunpack.c.h.s8.bf16 %v3074
    %v3191 = vunpack.c.h.s8.bf16 %v3075
    %v3192 = vunpack.c.l.s8.bf16 %v3076
    %v3193 = vunpack.c.l.s8.bf16 %v3077
    %v3194 = vunpack.c.l.s8.bf16 %v3078
    %v3195 = vunpack.c.l.s8.bf16 %v3079
    %v3196 = vunpack.c.h.s8.bf16 %v3076
    %v3197 = vunpack.c.h.s8.bf16 %v3077
    %v3198 = vunpack.c.h.s8.bf16 %v3078
    %v3199 = vunpack.c.h.s8.bf16 %v3079
    %v3200 = vunpack.c.l.s8.bf16 %v3080
    %v3201 = vunpack.c.l.s8.bf16 %v3081
    %v3202 = vunpack.c.l.s8.bf16 %v3082
    %v3203 = vunpack.c.l.s8.bf16 %v3083
    %v3204 = vunpack.c.h.s8.bf16 %v3080
    %v3205 = vunpack.c.h.s8.bf16 %v3081
    %v3206 = vunpack.c.h.s8.bf16 %v3082
    %v3207 = vunpack.c.h.s8.bf16 %v3083
    %v3208 = vunpack.c.l.s8.bf16 %v3084
    %v3209 = vunpack.c.l.s8.bf16 %v3085
    %v3210 = vunpack.c.l.s8.bf16 %v3086
    %v3211 = vunpack.c.l.s8.bf16 %v3087
    %v3212 = vunpack.c.h.s8.bf16 %v3084
    %v3213 = vunpack.c.h.s8.bf16 %v3085
    %v3214 = vunpack.c.h.s8.bf16 %v3086
    %v3215 = vunpack.c.h.s8.bf16 %v3087
    %v3216 = vpack.c.bf16 %v3019, %v3019
    %v3217 = vpack.c.bf16 %v3020, %v3020
    %v3218 = vpack.c.bf16 %v3021, %v3021
    %v3219 = vpack.c.bf16 %v3022, %v3022
    %3220 = vmatprep.subr.bf16.mxu0 %v3117
    %3221 = vmatpush1.bf16.msra.mxu0 %v3116
    %3222 = vmatprep.subr.bf16.mxu0 %v3113
    %3223 = vmatpush1.bf16.msra.mxu0 %v3112
    %3224 = vmatprep.subr.bf16.mxu0 %v3109
    %3225 = vmatpush1.bf16.msra.mxu0 %v3108
    %3226 = vmatprep.subr.bf16.mxu0 %v3105
    %3227 = vmatpush1.bf16.msra.mxu0 %v3104
    %3228 = vmatprep.subr.bf16.mxu0 %v3101
    %3229 = vmatpush1.bf16.msra.mxu0 %v3100
    %3230 = vmatprep.subr.bf16.mxu0 %v3097
    %3231 = vmatpush1.bf16.msra.mxu0 %v3096
    %3232 = vmatprep.subr.bf16.mxu0 %v3093
    %3233 = vmatpush1.bf16.msra.mxu0 %v3092
    %3234 = vmatprep.subr.bf16.mxu0 %v3089
    %3235 = vmatpush1.bf16.msra.mxu0 %v3088
    %3236 = vmatprep.subr.bf16.mxu0 %v3149
    %3237 = vmatpush2.bf16.msra.mxu0 %v3148
    %3238 = vmatprep.subr.bf16.mxu0 %v3145
    %3239 = vmatpush2.bf16.msra.mxu0 %v3144
    %3240 = vmatprep.subr.bf16.mxu0 %v3141
    %3241 = vmatpush2.bf16.msra.mxu0 %v3140
    %3242 = vmatprep.subr.bf16.mxu0 %v3137
    %3243 = vmatpush2.bf16.msra.mxu0 %v3136
    %3244 = vmatprep.subr.bf16.mxu0 %v3133
    %3245 = vmatpush2.bf16.msra.mxu0 %v3132
    %3246 = vmatprep.subr.bf16.mxu0 %v3129
    %3247 = vmatpush2.bf16.msra.mxu0 %v3128
    %3248 = vmatprep.subr.bf16.mxu0 %v3125
    %3249 = vmatpush2.bf16.msra.mxu0 %v3124
    %3250 = vmatprep.subr.bf16.mxu0 %v3121
    %3251 = vmatpush2.bf16.msra.mxu0 %v3120
    %3252 = vmatprep.mubr.bf16.mxu0 %v3217
    %3253 = vmatmul.mubr.bf16.gmra.mxu0 %v3216
    %v3254 = vpop.f32.mrf.mxu0
    %v3255 = vadd.f32 0.0, %v3254
    %v3256 = vpop.f32.mrf.mxu0
    %v3257 = vadd.f32 0.0, %v3256
    %v3258 = vpop.f32.mrf.mxu0
    %v3259 = vpop.f32.mrf.mxu0
    %3260 = vdwg.mxu0
    %3261 = vmatprep.subr.bf16.mxu0 %v3181
    %3262 = vmatpush1.bf16.msra.mxu0 %v3180
    %3263 = vmatprep.subr.bf16.mxu0 %v3177
    %3264 = vmatpush1.bf16.msra.mxu0 %v3176
    %3265 = vmatprep.subr.bf16.mxu0 %v3173
    %3266 = vmatpush1.bf16.msra.mxu0 %v3172
    %3267 = vmatprep.subr.bf16.mxu0 %v3169
    %3268 = vmatpush1.bf16.msra.mxu0 %v3168
    %3269 = vmatprep.subr.bf16.mxu0 %v3165
    %3270 = vmatpush1.bf16.msra.mxu0 %v3164
    %3271 = vmatprep.subr.bf16.mxu0 %v3161
    %3272 = vmatpush1.bf16.msra.mxu0 %v3160
    %3273 = vmatprep.subr.bf16.mxu0 %v3157
    %3274 = vmatpush1.bf16.msra.mxu0 %v3156
    %3275 = vmatprep.subr.bf16.mxu0 %v3153
    %3276 = vmatpush1.bf16.msra.mxu0 %v3152
    %3277 = vmatprep.subr.bf16.mxu0 %v3213
    %3278 = vmatpush2.bf16.msra.mxu0 %v3212
    %3279 = vmatprep.subr.bf16.mxu0 %v3209
    %3280 = vmatpush2.bf16.msra.mxu0 %v3208
    %3281 = vmatprep.subr.bf16.mxu0 %v3205
    %3282 = vmatpush2.bf16.msra.mxu0 %v3204
    %3283 = vmatprep.subr.bf16.mxu0 %v3201
    %3284 = vmatpush2.bf16.msra.mxu0 %v3200
    %3285 = vmatprep.subr.bf16.mxu0 %v3197
    %3286 = vmatpush2.bf16.msra.mxu0 %v3196
    %3287 = vmatprep.subr.bf16.mxu0 %v3193
    %3288 = vmatpush2.bf16.msra.mxu0 %v3192
    %3289 = vmatprep.subr.bf16.mxu0 %v3189
    %3290 = vmatpush2.bf16.msra.mxu0 %v3188
    %3291 = vmatprep.subr.bf16.mxu0 %v3185
    %3292 = vmatpush2.bf16.msra.mxu0 %v3184
    %3293 = vmatprep.mubr.bf16.mxu0 %v3219
    %3294 = vmatmul.mubr.bf16.gmra.mxu0 %v3218
    %v3295 = vpop.f32.mrf.mxu0
    %v3296 = vadd.f32 %v3255, %v3295
    %v3297 = vpop.f32.mrf.mxu0
    %v3298 = vadd.f32 %v3257, %v3297
    %v3299 = vpop.f32.mrf.mxu0
    %v3300 = vpop.f32.mrf.mxu0
    %3301 = vdwg.mxu0
    %3302 = vmatprep.subr.bf16.mxu0 %v3119
    %3303 = vmatpush1.bf16.msra.mxu0 %v3118
    %3304 = vmatprep.subr.bf16.mxu0 %v3115
    %3305 = vmatpush1.bf16.msra.mxu0 %v3114
    %3306 = vmatprep.subr.bf16.mxu0 %v3111
    %3307 = vmatpush1.bf16.msra.mxu0 %v3110
    %3308 = vmatprep.subr.bf16.mxu0 %v3107
    %3309 = vmatpush1.bf16.msra.mxu0 %v3106
    %3310 = vmatprep.subr.bf16.mxu0 %v3103
    %3311 = vmatpush1.bf16.msra.mxu0 %v3102
    %3312 = vmatprep.subr.bf16.mxu0 %v3099
    %3313 = vmatpush1.bf16.msra.mxu0 %v3098
    %3314 = vmatprep.subr.bf16.mxu0 %v3095
    %3315 = vmatpush1.bf16.msra.mxu0 %v3094
    %3316 = vmatprep.subr.bf16.mxu0 %v3091
    %3317 = vmatpush1.bf16.msra.mxu0 %v3090
    %3318 = vmatprep.subr.bf16.mxu0 %v3151
    %3319 = vmatpush2.bf16.msra.mxu0 %v3150
    %3320 = vmatprep.subr.bf16.mxu0 %v3147
    %3321 = vmatpush2.bf16.msra.mxu0 %v3146
    %3322 = vmatprep.subr.bf16.mxu0 %v3143
    %3323 = vmatpush2.bf16.msra.mxu0 %v3142
    %3324 = vmatprep.subr.bf16.mxu0 %v3139
    %3325 = vmatpush2.bf16.msra.mxu0 %v3138
    %3326 = vmatprep.subr.bf16.mxu0 %v3135
    %3327 = vmatpush2.bf16.msra.mxu0 %v3134
    %3328 = vmatprep.subr.bf16.mxu0 %v3131
    %3329 = vmatpush2.bf16.msra.mxu0 %v3130
    %3330 = vmatprep.subr.bf16.mxu0 %v3127
    %3331 = vmatpush2.bf16.msra.mxu0 %v3126
    %3332 = vmatprep.subr.bf16.mxu0 %v3123
    %3333 = vmatpush2.bf16.msra.mxu0 %v3122
    %3334 = vmatprep.mubr.bf16.mxu0 %v3217
    %3335 = vmatmul.mubr.bf16.gmra.mxu0 %v3216
    %v3336 = vpop.f32.mrf.mxu0
    %v3337 = vadd.f32 0.0, %v3336
    %v3338 = vpop.f32.mrf.mxu0
    %v3339 = vadd.f32 0.0, %v3338
    %v3340 = vpop.f32.mrf.mxu0
    %v3341 = vpop.f32.mrf.mxu0
    %3342 = vdwg.mxu0
    %3343 = vmatprep.subr.bf16.mxu0 %v3183
    %3344 = vmatpush1.bf16.msra.mxu0 %v3182
    %3345 = vmatprep.subr.bf16.mxu0 %v3179
    %3346 = vmatpush1.bf16.msra.mxu0 %v3178
    %3347 = vmatprep.subr.bf16.mxu0 %v3175
    %3348 = vmatpush1.bf16.msra.mxu0 %v3174
    %3349 = vmatprep.subr.bf16.mxu0 %v3171
    %3350 = vmatpush1.bf16.msra.mxu0 %v3170
    %3351 = vmatprep.subr.bf16.mxu0 %v3167
    %3352 = vmatpush1.bf16.msra.mxu0 %v3166
    %3353 = vmatprep.subr.bf16.mxu0 %v3163
    %3354 = vmatpush1.bf16.msra.mxu0 %v3162
    %3355 = vmatprep.subr.bf16.mxu0 %v3159
    %3356 = vmatpush1.bf16.msra.mxu0 %v3158
    %3357 = vmatprep.subr.bf16.mxu0 %v3155
    %3358 = vmatpush1.bf16.msra.mxu0 %v3154
    %3359 = vmatprep.subr.bf16.mxu0 %v3215
    %3360 = vmatpush2.bf16.msra.mxu0 %v3214
    %3361 = vmatprep.subr.bf16.mxu0 %v3211
    %3362 = vmatpush2.bf16.msra.mxu0 %v3210
    %3363 = vmatprep.subr.bf16.mxu0 %v3207
    %3364 = vmatpush2.bf16.msra.mxu0 %v3206
    %3365 = vmatprep.subr.bf16.mxu0 %v3203
    %3366 = vmatpush2.bf16.msra.mxu0 %v3202
    %3367 = vmatprep.subr.bf16.mxu0 %v3199
    %3368 = vmatpush2.bf16.msra.mxu0 %v3198
    %3369 = vmatprep.subr.bf16.mxu0 %v3195
    %3370 = vmatpush2.bf16.msra.mxu0 %v3194
    %3371 = vmatprep.subr.bf16.mxu0 %v3191
    %3372 = vmatpush2.bf16.msra.mxu0 %v3190
    %3373 = vmatprep.subr.bf16.mxu0 %v3187
    %3374 = vmatpush2.bf16.msra.mxu0 %v3186
    %3375 = vmatprep.mubr.bf16.mxu0 %v3219
    %3376 = vmatmul.mubr.bf16.gmra.mxu0 %v3218
    %v3377 = vpop.f32.mrf.mxu0
    %v3378 = vadd.f32 %v3337, %v3377
    %v3379 = vpop.f32.mrf.mxu0
    %v3380 = vadd.f32 %v3339, %v3379
    %v3381 = vpop.f32.mrf.mxu0
    %v3382 = vpop.f32.mrf.mxu0
    %3383 = vdwg.mxu0
    %s3384 = scalar_lea.vmem [#allocation7], 28
    %v3385 = vld [vmem:[%s3384] sm:$0xf]
    %v3387 = vlaneseq
    %v3388 = vshrl.u32 %v3387, 7
    %v3389 = vsub.s32 0, %v3388
    %v3390 = vrot.slane %v3385, %v3389
    %v3391 = vlaneseq
    %v3392 = vshrl.u32 %v3391, 7
    %v3393 = vsub.s32 1, %v3392
    %v3394 = vrot.slane %v3385, %v3393
    %v3395 = vlaneseq
    %v3396 = vshrl.u32 %v3395, 7
    %v3397 = vsub.s32 2, %v3396
    %v3398 = vrot.slane %v3385, %v3397
    %v3399 = vlaneseq
    %v3400 = vshrl.u32 %v3399, 7
    %v3401 = vsub.s32 3, %v3400
    %v3402 = vrot.slane %v3385, %v3401
    %v3407 = vmul.f32 %v3296, %v3390
    %v3408 = vmul.f32 %v3298, %v3394
    %v3409 = vmul.f32 %v3378, %v3398
    %v3410 = vmul.f32 %v3380, %v3402
    %s3411 = scalar_lea.vmem [#allocation8], 28
    %v3412 = vld [vmem:[%s3411] sm:$0xf]
    %v3414 = vlaneseq
    %v3415 = vshrl.u32 %v3414, 7
    %v3416 = vsub.s32 0, %v3415
    %v3417 = vrot.slane %v3412, %v3416
    %v3418 = vlaneseq
    %v3419 = vshrl.u32 %v3418, 7
    %v3420 = vsub.s32 1, %v3419
    %v3421 = vrot.slane %v3412, %v3420
    %v3422 = vlaneseq
    %v3423 = vshrl.u32 %v3422, 7
    %v3424 = vsub.s32 2, %v3423
    %v3425 = vrot.slane %v3412, %v3424
    %v3426 = vlaneseq
    %v3427 = vshrl.u32 %v3426, 7
    %v3428 = vsub.s32 3, %v3427
    %v3429 = vrot.slane %v3412, %v3428
    %v3434 = vadd.f32 %v3407, %v3417
    %v3435 = vadd.f32 %v3408, %v3421
    %v3436 = vadd.f32 %v3409, %v3425
    %v3437 = vadd.f32 %v3410, %v3429
    %v3438 = vmax.f32 %v3434, 0.0
    %v3439 = vmax.f32 %v3435, 0.0
    %v3440 = vmax.f32 %v3436, 0.0
    %v3441 = vmax.f32 %v3437, 0.0
    %s3442 = scalar_lea.vmem [#allocation5], 4096
    %v3443 = vld [vmem:[%s3442] sm:$0xff]
    %v3444 = vld [vmem:[%s3442 + $0x8] sm:$0xff]
    %v3445 = vld [vmem:[%s3442 + $0x10] sm:$0xff]
    %v3446 = vld [vmem:[%s3442 + $0x18] sm:$0xff]
    %v3447 = vld [vmem:[%s3442 + $0x20] sm:$0xff]
    %v3448 = vld [vmem:[%s3442 + $0x28] sm:$0xff]
    %v3449 = vld [vmem:[%s3442 + $0x30] sm:$0xff]
    %v3450 = vld [vmem:[%s3442 + $0x38] sm:$0xff]
    %v3451 = vld [vmem:[%s3442 + $0x40] sm:$0xff]
    %v3452 = vld [vmem:[%s3442 + $0x48] sm:$0xff]
    %v3453 = vld [vmem:[%s3442 + $0x50] sm:$0xff]
    %v3454 = vld [vmem:[%s3442 + $0x58] sm:$0xff]
    %v3455 = vld [vmem:[%s3442 + $0x60] sm:$0xff]
    %v3456 = vld [vmem:[%s3442 + $0x68] sm:$0xff]
    %v3457 = vld [vmem:[%s3442 + $0x70] sm:$0xff]
    %v3458 = vld [vmem:[%s3442 + $0x78] sm:$0xff]
    %v3459 = vld [vmem:[%s3442 + $0x80] sm:$0xff]
    %v3460 = vld [vmem:[%s3442 + $0x88] sm:$0xff]
    %v3461 = vld [vmem:[%s3442 + $0x90] sm:$0xff]
    %v3462 = vld [vmem:[%s3442 + $0x98] sm:$0xff]
    %v3463 = vld [vmem:[%s3442 + $0xa0] sm:$0xff]
    %v3464 = vld [vmem:[%s3442 + $0xa8] sm:$0xff]
    %v3465 = vld [vmem:[%s3442 + $0xb0] sm:$0xff]
    %v3466 = vld [vmem:[%s3442 + $0xb8] sm:$0xff]
    %v3467 = vld [vmem:[%s3442 + $0xc0] sm:$0xff]
    %v3468 = vld [vmem:[%s3442 + $0xc8] sm:$0xff]
    %v3469 = vld [vmem:[%s3442 + $0xd0] sm:$0xff]
    %v3470 = vld [vmem:[%s3442 + $0xd8] sm:$0xff]
    %v3471 = vld [vmem:[%s3442 + $0xe0] sm:$0xff]
    %v3472 = vld [vmem:[%s3442 + $0xe8] sm:$0xff]
    %v3473 = vld [vmem:[%s3442 + $0xf0] sm:$0xff]
    %v3474 = vld [vmem:[%s3442 + $0xf8] sm:$0xff]
    %v3475 = vld [vmem:[%s3442 + $0x100] sm:$0xff]
    %v3476 = vld [vmem:[%s3442 + $0x108] sm:$0xff]
    %v3477 = vld [vmem:[%s3442 + $0x110] sm:$0xff]
    %v3478 = vld [vmem:[%s3442 + $0x118] sm:$0xff]
    %v3479 = vld [vmem:[%s3442 + $0x120] sm:$0xff]
    %v3480 = vld [vmem:[%s3442 + $0x128] sm:$0xff]
    %v3481 = vld [vmem:[%s3442 + $0x130] sm:$0xff]
    %v3482 = vld [vmem:[%s3442 + $0x138] sm:$0xff]
    %v3483 = vld [vmem:[%s3442 + $0x140] sm:$0xff]
    %v3484 = vld [vmem:[%s3442 + $0x148] sm:$0xff]
    %v3485 = vld [vmem:[%s3442 + $0x150] sm:$0xff]
    %v3486 = vld [vmem:[%s3442 + $0x158] sm:$0xff]
    %v3487 = vld [vmem:[%s3442 + $0x160] sm:$0xff]
    %v3488 = vld [vmem:[%s3442 + $0x168] sm:$0xff]
    %v3489 = vld [vmem:[%s3442 + $0x170] sm:$0xff]
    %v3490 = vld [vmem:[%s3442 + $0x178] sm:$0xff]
    %v3491 = vld [vmem:[%s3442 + $0x180] sm:$0xff]
    %v3492 = vld [vmem:[%s3442 + $0x188] sm:$0xff]
    %v3493 = vld [vmem:[%s3442 + $0x190] sm:$0xff]
    %v3494 = vld [vmem:[%s3442 + $0x198] sm:$0xff]
    %v3495 = vld [vmem:[%s3442 + $0x1a0] sm:$0xff]
    %v3496 = vld [vmem:[%s3442 + $0x1a8] sm:$0xff]
    %v3497 = vld [vmem:[%s3442 + $0x1b0] sm:$0xff]
    %v3498 = vld [vmem:[%s3442 + $0x1b8] sm:$0xff]
    %v3499 = vld [vmem:[%s3442 + $0x1c0] sm:$0xff]
    %v3500 = vld [vmem:[%s3442 + $0x1c8] sm:$0xff]
    %v3501 = vld [vmem:[%s3442 + $0x1d0] sm:$0xff]
    %v3502 = vld [vmem:[%s3442 + $0x1d8] sm:$0xff]
    %v3503 = vld [vmem:[%s3442 + $0x1e0] sm:$0xff]
    %v3504 = vld [vmem:[%s3442 + $0x1e8] sm:$0xff]
    %v3505 = vld [vmem:[%s3442 + $0x1f0] sm:$0xff]
    %v3506 = vld [vmem:[%s3442 + $0x1f8] sm:$0xff]
    %v3507 = vunpack.c.l.s8.bf16 %v3443
    %v3508 = vunpack.c.l.s8.bf16 %v3444
    %v3509 = vunpack.c.l.s8.bf16 %v3445
    %v3510 = vunpack.c.l.s8.bf16 %v3446
    %v3511 = vunpack.c.h.s8.bf16 %v3443
    %v3512 = vunpack.c.h.s8.bf16 %v3444
    %v3513 = vunpack.c.h.s8.bf16 %v3445
    %v3514 = vunpack.c.h.s8.bf16 %v3446
    %v3515 = vunpack.c.l.s8.bf16 %v3447
    %v3516 = vunpack.c.l.s8.bf16 %v3448
    %v3517 = vunpack.c.l.s8.bf16 %v3449
    %v3518 = vunpack.c.l.s8.bf16 %v3450
    %v3519 = vunpack.c.h.s8.bf16 %v3447
    %v3520 = vunpack.c.h.s8.bf16 %v3448
    %v3521 = vunpack.c.h.s8.bf16 %v3449
    %v3522 = vunpack.c.h.s8.bf16 %v3450
    %v3523 = vunpack.c.l.s8.bf16 %v3451
    %v3524 = vunpack.c.l.s8.bf16 %v3452
    %v3525 = vunpack.c.l.s8.bf16 %v3453
    %v3526 = vunpack.c.l.s8.bf16 %v3454
    %v3527 = vunpack.c.h.s8.bf16 %v3451
    %v3528 = vunpack.c.h.s8.bf16 %v3452
    %v3529 = vunpack.c.h.s8.bf16 %v3453
    %v3530 = vunpack.c.h.s8.bf16 %v3454
    %v3531 = vunpack.c.l.s8.bf16 %v3455
    %v3532 = vunpack.c.l.s8.bf16 %v3456
    %v3533 = vunpack.c.l.s8.bf16 %v3457
    %v3534 = vunpack.c.l.s8.bf16 %v3458
    %v3535 = vunpack.c.h.s8.bf16 %v3455
    %v3536 = vunpack.c.h.s8.bf16 %v3456
    %v3537 = vunpack.c.h.s8.bf16 %v3457
    %v3538 = vunpack.c.h.s8.bf16 %v3458
    %v3539 = vunpack.c.l.s8.bf16 %v3459
    %v3540 = vunpack.c.l.s8.bf16 %v3460
    %v3541 = vunpack.c.l.s8.bf16 %v3461
    %v3542 = vunpack.c.l.s8.bf16 %v3462
    %v3543 = vunpack.c.h.s8.bf16 %v3459
    %v3544 = vunpack.c.h.s8.bf16 %v3460
    %v3545 = vunpack.c.h.s8.bf16 %v3461
    %v3546 = vunpack.c.h.s8.bf16 %v3462
    %v3547 = vunpack.c.l.s8.bf16 %v3463
    %v3548 = vunpack.c.l.s8.bf16 %v3464
    %v3549 = vunpack.c.l.s8.bf16 %v3465
    %v3550 = vunpack.c.l.s8.bf16 %v3466
    %v3551 = vunpack.c.h.s8.bf16 %v3463
    %v3552 = vunpack.c.h.s8.bf16 %v3464
    %v3553 = vunpack.c.h.s8.bf16 %v3465
    %v3554 = vunpack.c.h.s8.bf16 %v3466
    %v3555 = vunpack.c.l.s8.bf16 %v3467
    %v3556 = vunpack.c.l.s8.bf16 %v3468
    %v3557 = vunpack.c.l.s8.bf16 %v3469
    %v3558 = vunpack.c.l.s8.bf16 %v3470
    %v3559 = vunpack.c.h.s8.bf16 %v3467
    %v3560 = vunpack.c.h.s8.bf16 %v3468
    %v3561 = vunpack.c.h.s8.bf16 %v3469
    %v3562 = vunpack.c.h.s8.bf16 %v3470
    %v3563 = vunpack.c.l.s8.bf16 %v3471
    %v3564 = vunpack.c.l.s8.bf16 %v3472
    %v3565 = vunpack.c.l.s8.bf16 %v3473
    %v3566 = vunpack.c.l.s8.bf16 %v3474
    %v3567 = vunpack.c.h.s8.bf16 %v3471
    %v3568 = vunpack.c.h.s8.bf16 %v3472
    %v3569 = vunpack.c.h.s8.bf16 %v3473
    %v3570 = vunpack.c.h.s8.bf16 %v3474
    %v3571 = vunpack.c.l.s8.bf16 %v3475
    %v3572 = vunpack.c.l.s8.bf16 %v3476
    %v3573 = vunpack.c.l.s8.bf16 %v3477
    %v3574 = vunpack.c.l.s8.bf16 %v3478
    %v3575 = vunpack.c.h.s8.bf16 %v3475
    %v3576 = vunpack.c.h.s8.bf16 %v3476
    %v3577 = vunpack.c.h.s8.bf16 %v3477
    %v3578 = vunpack.c.h.s8.bf16 %v3478
    %v3579 = vunpack.c.l.s8.bf16 %v3479
    %v3580 = vunpack.c.l.s8.bf16 %v3480
    %v3581 = vunpack.c.l.s8.bf16 %v3481
    %v3582 = vunpack.c.l.s8.bf16 %v3482
    %v3583 = vunpack.c.h.s8.bf16 %v3479
    %v3584 = vunpack.c.h.s8.bf16 %v3480
    %v3585 = vunpack.c.h.s8.bf16 %v3481
    %v3586 = vunpack.c.h.s8.bf16 %v3482
    %v3587 = vunpack.c.l.s8.bf16 %v3483
    %v3588 = vunpack.c.l.s8.bf16 %v3484
    %v3589 = vunpack.c.l.s8.bf16 %v3485
    %v3590 = vunpack.c.l.s8.bf16 %v3486
    %v3591 = vunpack.c.h.s8.bf16 %v3483
    %v3592 = vunpack.c.h.s8.bf16 %v3484
    %v3593 = vunpack.c.h.s8.bf16 %v3485
    %v3594 = vunpack.c.h.s8.bf16 %v3486
    %v3595 = vunpack.c.l.s8.bf16 %v3487
    %v3596 = vunpack.c.l.s8.bf16 %v3488
    %v3597 = vunpack.c.l.s8.bf16 %v3489
    %v3598 = vunpack.c.l.s8.bf16 %v3490
    %v3599 = vunpack.c.h.s8.bf16 %v3487
    %v3600 = vunpack.c.h.s8.bf16 %v3488
    %v3601 = vunpack.c.h.s8.bf16 %v3489
    %v3602 = vunpack.c.h.s8.bf16 %v3490
    %v3603 = vunpack.c.l.s8.bf16 %v3491
    %v3604 = vunpack.c.l.s8.bf16 %v3492
    %v3605 = vunpack.c.l.s8.bf16 %v3493
    %v3606 = vunpack.c.l.s8.bf16 %v3494
    %v3607 = vunpack.c.h.s8.bf16 %v3491
    %v3608 = vunpack.c.h.s8.bf16 %v3492
    %v3609 = vunpack.c.h.s8.bf16 %v3493
    %v3610 = vunpack.c.h.s8.bf16 %v3494
    %v3611 = vunpack.c.l.s8.bf16 %v3495
    %v3612 = vunpack.c.l.s8.bf16 %v3496
    %v3613 = vunpack.c.l.s8.bf16 %v3497
    %v3614 = vunpack.c.l.s8.bf16 %v3498
    %v3615 = vunpack.c.h.s8.bf16 %v3495
    %v3616 = vunpack.c.h.s8.bf16 %v3496
    %v3617 = vunpack.c.h.s8.bf16 %v3497
    %v3618 = vunpack.c.h.s8.bf16 %v3498
    %v3619 = vunpack.c.l.s8.bf16 %v3499
    %v3620 = vunpack.c.l.s8.bf16 %v3500
    %v3621 = vunpack.c.l.s8.bf16 %v3501
    %v3622 = vunpack.c.l.s8.bf16 %v3502
    %v3623 = vunpack.c.h.s8.bf16 %v3499
    %v3624 = vunpack.c.h.s8.bf16 %v3500
    %v3625 = vunpack.c.h.s8.bf16 %v3501
    %v3626 = vunpack.c.h.s8.bf16 %v3502
    %v3627 = vunpack.c.l.s8.bf16 %v3503
    %v3628 = vunpack.c.l.s8.bf16 %v3504
    %v3629 = vunpack.c.l.s8.bf16 %v3505
    %v3630 = vunpack.c.l.s8.bf16 %v3506
    %v3631 = vunpack.c.h.s8.bf16 %v3503
    %v3632 = vunpack.c.h.s8.bf16 %v3504
    %v3633 = vunpack.c.h.s8.bf16 %v3505
    %v3634 = vunpack.c.h.s8.bf16 %v3506
    %v3635 = vpack.c.bf16 %v3438, %v3438
    %v3636 = vpack.c.bf16 %v3439, %v3439
    %v3637 = vpack.c.bf16 %v3440, %v3440
    %v3638 = vpack.c.bf16 %v3441, %v3441
    %3639 = vmatprep.subr.bf16.mxu0 %v3536
    %3640 = vmatpush1.bf16.msra.mxu0 %v3535
    %3641 = vmatprep.subr.bf16.mxu0 %v3532
    %3642 = vmatpush1.bf16.msra.mxu0 %v3531
    %3643 = vmatprep.subr.bf16.mxu0 %v3528
    %3644 = vmatpush1.bf16.msra.mxu0 %v3527
    %3645 = vmatprep.subr.bf16.mxu0 %v3524
    %3646 = vmatpush1.bf16.msra.mxu0 %v3523
    %3647 = vmatprep.subr.bf16.mxu0 %v3520
    %3648 = vmatpush1.bf16.msra.mxu0 %v3519
    %3649 = vmatprep.subr.bf16.mxu0 %v3516
    %3650 = vmatpush1.bf16.msra.mxu0 %v3515
    %3651 = vmatprep.subr.bf16.mxu0 %v3512
    %3652 = vmatpush1.bf16.msra.mxu0 %v3511
    %3653 = vmatprep.subr.bf16.mxu0 %v3508
    %3654 = vmatpush1.bf16.msra.mxu0 %v3507
    %3655 = vmatprep.subr.bf16.mxu0 %v3568
    %3656 = vmatpush2.bf16.msra.mxu0 %v3567
    %3657 = vmatprep.subr.bf16.mxu0 %v3564
    %3658 = vmatpush2.bf16.msra.mxu0 %v3563
    %3659 = vmatprep.subr.bf16.mxu0 %v3560
    %3660 = vmatpush2.bf16.msra.mxu0 %v3559
    %3661 = vmatprep.subr.bf16.mxu0 %v3556
    %3662 = vmatpush2.bf16.msra.mxu0 %v3555
    %3663 = vmatprep.subr.bf16.mxu0 %v3552
    %3664 = vmatpush2.bf16.msra.mxu0 %v3551
    %3665 = vmatprep.subr.bf16.mxu0 %v3548
    %3666 = vmatpush2.bf16.msra.mxu0 %v3547
    %3667 = vmatprep.subr.bf16.mxu0 %v3544
    %3668 = vmatpush2.bf16.msra.mxu0 %v3543
    %3669 = vmatprep.subr.bf16.mxu0 %v3540
    %3670 = vmatpush2.bf16.msra.mxu0 %v3539
    %3671 = vmatprep.mubr.bf16.mxu0 %v3636
    %3672 = vmatmul.mubr.bf16.gmra.mxu0 %v3635
    %v3673 = vpop.f32.mrf.mxu0
    %v3674 = vadd.f32 0.0, %v3673
    %v3675 = vpop.f32.mrf.mxu0
    %v3676 = vadd.f32 0.0, %v3675
    %v3677 = vpop.f32.mrf.mxu0
    %v3678 = vpop.f32.mrf.mxu0
    %3679 = vdwg.mxu0
    %3680 = vmatprep.subr.bf16.mxu0 %v3600
    %3681 = vmatpush1.bf16.msra.mxu0 %v3599
    %3682 = vmatprep.subr.bf16.mxu0 %v3596
    %3683 = vmatpush1.bf16.msra.mxu0 %v3595
    %3684 = vmatprep.subr.bf16.mxu0 %v3592
    %3685 = vmatpush1.bf16.msra.mxu0 %v3591
    %3686 = vmatprep.subr.bf16.mxu0 %v3588
    %3687 = vmatpush1.bf16.msra.mxu0 %v3587
    %3688 = vmatprep.subr.bf16.mxu0 %v3584
    %3689 = vmatpush1.bf16.msra.mxu0 %v3583
    %3690 = vmatprep.subr.bf16.mxu0 %v3580
    %3691 = vmatpush1.bf16.msra.mxu0 %v3579
    %3692 = vmatprep.subr.bf16.mxu0 %v3576
    %3693 = vmatpush1.bf16.msra.mxu0 %v3575
    %3694 = vmatprep.subr.bf16.mxu0 %v3572
    %3695 = vmatpush1.bf16.msra.mxu0 %v3571
    %3696 = vmatprep.subr.bf16.mxu0 %v3632
    %3697 = vmatpush2.bf16.msra.mxu0 %v3631
    %3698 = vmatprep.subr.bf16.mxu0 %v3628
    %3699 = vmatpush2.bf16.msra.mxu0 %v3627
    %3700 = vmatprep.subr.bf16.mxu0 %v3624
    %3701 = vmatpush2.bf16.msra.mxu0 %v3623
    %3702 = vmatprep.subr.bf16.mxu0 %v3620
    %3703 = vmatpush2.bf16.msra.mxu0 %v3619
    %3704 = vmatprep.subr.bf16.mxu0 %v3616
    %3705 = vmatpush2.bf16.msra.mxu0 %v3615
    %3706 = vmatprep.subr.bf16.mxu0 %v3612
    %3707 = vmatpush2.bf16.msra.mxu0 %v3611
    %3708 = vmatprep.subr.bf16.mxu0 %v3608
    %3709 = vmatpush2.bf16.msra.mxu0 %v3607
    %3710 = vmatprep.subr.bf16.mxu0 %v3604
    %3711 = vmatpush2.bf16.msra.mxu0 %v3603
    %3712 = vmatprep.mubr.bf16.mxu0 %v3638
    %3713 = vmatmul.mubr.bf16.gmra.mxu0 %v3637
    %v3714 = vpop.f32.mrf.mxu0
    %v3715 = vadd.f32 %v3674, %v3714
    %v3716 = vpop.f32.mrf.mxu0
    %v3717 = vadd.f32 %v3676, %v3716
    %v3718 = vpop.f32.mrf.mxu0
    %v3719 = vpop.f32.mrf.mxu0
    %3720 = vdwg.mxu0
    %3721 = vmatprep.subr.bf16.mxu0 %v3538
    %3722 = vmatpush1.bf16.msra.mxu0 %v3537
    %3723 = vmatprep.subr.bf16.mxu0 %v3534
    %3724 = vmatpush1.bf16.msra.mxu0 %v3533
    %3725 = vmatprep.subr.bf16.mxu0 %v3530
    %3726 = vmatpush1.bf16.msra.mxu0 %v3529
    %3727 = vmatprep.subr.bf16.mxu0 %v3526
    %3728 = vmatpush1.bf16.msra.mxu0 %v3525
    %3729 = vmatprep.subr.bf16.mxu0 %v3522
    %3730 = vmatpush1.bf16.msra.mxu0 %v3521
    %3731 = vmatprep.subr.bf16.mxu0 %v3518
    %3732 = vmatpush1.bf16.msra.mxu0 %v3517
    %3733 = vmatprep.subr.bf16.mxu0 %v3514
    %3734 = vmatpush1.bf16.msra.mxu0 %v3513
    %3735 = vmatprep.subr.bf16.mxu0 %v3510
    %3736 = vmatpush1.bf16.msra.mxu0 %v3509
    %3737 = vmatprep.subr.bf16.mxu0 %v3570
    %3738 = vmatpush2.bf16.msra.mxu0 %v3569
    %3739 = vmatprep.subr.bf16.mxu0 %v3566
    %3740 = vmatpush2.bf16.msra.mxu0 %v3565
    %3741 = vmatprep.subr.bf16.mxu0 %v3562
    %3742 = vmatpush2.bf16.msra.mxu0 %v3561
    %3743 = vmatprep.subr.bf16.mxu0 %v3558
    %3744 = vmatpush2.bf16.msra.mxu0 %v3557
    %3745 = vmatprep.subr.bf16.mxu0 %v3554
    %3746 = vmatpush2.bf16.msra.mxu0 %v3553
    %3747 = vmatprep.subr.bf16.mxu0 %v3550
    %3748 = vmatpush2.bf16.msra.mxu0 %v3549
    %3749 = vmatprep.subr.bf16.mxu0 %v3546
    %3750 = vmatpush2.bf16.msra.mxu0 %v3545
    %3751 = vmatprep.subr.bf16.mxu0 %v3542
    %3752 = vmatpush2.bf16.msra.mxu0 %v3541
    %3753 = vmatprep.mubr.bf16.mxu0 %v3636
    %3754 = vmatmul.mubr.bf16.gmra.mxu0 %v3635
    %v3755 = vpop.f32.mrf.mxu0
    %v3756 = vadd.f32 0.0, %v3755
    %v3757 = vpop.f32.mrf.mxu0
    %v3758 = vadd.f32 0.0, %v3757
    %v3759 = vpop.f32.mrf.mxu0
    %v3760 = vpop.f32.mrf.mxu0
    %3761 = vdwg.mxu0
    %3762 = vmatprep.subr.bf16.mxu0 %v3602
    %3763 = vmatpush1.bf16.msra.mxu0 %v3601
    %3764 = vmatprep.subr.bf16.mxu0 %v3598
    %3765 = vmatpush1.bf16.msra.mxu0 %v3597
    %3766 = vmatprep.subr.bf16.mxu0 %v3594
    %3767 = vmatpush1.bf16.msra.mxu0 %v3593
    %3768 = vmatprep.subr.bf16.mxu0 %v3590
    %3769 = vmatpush1.bf16.msra.mxu0 %v3589
    %3770 = vmatprep.subr.bf16.mxu0 %v3586
    %3771 = vmatpush1.bf16.msra.mxu0 %v3585
    %3772 = vmatprep.subr.bf16.mxu0 %v3582
    %3773 = vmatpush1.bf16.msra.mxu0 %v3581
    %3774 = vmatprep.subr.bf16.mxu0 %v3578
    %3775 = vmatpush1.bf16.msra.mxu0 %v3577
    %3776 = vmatprep.subr.bf16.mxu0 %v3574
    %3777 = vmatpush1.bf16.msra.mxu0 %v3573
    %3778 = vmatprep.subr.bf16.mxu0 %v3634
    %3779 = vmatpush2.bf16.msra.mxu0 %v3633
    %3780 = vmatprep.subr.bf16.mxu0 %v3630
    %3781 = vmatpush2.bf16.msra.mxu0 %v3629
    %3782 = vmatprep.subr.bf16.mxu0 %v3626
    %3783 = vmatpush2.bf16.msra.mxu0 %v3625
    %3784 = vmatprep.subr.bf16.mxu0 %v3622
    %3785 = vmatpush2.bf16.msra.mxu0 %v3621
    %3786 = vmatprep.subr.bf16.mxu0 %v3618
    %3787 = vmatpush2.bf16.msra.mxu0 %v3617
    %3788 = vmatprep.subr.bf16.mxu0 %v3614
    %3789 = vmatpush2.bf16.msra.mxu0 %v3613
    %3790 = vmatprep.subr.bf16.mxu0 %v3610
    %3791 = vmatpush2.bf16.msra.mxu0 %v3609
    %3792 = vmatprep.subr.bf16.mxu0 %v3606
    %3793 = vmatpush2.bf16.msra.mxu0 %v3605
    %3794 = vmatprep.mubr.bf16.mxu0 %v3638
    %3795 = vmatmul.mubr.bf16.gmra.mxu0 %v3637
    %v3796 = vpop.f32.mrf.mxu0
    %v3797 = vadd.f32 %v3756, %v3796
    %v3798 = vpop.f32.mrf.mxu0
    %v3799 = vadd.f32 %v3758, %v3798
    %v3800 = vpop.f32.mrf.mxu0
    %v3801 = vpop.f32.mrf.mxu0
    %3802 = vdwg.mxu0
    %s3803 = scalar_lea.vmem [#allocation7], 32
    %v3804 = vld [vmem:[%s3803] sm:$0xf]
    %v3806 = vlaneseq
    %v3807 = vshrl.u32 %v3806, 7
    %v3808 = vsub.s32 0, %v3807
    %v3809 = vrot.slane %v3804, %v3808
    %v3810 = vlaneseq
    %v3811 = vshrl.u32 %v3810, 7
    %v3812 = vsub.s32 1, %v3811
    %v3813 = vrot.slane %v3804, %v3812
    %v3814 = vlaneseq
    %v3815 = vshrl.u32 %v3814, 7
    %v3816 = vsub.s32 2, %v3815
    %v3817 = vrot.slane %v3804, %v3816
    %v3818 = vlaneseq
    %v3819 = vshrl.u32 %v3818, 7
    %v3820 = vsub.s32 3, %v3819
    %v3821 = vrot.slane %v3804, %v3820
    %v3826 = vmul.f32 %v3715, %v3809
    %v3827 = vmul.f32 %v3717, %v3813
    %v3828 = vmul.f32 %v3797, %v3817
    %v3829 = vmul.f32 %v3799, %v3821
    %s3830 = scalar_lea.vmem [#allocation8], 32
    %v3831 = vld [vmem:[%s3830] sm:$0xf]
    %v3833 = vlaneseq
    %v3834 = vshrl.u32 %v3833, 7
    %v3835 = vsub.s32 0, %v3834
    %v3836 = vrot.slane %v3831, %v3835
    %v3837 = vlaneseq
    %v3838 = vshrl.u32 %v3837, 7
    %v3839 = vsub.s32 1, %v3838
    %v3840 = vrot.slane %v3831, %v3839
    %v3841 = vlaneseq
    %v3842 = vshrl.u32 %v3841, 7
    %v3843 = vsub.s32 2, %v3842
    %v3844 = vrot.slane %v3831, %v3843
    %v3845 = vlaneseq
    %v3846 = vshrl.u32 %v3845, 7
    %v3847 = vsub.s32 3, %v3846
    %v3848 = vrot.slane %v3831, %v3847
    %v3853 = vadd.f32 %v3826, %v3836
    %v3854 = vadd.f32 %v3827, %v3840
    %v3855 = vadd.f32 %v3828, %v3844
    %v3856 = vadd.f32 %v3829, %v3848
    %v3857 = vmax.f32 %v3853, 0.0
    %v3858 = vmax.f32 %v3854, 0.0
    %v3859 = vmax.f32 %v3855, 0.0
    %v3860 = vmax.f32 %v3856, 0.0
    %s3861 = scalar_lea.vmem [#allocation5], 4608
    %v3862 = vld [vmem:[%s3861] sm:$0xff]
    %v3863 = vld [vmem:[%s3861 + $0x8] sm:$0xff]
    %v3864 = vld [vmem:[%s3861 + $0x10] sm:$0xff]
    %v3865 = vld [vmem:[%s3861 + $0x18] sm:$0xff]
    %v3866 = vld [vmem:[%s3861 + $0x20] sm:$0xff]
    %v3867 = vld [vmem:[%s3861 + $0x28] sm:$0xff]
    %v3868 = vld [vmem:[%s3861 + $0x30] sm:$0xff]
    %v3869 = vld [vmem:[%s3861 + $0x38] sm:$0xff]
    %v3870 = vld [vmem:[%s3861 + $0x40] sm:$0xff]
    %v3871 = vld [vmem:[%s3861 + $0x48] sm:$0xff]
    %v3872 = vld [vmem:[%s3861 + $0x50] sm:$0xff]
    %v3873 = vld [vmem:[%s3861 + $0x58] sm:$0xff]
    %v3874 = vld [vmem:[%s3861 + $0x60] sm:$0xff]
    %v3875 = vld [vmem:[%s3861 + $0x68] sm:$0xff]
    %v3876 = vld [vmem:[%s3861 + $0x70] sm:$0xff]
    %v3877 = vld [vmem:[%s3861 + $0x78] sm:$0xff]
    %v3878 = vld [vmem:[%s3861 + $0x80] sm:$0xff]
    %v3879 = vld [vmem:[%s3861 + $0x88] sm:$0xff]
    %v3880 = vld [vmem:[%s3861 + $0x90] sm:$0xff]
    %v3881 = vld [vmem:[%s3861 + $0x98] sm:$0xff]
    %v3882 = vld [vmem:[%s3861 + $0xa0] sm:$0xff]
    %v3883 = vld [vmem:[%s3861 + $0xa8] sm:$0xff]
    %v3884 = vld [vmem:[%s3861 + $0xb0] sm:$0xff]
    %v3885 = vld [vmem:[%s3861 + $0xb8] sm:$0xff]
    %v3886 = vld [vmem:[%s3861 + $0xc0] sm:$0xff]
    %v3887 = vld [vmem:[%s3861 + $0xc8] sm:$0xff]
    %v3888 = vld [vmem:[%s3861 + $0xd0] sm:$0xff]
    %v3889 = vld [vmem:[%s3861 + $0xd8] sm:$0xff]
    %v3890 = vld [vmem:[%s3861 + $0xe0] sm:$0xff]
    %v3891 = vld [vmem:[%s3861 + $0xe8] sm:$0xff]
    %v3892 = vld [vmem:[%s3861 + $0xf0] sm:$0xff]
    %v3893 = vld [vmem:[%s3861 + $0xf8] sm:$0xff]
    %v3894 = vld [vmem:[%s3861 + $0x100] sm:$0xff]
    %v3895 = vld [vmem:[%s3861 + $0x108] sm:$0xff]
    %v3896 = vld [vmem:[%s3861 + $0x110] sm:$0xff]
    %v3897 = vld [vmem:[%s3861 + $0x118] sm:$0xff]
    %v3898 = vld [vmem:[%s3861 + $0x120] sm:$0xff]
    %v3899 = vld [vmem:[%s3861 + $0x128] sm:$0xff]
    %v3900 = vld [vmem:[%s3861 + $0x130] sm:$0xff]
    %v3901 = vld [vmem:[%s3861 + $0x138] sm:$0xff]
    %v3902 = vld [vmem:[%s3861 + $0x140] sm:$0xff]
    %v3903 = vld [vmem:[%s3861 + $0x148] sm:$0xff]
    %v3904 = vld [vmem:[%s3861 + $0x150] sm:$0xff]
    %v3905 = vld [vmem:[%s3861 + $0x158] sm:$0xff]
    %v3906 = vld [vmem:[%s3861 + $0x160] sm:$0xff]
    %v3907 = vld [vmem:[%s3861 + $0x168] sm:$0xff]
    %v3908 = vld [vmem:[%s3861 + $0x170] sm:$0xff]
    %v3909 = vld [vmem:[%s3861 + $0x178] sm:$0xff]
    %v3910 = vld [vmem:[%s3861 + $0x180] sm:$0xff]
    %v3911 = vld [vmem:[%s3861 + $0x188] sm:$0xff]
    %v3912 = vld [vmem:[%s3861 + $0x190] sm:$0xff]
    %v3913 = vld [vmem:[%s3861 + $0x198] sm:$0xff]
    %v3914 = vld [vmem:[%s3861 + $0x1a0] sm:$0xff]
    %v3915 = vld [vmem:[%s3861 + $0x1a8] sm:$0xff]
    %v3916 = vld [vmem:[%s3861 + $0x1b0] sm:$0xff]
    %v3917 = vld [vmem:[%s3861 + $0x1b8] sm:$0xff]
    %v3918 = vld [vmem:[%s3861 + $0x1c0] sm:$0xff]
    %v3919 = vld [vmem:[%s3861 + $0x1c8] sm:$0xff]
    %v3920 = vld [vmem:[%s3861 + $0x1d0] sm:$0xff]
    %v3921 = vld [vmem:[%s3861 + $0x1d8] sm:$0xff]
    %v3922 = vld [vmem:[%s3861 + $0x1e0] sm:$0xff]
    %v3923 = vld [vmem:[%s3861 + $0x1e8] sm:$0xff]
    %v3924 = vld [vmem:[%s3861 + $0x1f0] sm:$0xff]
    %v3925 = vld [vmem:[%s3861 + $0x1f8] sm:$0xff]
    %v3926 = vunpack.c.l.s8.bf16 %v3862
    %v3927 = vunpack.c.l.s8.bf16 %v3863
    %v3928 = vunpack.c.l.s8.bf16 %v3864
    %v3929 = vunpack.c.l.s8.bf16 %v3865
    %v3930 = vunpack.c.h.s8.bf16 %v3862
    %v3931 = vunpack.c.h.s8.bf16 %v3863
    %v3932 = vunpack.c.h.s8.bf16 %v3864
    %v3933 = vunpack.c.h.s8.bf16 %v3865
    %v3934 = vunpack.c.l.s8.bf16 %v3866
    %v3935 = vunpack.c.l.s8.bf16 %v3867
    %v3936 = vunpack.c.l.s8.bf16 %v3868
    %v3937 = vunpack.c.l.s8.bf16 %v3869
    %v3938 = vunpack.c.h.s8.bf16 %v3866
    %v3939 = vunpack.c.h.s8.bf16 %v3867
    %v3940 = vunpack.c.h.s8.bf16 %v3868
    %v3941 = vunpack.c.h.s8.bf16 %v3869
    %v3942 = vunpack.c.l.s8.bf16 %v3870
    %v3943 = vunpack.c.l.s8.bf16 %v3871
    %v3944 = vunpack.c.l.s8.bf16 %v3872
    %v3945 = vunpack.c.l.s8.bf16 %v3873
    %v3946 = vunpack.c.h.s8.bf16 %v3870
    %v3947 = vunpack.c.h.s8.bf16 %v3871
    %v3948 = vunpack.c.h.s8.bf16 %v3872
    %v3949 = vunpack.c.h.s8.bf16 %v3873
    %v3950 = vunpack.c.l.s8.bf16 %v3874
    %v3951 = vunpack.c.l.s8.bf16 %v3875
    %v3952 = vunpack.c.l.s8.bf16 %v3876
    %v3953 = vunpack.c.l.s8.bf16 %v3877
    %v3954 = vunpack.c.h.s8.bf16 %v3874
    %v3955 = vunpack.c.h.s8.bf16 %v3875
    %v3956 = vunpack.c.h.s8.bf16 %v3876
    %v3957 = vunpack.c.h.s8.bf16 %v3877
    %v3958 = vunpack.c.l.s8.bf16 %v3878
    %v3959 = vunpack.c.l.s8.bf16 %v3879
    %v3960 = vunpack.c.l.s8.bf16 %v3880
    %v3961 = vunpack.c.l.s8.bf16 %v3881
    %v3962 = vunpack.c.h.s8.bf16 %v3878
    %v3963 = vunpack.c.h.s8.bf16 %v3879
    %v3964 = vunpack.c.h.s8.bf16 %v3880
    %v3965 = vunpack.c.h.s8.bf16 %v3881
    %v3966 = vunpack.c.l.s8.bf16 %v3882
    %v3967 = vunpack.c.l.s8.bf16 %v3883
    %v3968 = vunpack.c.l.s8.bf16 %v3884
    %v3969 = vunpack.c.l.s8.bf16 %v3885
    %v3970 = vunpack.c.h.s8.bf16 %v3882
    %v3971 = vunpack.c.h.s8.bf16 %v3883
    %v3972 = vunpack.c.h.s8.bf16 %v3884
    %v3973 = vunpack.c.h.s8.bf16 %v3885
    %v3974 = vunpack.c.l.s8.bf16 %v3886
    %v3975 = vunpack.c.l.s8.bf16 %v3887
    %v3976 = vunpack.c.l.s8.bf16 %v3888
    %v3977 = vunpack.c.l.s8.bf16 %v3889
    %v3978 = vunpack.c.h.s8.bf16 %v3886
    %v3979 = vunpack.c.h.s8.bf16 %v3887
    %v3980 = vunpack.c.h.s8.bf16 %v3888
    %v3981 = vunpack.c.h.s8.bf16 %v3889
    %v3982 = vunpack.c.l.s8.bf16 %v3890
    %v3983 = vunpack.c.l.s8.bf16 %v3891
    %v3984 = vunpack.c.l.s8.bf16 %v3892
    %v3985 = vunpack.c.l.s8.bf16 %v3893
    %v3986 = vunpack.c.h.s8.bf16 %v3890
    %v3987 = vunpack.c.h.s8.bf16 %v3891
    %v3988 = vunpack.c.h.s8.bf16 %v3892
    %v3989 = vunpack.c.h.s8.bf16 %v3893
    %v3990 = vunpack.c.l.s8.bf16 %v3894
    %v3991 = vunpack.c.l.s8.bf16 %v3895
    %v3992 = vunpack.c.l.s8.bf16 %v3896
    %v3993 = vunpack.c.l.s8.bf16 %v3897
    %v3994 = vunpack.c.h.s8.bf16 %v3894
    %v3995 = vunpack.c.h.s8.bf16 %v3895
    %v3996 = vunpack.c.h.s8.bf16 %v3896
    %v3997 = vunpack.c.h.s8.bf16 %v3897
    %v3998 = vunpack.c.l.s8.bf16 %v3898
    %v3999 = vunpack.c.l.s8.bf16 %v3899
    %v4000 = vunpack.c.l.s8.bf16 %v3900
    %v4001 = vunpack.c.l.s8.bf16 %v3901
    %v4002 = vunpack.c.h.s8.bf16 %v3898
    %v4003 = vunpack.c.h.s8.bf16 %v3899
    %v4004 = vunpack.c.h.s8.bf16 %v3900
    %v4005 = vunpack.c.h.s8.bf16 %v3901
    %v4006 = vunpack.c.l.s8.bf16 %v3902
    %v4007 = vunpack.c.l.s8.bf16 %v3903
    %v4008 = vunpack.c.l.s8.bf16 %v3904
    %v4009 = vunpack.c.l.s8.bf16 %v3905
    %v4010 = vunpack.c.h.s8.bf16 %v3902
    %v4011 = vunpack.c.h.s8.bf16 %v3903
    %v4012 = vunpack.c.h.s8.bf16 %v3904
    %v4013 = vunpack.c.h.s8.bf16 %v3905
    %v4014 = vunpack.c.l.s8.bf16 %v3906
    %v4015 = vunpack.c.l.s8.bf16 %v3907
    %v4016 = vunpack.c.l.s8.bf16 %v3908
    %v4017 = vunpack.c.l.s8.bf16 %v3909
    %v4018 = vunpack.c.h.s8.bf16 %v3906
    %v4019 = vunpack.c.h.s8.bf16 %v3907
    %v4020 = vunpack.c.h.s8.bf16 %v3908
    %v4021 = vunpack.c.h.s8.bf16 %v3909
    %v4022 = vunpack.c.l.s8.bf16 %v3910
    %v4023 = vunpack.c.l.s8.bf16 %v3911
    %v4024 = vunpack.c.l.s8.bf16 %v3912
    %v4025 = vunpack.c.l.s8.bf16 %v3913
    %v4026 = vunpack.c.h.s8.bf16 %v3910
    %v4027 = vunpack.c.h.s8.bf16 %v3911
    %v4028 = vunpack.c.h.s8.bf16 %v3912
    %v4029 = vunpack.c.h.s8.bf16 %v3913
    %v4030 = vunpack.c.l.s8.bf16 %v3914
    %v4031 = vunpack.c.l.s8.bf16 %v3915
    %v4032 = vunpack.c.l.s8.bf16 %v3916
    %v4033 = vunpack.c.l.s8.bf16 %v3917
    %v4034 = vunpack.c.h.s8.bf16 %v3914
    %v4035 = vunpack.c.h.s8.bf16 %v3915
    %v4036 = vunpack.c.h.s8.bf16 %v3916
    %v4037 = vunpack.c.h.s8.bf16 %v3917
    %v4038 = vunpack.c.l.s8.bf16 %v3918
    %v4039 = vunpack.c.l.s8.bf16 %v3919
    %v4040 = vunpack.c.l.s8.bf16 %v3920
    %v4041 = vunpack.c.l.s8.bf16 %v3921
    %v4042 = vunpack.c.h.s8.bf16 %v3918
    %v4043 = vunpack.c.h.s8.bf16 %v3919
    %v4044 = vunpack.c.h.s8.bf16 %v3920
    %v4045 = vunpack.c.h.s8.bf16 %v3921
    %v4046 = vunpack.c.l.s8.bf16 %v3922
    %v4047 = vunpack.c.l.s8.bf16 %v3923
    %v4048 = vunpack.c.l.s8.bf16 %v3924
    %v4049 = vunpack.c.l.s8.bf16 %v3925
    %v4050 = vunpack.c.h.s8.bf16 %v3922
    %v4051 = vunpack.c.h.s8.bf16 %v3923
    %v4052 = vunpack.c.h.s8.bf16 %v3924
    %v4053 = vunpack.c.h.s8.bf16 %v3925
    %v4054 = vpack.c.bf16 %v3857, %v3857
    %v4055 = vpack.c.bf16 %v3858, %v3858
    %v4056 = vpack.c.bf16 %v3859, %v3859
    %v4057 = vpack.c.bf16 %v3860, %v3860
    %4058 = vmatprep.subr.bf16.mxu0 %v3955
    %4059 = vmatpush1.bf16.msra.mxu0 %v3954
    %4060 = vmatprep.subr.bf16.mxu0 %v3951
    %4061 = vmatpush1.bf16.msra.mxu0 %v3950
    %4062 = vmatprep.subr.bf16.mxu0 %v3947
    %4063 = vmatpush1.bf16.msra.mxu0 %v3946
    %4064 = vmatprep.subr.bf16.mxu0 %v3943
    %4065 = vmatpush1.bf16.msra.mxu0 %v3942
    %4066 = vmatprep.subr.bf16.mxu0 %v3939
    %4067 = vmatpush1.bf16.msra.mxu0 %v3938
    %4068 = vmatprep.subr.bf16.mxu0 %v3935
    %4069 = vmatpush1.bf16.msra.mxu0 %v3934
    %4070 = vmatprep.subr.bf16.mxu0 %v3931
    %4071 = vmatpush1.bf16.msra.mxu0 %v3930
    %4072 = vmatprep.subr.bf16.mxu0 %v3927
    %4073 = vmatpush1.bf16.msra.mxu0 %v3926
    %4074 = vmatprep.subr.bf16.mxu0 %v3987
    %4075 = vmatpush2.bf16.msra.mxu0 %v3986
    %4076 = vmatprep.subr.bf16.mxu0 %v3983
    %4077 = vmatpush2.bf16.msra.mxu0 %v3982
    %4078 = vmatprep.subr.bf16.mxu0 %v3979
    %4079 = vmatpush2.bf16.msra.mxu0 %v3978
    %4080 = vmatprep.subr.bf16.mxu0 %v3975
    %4081 = vmatpush2.bf16.msra.mxu0 %v3974
    %4082 = vmatprep.subr.bf16.mxu0 %v3971
    %4083 = vmatpush2.bf16.msra.mxu0 %v3970
    %4084 = vmatprep.subr.bf16.mxu0 %v3967
    %4085 = vmatpush2.bf16.msra.mxu0 %v3966
    %4086 = vmatprep.subr.bf16.mxu0 %v3963
    %4087 = vmatpush2.bf16.msra.mxu0 %v3962
    %4088 = vmatprep.subr.bf16.mxu0 %v3959
    %4089 = vmatpush2.bf16.msra.mxu0 %v3958
    %4090 = vmatprep.mubr.bf16.mxu0 %v4055
    %4091 = vmatmul.mubr.bf16.gmra.mxu0 %v4054
    %v4092 = vpop.f32.mrf.mxu0
    %v4093 = vadd.f32 0.0, %v4092
    %v4094 = vpop.f32.mrf.mxu0
    %v4095 = vadd.f32 0.0, %v4094
    %v4096 = vpop.f32.mrf.mxu0
    %v4097 = vpop.f32.mrf.mxu0
    %4098 = vdwg.mxu0
    %4099 = vmatprep.subr.bf16.mxu0 %v4019
    %4100 = vmatpush1.bf16.msra.mxu0 %v4018
    %4101 = vmatprep.subr.bf16.mxu0 %v4015
    %4102 = vmatpush1.bf16.msra.mxu0 %v4014
    %4103 = vmatprep.subr.bf16.mxu0 %v4011
    %4104 = vmatpush1.bf16.msra.mxu0 %v4010
    %4105 = vmatprep.subr.bf16.mxu0 %v4007
    %4106 = vmatpush1.bf16.msra.mxu0 %v4006
    %4107 = vmatprep.subr.bf16.mxu0 %v4003
    %4108 = vmatpush1.bf16.msra.mxu0 %v4002
    %4109 = vmatprep.subr.bf16.mxu0 %v3999
    %4110 = vmatpush1.bf16.msra.mxu0 %v3998
    %4111 = vmatprep.subr.bf16.mxu0 %v3995
    %4112 = vmatpush1.bf16.msra.mxu0 %v3994
    %4113 = vmatprep.subr.bf16.mxu0 %v3991
    %4114 = vmatpush1.bf16.msra.mxu0 %v3990
    %4115 = vmatprep.subr.bf16.mxu0 %v4051
    %4116 = vmatpush2.bf16.msra.mxu0 %v4050
    %4117 = vmatprep.subr.bf16.mxu0 %v4047
    %4118 = vmatpush2.bf16.msra.mxu0 %v4046
    %4119 = vmatprep.subr.bf16.mxu0 %v4043
    %4120 = vmatpush2.bf16.msra.mxu0 %v4042
    %4121 = vmatprep.subr.bf16.mxu0 %v4039
    %4122 = vmatpush2.bf16.msra.mxu0 %v4038
    %4123 = vmatprep.subr.bf16.mxu0 %v4035
    %4124 = vmatpush2.bf16.msra.mxu0 %v4034
    %4125 = vmatprep.subr.bf16.mxu0 %v4031
    %4126 = vmatpush2.bf16.msra.mxu0 %v4030
    %4127 = vmatprep.subr.bf16.mxu0 %v4027
    %4128 = vmatpush2.bf16.msra.mxu0 %v4026
    %4129 = vmatprep.subr.bf16.mxu0 %v4023
    %4130 = vmatpush2.bf16.msra.mxu0 %v4022
    %4131 = vmatprep.mubr.bf16.mxu0 %v4057
    %4132 = vmatmul.mubr.bf16.gmra.mxu0 %v4056
    %v4133 = vpop.f32.mrf.mxu0
    %v4134 = vadd.f32 %v4093, %v4133
    %v4135 = vpop.f32.mrf.mxu0
    %v4136 = vadd.f32 %v4095, %v4135
    %v4137 = vpop.f32.mrf.mxu0
    %v4138 = vpop.f32.mrf.mxu0
    %4139 = vdwg.mxu0
    %4140 = vmatprep.subr.bf16.mxu0 %v3957
    %4141 = vmatpush1.bf16.msra.mxu0 %v3956
    %4142 = vmatprep.subr.bf16.mxu0 %v3953
    %4143 = vmatpush1.bf16.msra.mxu0 %v3952
    %4144 = vmatprep.subr.bf16.mxu0 %v3949
    %4145 = vmatpush1.bf16.msra.mxu0 %v3948
    %4146 = vmatprep.subr.bf16.mxu0 %v3945
    %4147 = vmatpush1.bf16.msra.mxu0 %v3944
    %4148 = vmatprep.subr.bf16.mxu0 %v3941
    %4149 = vmatpush1.bf16.msra.mxu0 %v3940
    %4150 = vmatprep.subr.bf16.mxu0 %v3937
    %4151 = vmatpush1.bf16.msra.mxu0 %v3936
    %4152 = vmatprep.subr.bf16.mxu0 %v3933
    %4153 = vmatpush1.bf16.msra.mxu0 %v3932
    %4154 = vmatprep.subr.bf16.mxu0 %v3929
    %4155 = vmatpush1.bf16.msra.mxu0 %v3928
    %4156 = vmatprep.subr.bf16.mxu0 %v3989
    %4157 = vmatpush2.bf16.msra.mxu0 %v3988
    %4158 = vmatprep.subr.bf16.mxu0 %v3985
    %4159 = vmatpush2.bf16.msra.mxu0 %v3984
    %4160 = vmatprep.subr.bf16.mxu0 %v3981
    %4161 = vmatpush2.bf16.msra.mxu0 %v3980
    %4162 = vmatprep.subr.bf16.mxu0 %v3977
    %4163 = vmatpush2.bf16.msra.mxu0 %v3976
    %4164 = vmatprep.subr.bf16.mxu0 %v3973
    %4165 = vmatpush2.bf16.msra.mxu0 %v3972
    %4166 = vmatprep.subr.bf16.mxu0 %v3969
    %4167 = vmatpush2.bf16.msra.mxu0 %v3968
    %4168 = vmatprep.subr.bf16.mxu0 %v3965
    %4169 = vmatpush2.bf16.msra.mxu0 %v3964
    %4170 = vmatprep.subr.bf16.mxu0 %v3961
    %4171 = vmatpush2.bf16.msra.mxu0 %v3960
    %4172 = vmatprep.mubr.bf16.mxu0 %v4055
    %4173 = vmatmul.mubr.bf16.gmra.mxu0 %v4054
    %v4174 = vpop.f32.mrf.mxu0
    %v4175 = vadd.f32 0.0, %v4174
    %v4176 = vpop.f32.mrf.mxu0
    %v4177 = vadd.f32 0.0, %v4176
    %v4178 = vpop.f32.mrf.mxu0
    %v4179 = vpop.f32.mrf.mxu0
    %4180 = vdwg.mxu0
    %4181 = vmatprep.subr.bf16.mxu0 %v4021
    %4182 = vmatpush1.bf16.msra.mxu0 %v4020
    %4183 = vmatprep.subr.bf16.mxu0 %v4017
    %4184 = vmatpush1.bf16.msra.mxu0 %v4016
    %4185 = vmatprep.subr.bf16.mxu0 %v4013
    %4186 = vmatpush1.bf16.msra.mxu0 %v4012
    %4187 = vmatprep.subr.bf16.mxu0 %v4009
    %4188 = vmatpush1.bf16.msra.mxu0 %v4008
    %4189 = vmatprep.subr.bf16.mxu0 %v4005
    %4190 = vmatpush1.bf16.msra.mxu0 %v4004
    %4191 = vmatprep.subr.bf16.mxu0 %v4001
    %4192 = vmatpush1.bf16.msra.mxu0 %v4000
    %4193 = vmatprep.subr.bf16.mxu0 %v3997
    %4194 = vmatpush1.bf16.msra.mxu0 %v3996
    %4195 = vmatprep.subr.bf16.mxu0 %v3993
    %4196 = vmatpush1.bf16.msra.mxu0 %v3992
    %4197 = vmatprep.subr.bf16.mxu0 %v4053
    %4198 = vmatpush2.bf16.msra.mxu0 %v4052
    %4199 = vmatprep.subr.bf16.mxu0 %v4049
    %4200 = vmatpush2.bf16.msra.mxu0 %v4048
    %4201 = vmatprep.subr.bf16.mxu0 %v4045
    %4202 = vmatpush2.bf16.msra.mxu0 %v4044
    %4203 = vmatprep.subr.bf16.mxu0 %v4041
    %4204 = vmatpush2.bf16.msra.mxu0 %v4040
    %4205 = vmatprep.subr.bf16.mxu0 %v4037
    %4206 = vmatpush2.bf16.msra.mxu0 %v4036
    %4207 = vmatprep.subr.bf16.mxu0 %v4033
    %4208 = vmatpush2.bf16.msra.mxu0 %v4032
    %4209 = vmatprep.subr.bf16.mxu0 %v4029
    %4210 = vmatpush2.bf16.msra.mxu0 %v4028
    %4211 = vmatprep.subr.bf16.mxu0 %v4025
    %4212 = vmatpush2.bf16.msra.mxu0 %v4024
    %4213 = vmatprep.mubr.bf16.mxu0 %v4057
    %4214 = vmatmul.mubr.bf16.gmra.mxu0 %v4056
    %v4215 = vpop.f32.mrf.mxu0
    %v4216 = vadd.f32 %v4175, %v4215
    %v4217 = vpop.f32.mrf.mxu0
    %v4218 = vadd.f32 %v4177, %v4217
    %v4219 = vpop.f32.mrf.mxu0
    %v4220 = vpop.f32.mrf.mxu0
    %4221 = vdwg.mxu0
    %s4222 = scalar_lea.vmem [#allocation7], 36
    %v4223 = vld [vmem:[%s4222] sm:$0xf]
    %v4225 = vlaneseq
    %v4226 = vshrl.u32 %v4225, 7
    %v4227 = vsub.s32 0, %v4226
    %v4228 = vrot.slane %v4223, %v4227
    %v4229 = vlaneseq
    %v4230 = vshrl.u32 %v4229, 7
    %v4231 = vsub.s32 1, %v4230
    %v4232 = vrot.slane %v4223, %v4231
    %v4233 = vlaneseq
    %v4234 = vshrl.u32 %v4233, 7
    %v4235 = vsub.s32 2, %v4234
    %v4236 = vrot.slane %v4223, %v4235
    %v4237 = vlaneseq
    %v4238 = vshrl.u32 %v4237, 7
    %v4239 = vsub.s32 3, %v4238
    %v4240 = vrot.slane %v4223, %v4239
    %v4245 = vmul.f32 %v4134, %v4228
    %v4246 = vmul.f32 %v4136, %v4232
    %v4247 = vmul.f32 %v4216, %v4236
    %v4248 = vmul.f32 %v4218, %v4240
    %s4249 = scalar_lea.vmem [#allocation8], 36
    %v4250 = vld [vmem:[%s4249] sm:$0xf]
    %v4252 = vlaneseq
    %v4253 = vshrl.u32 %v4252, 7
    %v4254 = vsub.s32 0, %v4253
    %v4255 = vrot.slane %v4250, %v4254
    %v4256 = vlaneseq
    %v4257 = vshrl.u32 %v4256, 7
    %v4258 = vsub.s32 1, %v4257
    %v4259 = vrot.slane %v4250, %v4258
    %v4260 = vlaneseq
    %v4261 = vshrl.u32 %v4260, 7
    %v4262 = vsub.s32 2, %v4261
    %v4263 = vrot.slane %v4250, %v4262
    %v4264 = vlaneseq
    %v4265 = vshrl.u32 %v4264, 7
    %v4266 = vsub.s32 3, %v4265
    %v4267 = vrot.slane %v4250, %v4266
    %v4272 = vadd.f32 %v4245, %v4255
    %v4273 = vadd.f32 %v4246, %v4259
    %v4274 = vadd.f32 %v4247, %v4263
    %v4275 = vadd.f32 %v4248, %v4267
    %v4276 = vmax.f32 %v4272, 0.0
    %v4277 = vmax.f32 %v4273, 0.0
    %v4278 = vmax.f32 %v4274, 0.0
    %v4279 = vmax.f32 %v4275, 0.0
    %v4280 = vpack.c.bf16 %v4276, %v4276
    %v4281 = vpack.c.bf16 %v4277, %v4277
    %v4282 = vpack.c.bf16 %v4278, %v4278
    %v4283 = vpack.c.bf16 %v4279, %v4279
    %v4284 = vld [vmem:[%s4] sm:$0xf]
    %v4285 = vld [vmem:[%s4 + $0x4] sm:$0xf]
    %v4286 = vld [vmem:[%s4 + $0x8] sm:$0xf]
    %v4287 = vld [vmem:[%s4 + $0xc] sm:$0xf]
    %v4288 = vld [vmem:[%s4 + $0x10] sm:$0xf]
    %v4289 = vld [vmem:[%s4 + $0x14] sm:$0xf]
    %v4290 = vld [vmem:[%s4 + $0x18] sm:$0xf]
    %v4291 = vld [vmem:[%s4 + $0x1c] sm:$0xf]
    %v4292 = vld [vmem:[%s4 + $0x20] sm:$0xf]
    %v4293 = vld [vmem:[%s4 + $0x24] sm:$0xf]
    %v4294 = vld [vmem:[%s4 + $0x28] sm:$0xf]
    %v4295 = vld [vmem:[%s4 + $0x2c] sm:$0xf]
    %v4296 = vld [vmem:[%s4 + $0x30] sm:$0xf]
    %v4297 = vld [vmem:[%s4 + $0x34] sm:$0xf]
    %v4298 = vld [vmem:[%s4 + $0x38] sm:$0xf]
    %v4299 = vld [vmem:[%s4 + $0x3c] sm:$0xf]
    %v4300 = vld [vmem:[%s4 + $0x40] sm:$0xf]
    %v4301 = vld [vmem:[%s4 + $0x44] sm:$0xf]
    %v4302 = vld [vmem:[%s4 + $0x48] sm:$0xf]
    %v4303 = vld [vmem:[%s4 + $0x4c] sm:$0xf]
    %v4304 = vld [vmem:[%s4 + $0x50] sm:$0xf]
    %v4305 = vld [vmem:[%s4 + $0x54] sm:$0xf]
    %v4306 = vld [vmem:[%s4 + $0x58] sm:$0xf]
    %v4307 = vld [vmem:[%s4 + $0x5c] sm:$0xf]
    %v4308 = vld [vmem:[%s4 + $0x60] sm:$0xf]
    %v4309 = vld [vmem:[%s4 + $0x64] sm:$0xf]
    %v4310 = vld [vmem:[%s4 + $0x68] sm:$0xf]
    %v4311 = vld [vmem:[%s4 + $0x6c] sm:$0xf]
    %v4312 = vld [vmem:[%s4 + $0x70] sm:$0xf]
    %v4313 = vld [vmem:[%s4 + $0x74] sm:$0xf]
    %v4314 = vld [vmem:[%s4 + $0x78] sm:$0xf]
    %v4315 = vld [vmem:[%s4 + $0x7c] sm:$0xf]
    %v4316 = vld [vmem:[%s4 + $0x80] sm:$0xf]
    %v4317 = vld [vmem:[%s4 + $0x84] sm:$0xf]
    %v4318 = vld [vmem:[%s4 + $0x88] sm:$0xf]
    %v4319 = vld [vmem:[%s4 + $0x8c] sm:$0xf]
    %v4320 = vld [vmem:[%s4 + $0x90] sm:$0xf]
    %v4321 = vld [vmem:[%s4 + $0x94] sm:$0xf]
    %v4322 = vld [vmem:[%s4 + $0x98] sm:$0xf]
    %v4323 = vld [vmem:[%s4 + $0x9c] sm:$0xf]
    %v4324 = vld [vmem:[%s4 + $0xa0] sm:$0xf]
    %v4325 = vld [vmem:[%s4 + $0xa4] sm:$0xf]
    %v4326 = vld [vmem:[%s4 + $0xa8] sm:$0xf]
    %v4327 = vld [vmem:[%s4 + $0xac] sm:$0xf]
    %v4328 = vld [vmem:[%s4 + $0xb0] sm:$0xf]
    %v4329 = vld [vmem:[%s4 + $0xb4] sm:$0xf]
    %v4330 = vld [vmem:[%s4 + $0xb8] sm:$0xf]
    %v4331 = vld [vmem:[%s4 + $0xbc] sm:$0xf]
    %v4332 = vld [vmem:[%s4 + $0xc0] sm:$0xf]
    %v4333 = vld [vmem:[%s4 + $0xc4] sm:$0xf]
    %v4334 = vld [vmem:[%s4 + $0xc8] sm:$0xf]
    %v4335 = vld [vmem:[%s4 + $0xcc] sm:$0xf]
    %v4336 = vld [vmem:[%s4 + $0xd0] sm:$0xf]
    %v4337 = vld [vmem:[%s4 + $0xd4] sm:$0xf]
    %v4338 = vld [vmem:[%s4 + $0xd8] sm:$0xf]
    %v4339 = vld [vmem:[%s4 + $0xdc] sm:$0xf]
    %v4340 = vld [vmem:[%s4 + $0xe0] sm:$0xf]
    %v4341 = vld [vmem:[%s4 + $0xe4] sm:$0xf]
    %v4342 = vld [vmem:[%s4 + $0xe8] sm:$0xf]
    %v4343 = vld [vmem:[%s4 + $0xec] sm:$0xf]
    %v4344 = vld [vmem:[%s4 + $0xf0] sm:$0xf]
    %v4345 = vld [vmem:[%s4 + $0xf4] sm:$0xf]
    %v4346 = vld [vmem:[%s4 + $0xf8] sm:$0xf]
    %v4347 = vld [vmem:[%s4 + $0xfc] sm:$0xf]
    %v4348 = vld [vmem:[#allocation10] sm:$0x1]
    %v4350 = vlaneseq
    %v4351 = vshrl.u32 %v4350, 7
    %v4352 = vsub.s32 0, %v4351
    %v4353 = vrot.slane %v4348, %v4352
    %v4419 = vunpack.c.l.b16 %v4284
    %v4420 = vunpack.c.l.b16 %v4285
    %v4421 = vunpack.c.l.b16 %v4286
    %v4422 = vunpack.c.l.b16 %v4287
    %v4423 = vunpack.c.l.b16 %v4288
    %v4424 = vunpack.c.l.b16 %v4289
    %v4425 = vunpack.c.l.b16 %v4290
    %v4426 = vunpack.c.l.b16 %v4291
    %v4427 = vunpack.c.l.b16 %v4292
    %v4428 = vunpack.c.l.b16 %v4293
    %v4429 = vunpack.c.l.b16 %v4294
    %v4430 = vunpack.c.l.b16 %v4295
    %v4431 = vunpack.c.l.b16 %v4296
    %v4432 = vunpack.c.l.b16 %v4297
    %v4433 = vunpack.c.l.b16 %v4298
    %v4434 = vunpack.c.l.b16 %v4299
    %v4435 = vunpack.c.l.b16 %v4300
    %v4436 = vunpack.c.l.b16 %v4301
    %v4437 = vunpack.c.l.b16 %v4302
    %v4438 = vunpack.c.l.b16 %v4303
    %v4439 = vunpack.c.l.b16 %v4304
    %v4440 = vunpack.c.l.b16 %v4305
    %v4441 = vunpack.c.l.b16 %v4306
    %v4442 = vunpack.c.l.b16 %v4307
    %v4443 = vunpack.c.l.b16 %v4308
    %v4444 = vunpack.c.l.b16 %v4309
    %v4445 = vunpack.c.l.b16 %v4310
    %v4446 = vunpack.c.l.b16 %v4311
    %v4447 = vunpack.c.l.b16 %v4312
    %v4448 = vunpack.c.l.b16 %v4313
    %v4449 = vunpack.c.l.b16 %v4314
    %v4450 = vunpack.c.l.b16 %v4315
    %v4451 = vunpack.c.l.b16 %v4316
    %v4452 = vunpack.c.l.b16 %v4317
    %v4453 = vunpack.c.l.b16 %v4318
    %v4454 = vunpack.c.l.b16 %v4319
    %v4455 = vunpack.c.l.b16 %v4320
    %v4456 = vunpack.c.l.b16 %v4321
    %v4457 = vunpack.c.l.b16 %v4322
    %v4458 = vunpack.c.l.b16 %v4323
    %v4459 = vunpack.c.l.b16 %v4324
    %v4460 = vunpack.c.l.b16 %v4325
    %v4461 = vunpack.c.l.b16 %v4326
    %v4462 = vunpack.c.l.b16 %v4327
    %v4463 = vunpack.c.l.b16 %v4328
    %v4464 = vunpack.c.l.b16 %v4329
    %v4465 = vunpack.c.l.b16 %v4330
    %v4466 = vunpack.c.l.b16 %v4331
    %v4467 = vunpack.c.l.b16 %v4332
    %v4468 = vunpack.c.l.b16 %v4333
    %v4469 = vunpack.c.l.b16 %v4334
    %v4470 = vunpack.c.l.b16 %v4335
    %v4471 = vunpack.c.l.b16 %v4336
    %v4472 = vunpack.c.l.b16 %v4337
    %v4473 = vunpack.c.l.b16 %v4338
    %v4474 = vunpack.c.l.b16 %v4339
    %v4475 = vunpack.c.l.b16 %v4340
    %v4476 = vunpack.c.l.b16 %v4341
    %v4477 = vunpack.c.l.b16 %v4342
    %v4478 = vunpack.c.l.b16 %v4343
    %v4479 = vunpack.c.l.b16 %v4344
    %v4480 = vunpack.c.l.b16 %v4345
    %v4481 = vunpack.c.l.b16 %v4346
    %v4482 = vunpack.c.l.b16 %v4347
    %v4483 = vpack.c.b16 %v4420, %v4419
    %v4484 = vpack.c.b16 %v4422, %v4421
    %v4485 = vpack.c.b16 %v4424, %v4423
    %v4486 = vpack.c.b16 %v4426, %v4425
    %v4487 = vpack.c.b16 %v4428, %v4427
    %v4488 = vpack.c.b16 %v4430, %v4429
    %v4489 = vpack.c.b16 %v4432, %v4431
    %v4490 = vpack.c.b16 %v4434, %v4433
    %v4491 = vpack.c.b16 %v4436, %v4435
    %v4492 = vpack.c.b16 %v4438, %v4437
    %v4493 = vpack.c.b16 %v4440, %v4439
    %v4494 = vpack.c.b16 %v4442, %v4441
    %v4495 = vpack.c.b16 %v4444, %v4443
    %v4496 = vpack.c.b16 %v4446, %v4445
    %v4497 = vpack.c.b16 %v4448, %v4447
    %v4498 = vpack.c.b16 %v4450, %v4449
    %v4499 = vpack.c.b16 %v4452, %v4451
    %v4500 = vpack.c.b16 %v4454, %v4453
    %v4501 = vpack.c.b16 %v4456, %v4455
    %v4502 = vpack.c.b16 %v4458, %v4457
    %v4503 = vpack.c.b16 %v4460, %v4459
    %v4504 = vpack.c.b16 %v4462, %v4461
    %v4505 = vpack.c.b16 %v4464, %v4463
    %v4506 = vpack.c.b16 %v4466, %v4465
    %v4507 = vpack.c.b16 %v4468, %v4467
    %v4508 = vpack.c.b16 %v4470, %v4469
    %v4509 = vpack.c.b16 %v4472, %v4471
    %v4510 = vpack.c.b16 %v4474, %v4473
    %v4511 = vpack.c.b16 %v4476, %v4475
    %v4512 = vpack.c.b16 %v4478, %v4477
    %v4513 = vpack.c.b16 %v4480, %v4479
    %v4514 = vpack.c.b16 %v4482, %v4481
    %4547 = vmatprep.subr.bf16.mxu0 0
    %4548 = vmatpush1.bf16.msra.mxu0 %v4490
    %4549 = vmatprep.subr.bf16.mxu0 0
    %4550 = vmatpush1.bf16.msra.mxu0 %v4489
    %4551 = vmatprep.subr.bf16.mxu0 0
    %4552 = vmatpush1.bf16.msra.mxu0 %v4488
    %4553 = vmatprep.subr.bf16.mxu0 0
    %4554 = vmatpush1.bf16.msra.mxu0 %v4487
    %4555 = vmatprep.subr.bf16.mxu0 0
    %4556 = vmatpush1.bf16.msra.mxu0 %v4486
    %4557 = vmatprep.subr.bf16.mxu0 0
    %4558 = vmatpush1.bf16.msra.mxu0 %v4485
    %4559 = vmatprep.subr.bf16.mxu0 0
    %4560 = vmatpush1.bf16.msra.mxu0 %v4484
    %4561 = vmatprep.subr.bf16.mxu0 0
    %4562 = vmatpush1.bf16.msra.mxu0 %v4483
    %4563 = vmatprep.subr.bf16.mxu0 0
    %4564 = vmatpush2.bf16.msra.mxu0 %v4498
    %4565 = vmatprep.subr.bf16.mxu0 0
    %4566 = vmatpush2.bf16.msra.mxu0 %v4497
    %4567 = vmatprep.subr.bf16.mxu0 0
    %4568 = vmatpush2.bf16.msra.mxu0 %v4496
    %4569 = vmatprep.subr.bf16.mxu0 0
    %4570 = vmatpush2.bf16.msra.mxu0 %v4495
    %4571 = vmatprep.subr.bf16.mxu0 0
    %4572 = vmatpush2.bf16.msra.mxu0 %v4494
    %4573 = vmatprep.subr.bf16.mxu0 0
    %4574 = vmatpush2.bf16.msra.mxu0 %v4493
    %4575 = vmatprep.subr.bf16.mxu0 0
    %4576 = vmatpush2.bf16.msra.mxu0 %v4492
    %4577 = vmatprep.subr.bf16.mxu0 0
    %4578 = vmatpush2.bf16.msra.mxu0 %v4491
    %4579 = vmatprep.mubr.bf16.mxu0 %v4281
    %4580 = vmatmul.mubr.bf16.gmra.mxu0 %v4280
    %v4581 = vpop.f32.mrf.mxu0
    %v4582 = vadd.f32 %v4353, %v4581
    %v4583 = vpop.f32.mrf.mxu0
    %v4584 = vpop.f32.mrf.mxu0
    %v4585 = vpop.f32.mrf.mxu0
    %4586 = vdwg.mxu0
    %4587 = vmatprep.subr.bf16.mxu0 0
    %4588 = vmatpush1.bf16.msra.mxu0 %v4506
    %4589 = vmatprep.subr.bf16.mxu0 0
    %4590 = vmatpush1.bf16.msra.mxu0 %v4505
    %4591 = vmatprep.subr.bf16.mxu0 0
    %4592 = vmatpush1.bf16.msra.mxu0 %v4504
    %4593 = vmatprep.subr.bf16.mxu0 0
    %4594 = vmatpush1.bf16.msra.mxu0 %v4503
    %4595 = vmatprep.subr.bf16.mxu0 0
    %4596 = vmatpush1.bf16.msra.mxu0 %v4502
    %4597 = vmatprep.subr.bf16.mxu0 0
    %4598 = vmatpush1.bf16.msra.mxu0 %v4501
    %4599 = vmatprep.subr.bf16.mxu0 0
    %4600 = vmatpush1.bf16.msra.mxu0 %v4500
    %4601 = vmatprep.subr.bf16.mxu0 0
    %4602 = vmatpush1.bf16.msra.mxu0 %v4499
    %4603 = vmatprep.subr.bf16.mxu0 0
    %4604 = vmatpush2.bf16.msra.mxu0 %v4514
    %4605 = vmatprep.subr.bf16.mxu0 0
    %4606 = vmatpush2.bf16.msra.mxu0 %v4513
    %4607 = vmatprep.subr.bf16.mxu0 0
    %4608 = vmatpush2.bf16.msra.mxu0 %v4512
    %4609 = vmatprep.subr.bf16.mxu0 0
    %4610 = vmatpush2.bf16.msra.mxu0 %v4511
    %4611 = vmatprep.subr.bf16.mxu0 0
    %4612 = vmatpush2.bf16.msra.mxu0 %v4510
    %4613 = vmatprep.subr.bf16.mxu0 0
    %4614 = vmatpush2.bf16.msra.mxu0 %v4509
    %4615 = vmatprep.subr.bf16.mxu0 0
    %4616 = vmatpush2.bf16.msra.mxu0 %v4508
    %4617 = vmatprep.subr.bf16.mxu0 0
    %4618 = vmatpush2.bf16.msra.mxu0 %v4507
    %4619 = vmatprep.mubr.bf16.mxu0 %v4283
    %4620 = vmatmul.mubr.bf16.gmra.mxu0 %v4282
    %v4621 = vpop.f32.mrf.mxu0
    %v4622 = vadd.f32 %v4582, %v4621
    %v4623 = vpop.f32.mrf.mxu0
    %v4624 = vpop.f32.mrf.mxu0
    %v4625 = vpop.f32.mrf.mxu0
    %4626 = vdwg.mxu0
    %v4627 = vlaneseq
    %v4628 = vand.u32 %v4627, 127
    %v4629 = vmax.f32 %v4622, 1e-06
    %v4630 = vmin.f32 %v4629, 1.0
    %vm4631 = vcmp.ge.s32.totalorder %v4628, 12
    %v4632 = vsel %vm4631, %v4630, %v4622
    %vm4633 = vcmask 195584
    %4634 = vst.msk [vmem:[#allocation11] sm:$0xff] %vm4633, %v4632
    // Predicated region
    $region46: #{tpu_custom_call.1} parent=1 // pred_check
      _
    $region47: #{tpu_custom_call.1} parent=1 // pred_check_branch
      %4636 = sbr.rel (0) target = $region49
    $region48: #{tpu_custom_call.1} parent=1 // pred_region
      %s4638 = ssub.s32 128, 128
      %4639 = vsyncadd [#allocation4], %s4638
      %s4641 = sshll.u32 [#allocation11], 4
      %s4642 = int_to_ptr.vmem [resolvable:$true] %s4641
      %4644 = dma.vmem_to_hbm [thread:$0]  %s4642, 128, %s6, [#allocation4]
    $region49: #{tpu_custom_call.1} parent=1 // pred_fallthru
      _
    // Predicated region
    $region50: #{tpu_custom_call.1} parent=1 // pred_check
      _
    $region51: #{tpu_custom_call.1} parent=1 // pred_check_branch
      %4646 = sbr.rel (0) target = $region53
    $region52: #{tpu_custom_call.1} parent=1 // pred_region
      %4647 = dma.done [#allocation4], 128
    $region53: #{tpu_custom_call.1} parent=1 // pred_fallthru
      _
    %4648 = vsyncpa [#allocation3], 1
    %4649 = vsyncpa [#allocation6], 1
    %4650 = vsyncpa [#allocation9], 1
    %4651 = vsyncpa [#allocation4], 1

</llo_original>
